<compile_context>
chip_gen: v7x
topology: tpu7x:2x2x1
jax: 0.10.0
libtpu: 0.0.40
codegen_flags: <defaults>
</compile_context>

<pallas_src>
import functools
import numpy as np
import jax
import jax.numpy as jnp
from jax.experimental import pallas as pl
from jax.experimental.pallas import tpu as pltpu

F32 = jnp.float32
BF16 = jnp.bfloat16

_PALLAS_MIN_ROWS = 512  # route tiny (token-sized) ops to plain XLA


# ------------------------------ tiling helpers ------------------------------

def _tile(dim, target, align):
    """Pick a block size: full dim if small; else a divisor of dim that is a
    multiple of `align` (no padding); else `target` with dim padded up."""
    if dim <= target:
        return dim, dim
    t = (target // align) * align
    while t >= align:
        if dim % t == 0:
            return t, dim
        t -= align
    t = (target // align) * align
    return t, ((dim + t - 1) // t) * t


def _seq_tile(n, target):
    """Tile for a sequence axis: must divide n and be a multiple of 16."""
    if n <= target:
        return n
    t = (target // 16) * 16
    while t >= 16:
        if n % t == 0:
            return t
        t -= 16
    return n


# ------------------- gridded matmul (+bias/act/residual) ---------------------

def _mm_kernel(a_ref, b_ref, bias_ref, *rest, act, nk, has_res):
    if has_res:
        res_ref, o_ref, acc_ref = rest
    else:
        o_ref, acc_ref = rest
        res_ref = None

    @pl.when(pl.program_id(2) == 0)
    def _():
        acc_ref[...] = jnp.zeros_like(acc_ref)
    acc_ref[...] += jnp.dot(a_ref[...], b_ref[...], preferred_element_type=F32)

    @pl.when(pl.program_id(2) == nk - 1)
    def _():
        out = acc_ref[...] + bias_ref[...]
        if act == "relu":
            out = jnp.maximum(out, 0.0)
        if has_res:
            out = out + res_ref[...]
        o_ref[...] = out.astype(o_ref.dtype)


def matmul_bias(a, w, b=None, act="none", res=None):
    """a: (M, K), w: (K, N), b: (N,), res: (M, N) or None -> (M, N).
    bf16 MXU operands, f32 accum; optional fused residual add at the flush."""
    M, K = a.shape
    N = w.shape[1]
    if b is None:
        b = jnp.zeros((N,), F32)
    tm, Mp = _tile(M, 256, 16)
    tk, Kp = _tile(K, 512, 128)
    tn, Np = _tile(N, 256, 128)
    a_p = a.astype(BF16)
    w_p = w.astype(BF16)
    if (Mp, Kp) != (M, K):
        a_p = jnp.pad(a_p, ((0, Mp - M), (0, Kp - K)))
    if (Kp, Np) != (K, N):
        w_p = jnp.pad(w_p, ((0, Kp - K), (0, Np - N)))
    b_p = b if Np == N else jnp.pad(b, (0, Np - N))
    gm, gn, gk = Mp // tm, Np // tn, Kp // tk

    in_specs = [pl.BlockSpec((tm, tk), lambda i, j, k: (i, k)),
                pl.BlockSpec((tk, tn), lambda i, j, k: (k, j)),
                pl.BlockSpec((1, tn), lambda i, j, k: (0, j))]
    args = [a_p, w_p, b_p.reshape(1, Np).astype(F32)]
    has_res = res is not None
    if has_res:
        r_p = res.astype(F32)
        if (Mp, Np) != (M, N):
            r_p = jnp.pad(r_p, ((0, Mp - M), (0, Np - N)))
        in_specs.append(pl.BlockSpec((tm, tn), lambda i, j, k: (i, j)))
        args.append(r_p)

    out = pl.pallas_call(
        functools.partial(_mm_kernel, act=act, nk=gk, has_res=has_res),
        out_shape=jax.ShapeDtypeStruct((Mp, Np), F32),
        grid=(gm, gn, gk),
        in_specs=in_specs,
        out_specs=pl.BlockSpec((tm, tn), lambda i, j, k: (i, j)),
        scratch_shapes=[pltpu.VMEM((tm, tn), F32)],
        compiler_params=pltpu.CompilerParams(
            dimension_semantics=("parallel", "parallel", "arbitrary")),
    )(*args)
    if Mp != M or Np != N:
        out = out[:M, :N]
    return out


# -------------------- fused matmul -> LayerNorm (neck 1x1) -------------------

def _mm_ln_kernel(a_ref, b_ref, g_ref, be_ref, o_ref, acc_ref, *, eps, nk):
    @pl.when(pl.program_id(1) == 0)
    def _():
        acc_ref[...] = jnp.zeros_like(acc_ref)
    acc_ref[...] += jnp.dot(a_ref[...], b_ref[...], preferred_element_type=F32)

    @pl.when(pl.program_id(1) == nk - 1)
    def _():
        y = acc_ref[...]
        mu = jnp.mean(y, axis=-1, keepdims=True)
        yc = y - mu
        var = jnp.mean(yc * yc, axis=-1, keepdims=True)
        o_ref[...] = (yc * jax.lax.rsqrt(var + eps) * g_ref[...]
                      + be_ref[...]).astype(o_ref.dtype)


def matmul_ln(a, w, ln_w, ln_b, eps=1e-6):
    """(a @ w) followed by LayerNorm over the output (channel) axis, fused.
    The output/channel dim stays whole so LN statistics are computed in VMEM."""
    M, K = a.shape
    N = w.shape[1]
    tm, Mp = _tile(M, 256, 16)
    tk, Kp = _tile(K, 512, 128)
    a_p = a.astype(BF16)
    w_p = w.astype(BF16)
    if (Mp, Kp) != (M, K):
        a_p = jnp.pad(a_p, ((0, Mp - M), (0, Kp - K)))
    if Kp != K:
        w_p = jnp.pad(w_p, ((0, Kp - K), (0, 0)))
    gm, gk = Mp // tm, Kp // tk
    out = pl.pallas_call(
        functools.partial(_mm_ln_kernel, eps=eps, nk=gk),
        out_shape=jax.ShapeDtypeStruct((Mp, N), F32),
        grid=(gm, gk),
        in_specs=[pl.BlockSpec((tm, tk), lambda i, k: (i, k)),
                  pl.BlockSpec((tk, N), lambda i, k: (k, 0)),
                  pl.BlockSpec((1, N), lambda i, k: (0, 0)),
                  pl.BlockSpec((1, N), lambda i, k: (0, 0))],
        out_specs=pl.BlockSpec((tm, N), lambda i, k: (i, 0)),
        scratch_shapes=[pltpu.VMEM((tm, N), F32)],
        compiler_params=pltpu.CompilerParams(
            dimension_semantics=("parallel", "arbitrary")),
    )(a_p, w_p, ln_w.reshape(1, N).astype(F32), ln_b.reshape(1, N).astype(F32))
    if Mp != M:
        out = out[:M]
    return out


# --------------------- fused LayerNorm -> matmul (+bias) ---------------------

def _ln_mm_kernel(x_ref, g_ref, be_ref, w_ref, bias_ref, o_ref, *, eps, act):
    x = x_ref[...].astype(F32)
    mu = jnp.mean(x, axis=-1, keepdims=True)
    xc = x - mu
    var = jnp.mean(xc * xc, axis=-1, keepdims=True)
    xn = xc * jax.lax.rsqrt(var + eps) * g_ref[...] + be_ref[...]
    acc = jnp.dot(xn.astype(BF16), w_ref[...], preferred_element_type=F32)
    acc = acc + bias_ref[...]
    if act == "relu":
        acc = jnp.maximum(acc, 0.0)
    o_ref[...] = acc.astype(o_ref.dtype)


def ln_matmul_bias(x, ln_p, dense_p, act="none", eps=1e-6):
    """LayerNorm(x) @ W + b fused. x: (M, K) (K kept whole for the LN stats)."""
    M, K = x.shape
    N = dense_p['w'].shape[1]
    tm, Mp = _tile(M, 256, 16)
    tn, Np = _tile(N, 256, 128)
    xp = x.astype(F32)
    if Mp != M:
        xp = jnp.pad(xp, ((0, Mp - M), (0, 0)))
    w = dense_p['w'].astype(BF16)
    b = dense_p['b']
    if Np != N:
        w = jnp.pad(w, ((0, 0), (0, Np - N)))
        b = jnp.pad(b, (0, Np - N))
    out = pl.pallas_call(
        functools.partial(_ln_mm_kernel, eps=eps, act=act),
        out_shape=jax.ShapeDtypeStruct((Mp, Np), F32),
        grid=(Mp // tm, Np // tn),
        in_specs=[pl.BlockSpec((tm, K), lambda i, j: (i, 0)),
                  pl.BlockSpec((1, K), lambda i, j: (0, 0)),
                  pl.BlockSpec((1, K), lambda i, j: (0, 0)),
                  pl.BlockSpec((K, tn), lambda i, j: (0, j)),
                  pl.BlockSpec((1, tn), lambda i, j: (0, j))],
        out_specs=pl.BlockSpec((tm, tn), lambda i, j: (i, j)),
        compiler_params=pltpu.CompilerParams(
            dimension_semantics=("parallel", "parallel")),
    )(xp, ln_p['w'].reshape(1, K).astype(F32), ln_p['b'].reshape(1, K).astype(F32),
      w, b.reshape(1, Np).astype(F32))
    if Mp != M or Np != N:
        out = out[:M, :N]
    return out


# ------------------------------ LayerNorm kernel -----------------------------

def _ln_kernel(x_ref, g_ref, b_ref, o_ref, *, eps):
    x = x_ref[...].astype(F32)
    mu = jnp.mean(x, axis=-1, keepdims=True)
    xc = x - mu
    var = jnp.mean(xc * xc, axis=-1, keepdims=True)
    o_ref[...] = (xc * jax.lax.rsqrt(var + eps) * g_ref[...] + b_ref[...]).astype(o_ref.dtype)


def layernorm(x, w, b, eps=1e-6):
    shp = x.shape
    D = shp[-1]
    x2 = x.reshape(-1, D).astype(F32)
    M = x2.shape[0]
    tm, Mp = _tile(M, 512, 8)
    xp = x2 if Mp == M else jnp.pad(x2, ((0, Mp - M), (0, 0)))
    out = pl.pallas_call(
        functools.partial(_ln_kernel, eps=eps),
        out_shape=jax.ShapeDtypeStruct((Mp, D), F32),
        grid=(Mp // tm,),
        in_specs=[pl.BlockSpec((tm, D), lambda i: (i, 0)),
                  pl.BlockSpec((1, D), lambda i: (0, 0)),
                  pl.BlockSpec((1, D), lambda i: (0, 0))],
        out_specs=pl.BlockSpec((tm, D), lambda i: (i, 0)),
        compiler_params=pltpu.CompilerParams(dimension_semantics=("parallel",)),
    )(xp, w.reshape(1, D).astype(F32), b.reshape(1, D).astype(F32))
    if Mp != M:
        out = out[:M]
    return out.reshape(shp)


def _ln_xla(x, w, b, eps):
    x = x.astype(F32)
    mu = jnp.mean(x, -1, keepdims=True)
    xc = x - mu
    var = jnp.mean(xc * xc, -1, keepdims=True)
    return xc * jax.lax.rsqrt(var + eps) * w + b


def ln_route(x, p, eps):
    rows = int(np.prod(x.shape[:-1]))
    if rows >= _PALLAS_MIN_ROWS:
        return layernorm(x, p['w'], p['b'], eps=eps)
    return _ln_xla(x, p['w'], p['b'], eps)


# --------------------------- flash-style attention ---------------------------

def _flash_kernel(q_ref, k_ref, v_ref, o_ref, m_sc, l_sc, acc_sc, *, scale, nk):
    ki = pl.program_id(2)

    @pl.when(ki == 0)
    def _():
        m_sc[...] = jnp.full_like(m_sc, -1e30)
        l_sc[...] = jnp.zeros_like(l_sc)
        acc_sc[...] = jnp.zeros_like(acc_sc)

    q = q_ref[0]
    k = k_ref[0]
    v = v_ref[0]
    s = jax.lax.dot_general(q, k, (((1,), (1,)), ((), ())),
                            preferred_element_type=F32) * scale
    m_prev = m_sc[...]
    m_new = jnp.maximum(m_prev, jnp.max(s, axis=-1, keepdims=True))
    alpha = jnp.exp(m_prev - m_new)
    p = jnp.exp(s - m_new)
    l_sc[...] = alpha * l_sc[...] + jnp.sum(p, axis=-1, keepdims=True)
    acc_sc[...] = alpha * acc_sc[...] + jnp.dot(p.astype(v.dtype), v,
                                                preferred_element_type=F32)
    m_sc[...] = m_new

    @pl.when(ki == nk - 1)
    def _():
        o_ref[0] = (acc_sc[...] * pl.reciprocal(l_sc[...], approx=True)).astype(o_ref.dtype)


def sdpa(q, k, v, scale):
    """q: (BH, Tq, d), k/v: (BH, Tk, d) -> (BH, Tq, d). Online-softmax attention."""
    BH, Tq, hd = q.shape
    Tk = k.shape[1]
    tq = _seq_tile(Tq, 256)
    tk = _seq_tile(Tk, 512)
    gq, gk = Tq // tq, Tk // tk
    return pl.pallas_call(
        functools.partial(_flash_kernel, scale=float(scale), nk=gk),
        out_shape=jax.ShapeDtypeStruct((BH, Tq, hd), F32),
        grid=(BH, gq, gk),
        in_specs=[pl.BlockSpec((1, tq, hd), lambda b, qi, ki: (b, qi, 0)),
                  pl.BlockSpec((1, tk, hd), lambda b, qi, ki: (b, ki, 0)),
                  pl.BlockSpec((1, tk, hd), lambda b, qi, ki: (b, ki, 0))],
        out_specs=pl.BlockSpec((1, tq, hd), lambda b, qi, ki: (b, qi, 0)),
        scratch_shapes=[pltpu.VMEM((tq, 1), F32),
                        pltpu.VMEM((tq, 1), F32),
                        pltpu.VMEM((tq, hd), F32)],
        compiler_params=pltpu.CompilerParams(
            dimension_semantics=("parallel", "parallel", "arbitrary")),
    )(q.astype(BF16), k.astype(BF16), v.astype(BF16))


# ------------------- neck 3x3 conv + LayerNorm2d (fused) ---------------------

def _neck3x3_ln_kernel(ypf_ref, w_ref, g_ref, b_ref, o_ref, *, L, wp2, eps):
    td = w_ref.shape[-1]
    acc = jnp.zeros((L, td), F32)
    for di in range(3):
        for dj in range(3):
            off = di * wp2 + dj
            patch = ypf_ref[0, off:off + L, :]
            acc = acc + jnp.dot(patch, w_ref[di * 3 + dj],
                                preferred_element_type=F32)
    mu = jnp.mean(acc, -1, keepdims=True)
    xc = acc - mu
    var = jnp.mean(xc * xc, -1, keepdims=True)
    o_ref[0] = (xc * jax.lax.rsqrt(var + eps) * g_ref[...] + b_ref[...]).astype(o_ref.dtype)


def neck_conv3x3_ln(y_nhwc, w9, ln_w, ln_b, eps=1e-6):
    """3x3 conv (pad=1, no bias) + LayerNorm over channels, fused in VMEM.
    Works on a row-flattened padded map so no im2col tensor hits HBM."""
    B, Hp, Wp, TD = y_nhwc.shape
    yp = jnp.pad(y_nhwc, ((0, 0), (1, 2), (1, 1), (0, 0)))   # extra bottom row for safe offsets
    wp2 = Wp + 2
    S = (Hp + 3) * wp2
    L = Hp * wp2
    ypf = yp.reshape(B, S, TD).astype(BF16)
    out = pl.pallas_call(
        functools.partial(_neck3x3_ln_kernel, L=L, wp2=wp2, eps=eps),
        out_shape=jax.ShapeDtypeStruct((B, L, TD), F32),
        grid=(B,),
        in_specs=[pl.BlockSpec((1, S, TD), lambda b: (b, 0, 0)),
                  pl.BlockSpec((9, TD, TD), lambda b: (0, 0, 0)),
                  pl.BlockSpec((1, TD), lambda b: (0, 0)),
                  pl.BlockSpec((1, TD), lambda b: (0, 0))],
        out_specs=pl.BlockSpec((1, L, TD), lambda b: (b, 0, 0)),
        compiler_params=pltpu.CompilerParams(dimension_semantics=("parallel",)),
    )(ypf, w9.astype(BF16), ln_w.reshape(1, TD).astype(F32),
      ln_b.reshape(1, TD).astype(F32))
    return out.reshape(B, Hp, wp2, TD)[:, :, :Wp, :]


# ------------------------ batched hypernet mask product ----------------------

def _hyper_kernel(h_ref, u_ref, o_ref):
    h = h_ref[0]
    u = u_ref[0]
    o_ref[0] = jax.lax.dot_general(h, u, (((1,), (1,)), ((), ())),
                                   preferred_element_type=F32)


def hyper_mask_matmul(hyper_in, ups_flat):
    """hyper_in: (B, nmt, C8), ups_flat: (B, HW, C8) -> (B, nmt, HW). No HBM transpose."""
    B, nmt, C8 = hyper_in.shape
    HW = ups_flat.shape[1]
    t, HWp = _tile(HW, 512, 128)
    u = ups_flat.astype(BF16)
    if HWp != HW:
        u = jnp.pad(u, ((0, 0), (0, HWp - HW), (0, 0)))
    out = pl.pallas_call(
        _hyper_kernel,
        out_shape=jax.ShapeDtypeStruct((B, nmt, HWp), F32),
        grid=(B, HWp // t),
        in_specs=[pl.BlockSpec((1, nmt, C8), lambda b, i: (b, 0, 0)),
                  pl.BlockSpec((1, t, C8), lambda b, i: (b, i, 0))],
        out_specs=pl.BlockSpec((1, nmt, t), lambda b, i: (b, 0, i)),
        compiler_params=pltpu.CompilerParams(
            dimension_semantics=("parallel", "parallel")),
    )(hyper_in.astype(BF16), u)
    if HWp != HW:
        out = out[:, :, :HW]
    return out


# ----------------------- fused bilinear resize (per plane) -------------------

def _bilinear_kernel(x_ref, ah_ref, awt_ref, o_ref):
    x = x_ref[0].astype(F32)
    t = jnp.dot(ah_ref[...], x, preferred_element_type=F32)
    o_ref[0] = jnp.dot(t, awt_ref[...], preferred_element_type=F32)


def _bilinear_matrix(out_size, in_size):
    """PyTorch F.interpolate(mode='bilinear', align_corners=False) as a matrix."""
    A = np.zeros((out_size, in_size), np.float32)
    scale = in_size / out_size
    for o in range(out_size):
        src = max((o + 0.5) * scale - 0.5, 0.0)
        x0 = min(int(np.floor(src)), in_size - 1)
        x1 = min(x0 + 1, in_size - 1)
        w1 = src - x0
        A[o, x0] += 1.0 - w1
        A[o, x1] += w1
    return A


def bilinear_resize(x_nchw, out_h, out_w):
    B, C, H, W = x_nchw.shape
    if (out_h, out_w) == (H, W):
        # align_corners=False same-size resize is an exact identity.
        return x_nchw.astype(F32)
    ah = jnp.asarray(_bilinear_matrix(out_h, H))
    awt = jnp.asarray(_bilinear_matrix(out_w, W)).T
    n = B * C
    xr = x_nchw.reshape(n, H, W).astype(F32)
    out = pl.pallas_call(
        _bilinear_kernel,
        out_shape=jax.ShapeDtypeStruct((n, out_h, out_w), F32),
        grid=(n,),
        in_specs=[pl.BlockSpec((1, H, W), lambda i: (i, 0, 0)),
                  pl.BlockSpec((out_h, H), lambda i: (0, 0)),
                  pl.BlockSpec((W, out_w), lambda i: (0, 0))],
        out_specs=pl.BlockSpec((1, out_h, out_w), lambda i: (i, 0, 0)),
        compiler_params=pltpu.CompilerParams(dimension_semantics=("parallel",)),
    )(xr, ah, awt)
    return out.reshape(B, C, out_h, out_w)


# ------------------------------ small helpers --------------------------------

def gelu_exact(x):
    # TODO(synk): exact-erf GELU kept as plain-JAX elementwise glue (erf lowering
    # inside Mosaic is not guaranteed); matches torch.nn.GELU() semantics.
    return jax.nn.gelu(x, approximate=False)


def linear(x, p, act="none"):
    """Size-routed linear: Pallas gridded matmul for big row counts, XLA for
    tiny token-sized ops (per perf guidance)."""
    shp = x.shape
    x2 = x.reshape(-1, shp[-1])
    if x2.shape[0] >= _PALLAS_MIN_ROWS:
        out = matmul_bias(x2, p['w'], p['b'], act=act)
    else:
        out = x2.astype(F32) @ p['w'] + p['b']
        if act == "relu":
            out = jnp.maximum(out, 0.0)
    return out.reshape(shp[:-1] + (p['w'].shape[1],))


# ------------------------------ parameter init -------------------------------

class KeyGen:
    def __init__(self, key):
        self.key = key

    def __call__(self):
        self.key, sub = jax.random.split(self.key)
        return sub


def dense_init(kg, fan_in, fan_out, std=0.02):
    return {'w': jax.random.normal(kg(), (fan_in, fan_out), F32) * std,
            'b': jnp.zeros((fan_out,), F32)}


def ln_init(dim):
    return {'w': jnp.ones((dim,), F32), 'b': jnp.zeros((dim,), F32)}


def init_params(cfg, key):
    kg = KeyGen(key)
    D, P, C = cfg['enc_dim'], cfg['patch'], cfg['in_chans']
    Hp = cfg['img_size'] // P
    TD = cfg['transformer_dim']
    num_mask_tokens = cfg['num_multimask'] + 1
    p = {}
    p['patch_embed'] = dense_init(kg, C * P * P, D)
    p['pos_embed'] = jax.random.normal(kg(), (1, Hp, Hp, D), F32) * 0.02
    p['blocks'] = []
    for _ in range(cfg['enc_depth']):
        p['blocks'].append({
            'norm1': ln_init(D), 'norm2': ln_init(D),
            'qkv': dense_init(kg, D, 3 * D),
            'proj': dense_init(kg, D, D),
            'mlp1': dense_init(kg, D, cfg['enc_mlp_ratio'] * D),
            'mlp2': dense_init(kg, cfg['enc_mlp_ratio'] * D, D),
        })
    p['neck'] = {
        'conv1_w': jax.random.normal(kg(), (D, TD), F32) * 0.02,       # 1x1 conv, no bias
        'ln1': ln_init(TD),
        'conv2_w': jax.random.normal(kg(), (9 * TD, TD), F32) * 0.02,  # 3x3 conv, no bias
        'ln2': ln_init(TD),
    }
    p['pe_gaussian'] = jax.random.normal(kg(), (2, TD // 2), F32)
    p['no_mask_embed'] = jax.random.normal(kg(), (TD,), F32) * 0.02
    p['iou_token'] = jax.random.normal(kg(), (1, TD), F32) * 0.02
    p['mask_tokens'] = jax.random.normal(kg(), (num_mask_tokens, TD), F32) * 0.02

    def attn_params(dim, internal):
        return {'q': dense_init(kg, dim, internal), 'k': dense_init(kg, dim, internal),
                'v': dense_init(kg, dim, internal), 'out': dense_init(kg, internal, dim)}

    p['dec_layers'] = []
    for _ in range(cfg['dec_depth']):
        p['dec_layers'].append({
            'self_attn': attn_params(TD, TD),
            'norm1': ln_init(TD),
            'cross_t2i': attn_params(TD, TD // 2),
            'norm2': ln_init(TD),
            'mlp1': dense_init(kg, TD, cfg['dec_mlp_dim']),
            'mlp2': dense_init(kg, cfg['dec_mlp_dim'], TD),
            'norm3': ln_init(TD),
            'norm4': ln_init(TD),
            'cross_i2t': attn_params(TD, TD // 2),
        })
    p['final_t2i'] = attn_params(TD, TD // 2)
    p['norm_final'] = ln_init(TD)
    # TODO(synk): ConvTranspose weight layout here is (Cin, Cout*2*2); map from
    # PyTorch (Cin, Cout, kH, kW) before loading real SAM weights.
    p['upscale1'] = {'w': jax.random.normal(kg(), (TD, (TD // 4) * 4), F32) * 0.02,
                     'b': jnp.zeros((TD // 4,), F32)}
    p['up_ln'] = ln_init(TD // 4)
    p['upscale2'] = {'w': jax.random.normal(kg(), (TD // 4, (TD // 8) * 4), F32) * 0.02,
                     'b': jnp.zeros((TD // 8,), F32)}
    p['hyper_mlps'] = [[dense_init(kg, TD, TD), dense_init(kg, TD, TD),
                        dense_init(kg, TD, TD // 8)] for _ in range(num_mask_tokens)]
    p['iou_head'] = [dense_init(kg, TD, cfg['iou_hidden']),
                     dense_init(kg, cfg['iou_hidden'], cfg['iou_hidden']),
                     dense_init(kg, cfg['iou_hidden'], num_mask_tokens)]
    return p


# ------------------------------- image encoder -------------------------------
# TODO(synk): DomainImageEncoderViT domain-adapter / rel-pos specifics are not
#             available; the standard SAM ImageEncoderViT forward (global
#             attention) is used.

def image_encoder(params, cfg, images):
    B, C, H, W = images.shape
    P = cfg['patch']
    Hp, Wp = H // P, W // P
    D = cfg['enc_dim']
    TD = cfg['transformer_dim']
    nh = cfg['enc_heads']
    hd = D // nh
    N = Hp * Wp
    # patch embed: Conv2d(k=P, s=P) == unfold + Pallas matmul
    patches = images.reshape(B, C, Hp, P, Wp, P).transpose(0, 2, 4, 1, 3, 5)
    patches = patches.reshape(B * N, C * P * P)
    x = matmul_bias(patches, params['patch_embed']['w'], params['patch_embed']['b'])
    x = x.reshape(B, Hp, Wp, D) + params['pos_embed']
    x2 = x.reshape(B * N, D)

    for blk in params['blocks']:
        # LN1 -> QKV (fused)
        qkv = ln_matmul_bias(x2, blk['norm1'], blk['qkv'], eps=1e-6)      # (B*N, 3D)
        qkv = qkv.reshape(B, N, 3, nh, hd).transpose(2, 0, 3, 1, 4).reshape(3, B * nh, N, hd)
        o = sdpa(qkv[0], qkv[1], qkv[2], scale=1.0 / float(np.sqrt(hd)))  # (B*nh, N, hd)
        o = o.reshape(B, nh, N, hd).transpose(0, 2, 1, 3).reshape(B * N, D)
        # attention projection with fused residual add
        x2 = matmul_bias(o, blk['proj']['w'], blk['proj']['b'], res=x2)
        # LN2 -> MLP-up (fused), exact GELU in XLA, MLP-down + residual in Pallas
        h = ln_matmul_bias(x2, blk['norm2'], blk['mlp1'], eps=1e-6)
        h = gelu_exact(h)
        x2 = matmul_bias(h, blk['mlp2']['w'], blk['mlp2']['b'], res=x2)

    # neck: 1x1 conv + LN2d (fused) -> 3x3 conv + LN2d (fused); channels on lanes
    nk = params['neck']
    y = matmul_ln(x2, nk['conv1_w'], nk['ln1']['w'], nk['ln1']['b'], eps=1e-6)
    y = y.reshape(B, Hp, Wp, TD)
    y = neck_conv3x3_ln(y, nk['conv2_w'].reshape(9, TD, TD),
                        nk['ln2']['w'], nk['ln2']['b'], eps=1e-6)
    return y.transpose(0, 3, 1, 2)                                        # (B, TD, Hp, Wp)


# ------------------------------ prompt encoder -------------------------------
# No points / boxes / masks are supplied in MySam.forward, so only the
# no-prompt branch is needed (empty sparse, broadcast no_mask dense, dense PE).

def prompt_encoder(params, cfg):
    TD = cfg['transformer_dim']
    He = We = cfg['img_size'] // cfg['patch']
    sparse = jnp.zeros((1, 0, TD), F32)
    dense = jnp.broadcast_to(params['no_mask_embed'].reshape(1, TD, 1, 1),
                             (1, TD, He, We))
    y = (jnp.arange(He, dtype=F32) + 0.5) / He
    x = (jnp.arange(We, dtype=F32) + 0.5) / We
    yy, xx = jnp.meshgrid(y, x, indexing='ij')
    coords = 2.0 * jnp.stack([xx, yy], axis=-1) - 1.0
    proj = 2.0 * jnp.pi * (coords.reshape(-1, 2) @ params['pe_gaussian'])
    pe = jnp.concatenate([jnp.sin(proj), jnp.cos(proj)], axis=-1)
    image_pe = pe.reshape(He, We, TD).transpose(2, 0, 1)[None]            # (1, TD, He, We)
    return sparse, dense, image_pe


# -------------------------------- mask decoder -------------------------------
# Token-side ops (5-9 tokens) run in XLA; pixel-side ops run through Pallas.

def dec_attention(q, k, v, ap, num_heads):
    B, Nq, _ = q.shape
    Nk = k.shape[1]
    qp, kp, vp = linear(q, ap['q']), linear(k, ap['k']), linear(v, ap['v'])
    ci = qp.shape[-1]
    hd = ci // num_heads

    def split(t, Nt):
        return t.reshape(B, Nt, num_heads, hd).transpose(0, 2, 1, 3)

    qh, kh, vh = split(qp, Nq), split(kp, Nk), split(vp, Nk)
    s = jnp.einsum('bhqd,bhkd->bhqk', qh, kh) / np.sqrt(hd)
    p = jax.nn.softmax(s, axis=-1)
    o = jnp.einsum('bhqk,bhkd->bhqd', p, vh)
    o = o.transpose(0, 2, 1, 3).reshape(B, Nq, ci)
    return linear(o, ap['out'])


def conv_transpose_2x2(feat_nhwc, wp, act_gelu):
    """ConvTranspose2d(k=2, s=2) as Pallas matmul + col2im reshuffle."""
    B, H, W, Cin = feat_nhwc.shape
    Cout = wp['b'].shape[0]
    o = matmul_bias(feat_nhwc.reshape(B * H * W, Cin), wp['w'], jnp.repeat(wp['b'], 4))
    o = o.reshape(B, H, W, Cout, 2, 2).transpose(0, 1, 4, 2, 5, 3).reshape(B, 2 * H, 2 * W, Cout)
    return gelu_exact(o) if act_gelu else o


def mask_decoder(params, cfg, image_embeddings, image_pe, dense, multimask_output):
    """Batched over images (equivalent to the per-image loop + concat)."""
    TD = cfg['transformer_dim']
    num_heads = cfg['dec_heads']
    nmt = cfg['num_multimask'] + 1
    B, _, h, w = image_embeddings.shape

    output_tokens = jnp.concatenate([params['iou_token'], params['mask_tokens']], axis=0)
    tokens = jnp.broadcast_to(output_tokens[None], (B,) + output_tokens.shape)
    # sparse prompt embeddings are empty (no prompts) -> concat is a no-op

    src = image_embeddings + dense                                        # (B, TD, h, w)
    pos = jnp.broadcast_to(image_pe, (B, TD, h, w))
    img = src.reshape(B, TD, h * w).transpose(0, 2, 1)                    # (B, hw, TD)
    img_pe = pos.reshape(B, TD, h * w).transpose(0, 2, 1)

    queries, keys = tokens, img
    for li, lp in enumerate(params['dec_layers']):
        if li == 0:  # skip_first_layer_pe
            queries = dec_attention(queries, queries, queries, lp['self_attn'], num_heads)
        else:
            q = queries + tokens
            queries = queries + dec_attention(q, q, queries, lp['self_attn'], num_heads)
        queries = ln_route(queries, lp['norm1'], 1e-5)
        q = queries + tokens
        k = keys + img_pe
        queries = queries + dec_attention(q, k, keys, lp['cross_t2i'], num_heads)
        queries = ln_route(queries, lp['norm2'], 1e-5)
        queries = queries + linear(linear(queries, lp['mlp1'], act="relu"), lp['mlp2'])
        queries = ln_route(queries, lp['norm3'], 1e-5)
        q = queries + tokens
        k = keys + img_pe
        keys = keys + dec_attention(k, q, queries, lp['cross_i2t'], num_heads)
        keys = ln_route(keys, lp['norm4'], 1e-5)
    q = queries + tokens
    k = keys + img_pe
    queries = queries + dec_attention(q, k, keys, params['final_t2i'], num_heads)
    hs = ln_route(queries, params['norm_final'], 1e-5)

    iou_token_out = hs[:, 0, :]
    mask_tokens_out = hs[:, 1:1 + nmt, :]

    # output upscaling (pixel-side: Pallas matmuls + LN)
    feat = keys.reshape(B, h, w, TD)
    o = conv_transpose_2x2(feat, params['upscale1'], act_gelu=False)
    o = gelu_exact(layernorm(o, params['up_ln']['w'], params['up_ln']['b'], eps=1e-6))
    upscaled = conv_transpose_2x2(o, params['upscale2'], act_gelu=True)   # (B, 4h, 4w, TD/8)
    C8 = TD // 8
    Hu, Wu = 4 * h, 4 * w

    # hypernetwork MLPs (tiny -> XLA)
    hyper_list = []
    for i in range(nmt):
        t = mask_tokens_out[:, i, :]
        mlp = params['hyper_mlps'][i]
        t = jnp.maximum(t @ mlp[0]['w'] + mlp[0]['b'], 0.0)
        t = jnp.maximum(t @ mlp[1]['w'] + mlp[1]['b'], 0.0)
        t = t @ mlp[2]['w'] + mlp[2]['b']
        hyper_list.append(t)
    hyper_in = jnp.stack(hyper_list, axis=1)                              # (B, nmt, C8)

    masks = hyper_mask_matmul(hyper_in, upscaled.reshape(B, Hu * Wu, C8))
    masks = masks.reshape(B, nmt, Hu, Wu)

    ih = params['iou_head']
    t = jnp.maximum(iou_token_out @ ih[0]['w'] + ih[0]['b'], 0.0)
    t = jnp.maximum(t @ ih[1]['w'] + ih[1]['b'], 0.0)
    iou = t @ ih[2]['w'] + ih[2]['b']

    if multimask_output:
        return masks[:, 1:, :, :], iou[:, 1:]
    return masks[:, 0:1, :, :], iou[:, 0:1]


# ---------------------------------- MySam ------------------------------------

def my_sam_forward(params, cfg, images, multimask_output=True):
    """images: (B, 3, H, W) NCHW. Returns concatenated logits upsampled to the
    original size: (B, C, H, W) with C = num_multimask (or 1)."""
    image_embeddings = image_encoder(params, cfg, images)                 # (B, TD, h, w)
    _sparse, dense, image_pe = prompt_encoder(params, cfg)
    low_res_masks, _iou = mask_decoder(params, cfg, image_embeddings, image_pe,
                                       dense, multimask_output)
    H, W = images.shape[-2:]
    # postprocess_masks (input_size == original_size == images.shape[-2:])
    m = bilinear_resize(low_res_masks, cfg['img_size'], cfg['img_size'])
    m = m[..., :H, :W]
    logits = bilinear_resize(m, H, W)
    return logits


if __name__ == "__main__":
    cfg = dict(img_size=32, patch=8, in_chans=3,
               enc_dim=32, enc_depth=2, enc_heads=2, enc_mlp_ratio=2,
               transformer_dim=32, dec_depth=2, dec_heads=2, dec_mlp_dim=64,
               num_multimask=3, iou_hidden=32)
    key = jax.random.PRNGKey(0)
    pkey, xkey = jax.random.split(key)
    params = init_params(cfg, pkey)
    images = jax.random.normal(xkey, (2, 3, cfg['img_size'], cfg['img_size']), F32)

    fwd = jax.jit(lambda imgs: my_sam_forward(params, cfg, imgs, True))
    out = jax.block_until_ready(fwd(images))
    assert out.shape == (2, cfg['num_multimask'], cfg['img_size'], cfg['img_size'])
    assert bool(jnp.all(jnp.isfinite(out)))
    print("KERNEL_OK")
</pallas_src>

<mosaic_0001>
module attributes {stable_mosaic.version = 11 : i64} {
  func.func @_mm_kernel(%arg0: i32, %arg1: i32, %arg2: i32, %arg3: memref<32x192xbf16, #tpu.memory_space<vmem>>, %arg4: memref<192x32xbf16, #tpu.memory_space<vmem>>, %arg5: memref<1x32xf32, #tpu.memory_space<vmem>>, %arg6: memref<32x32xf32, #tpu.memory_space<vmem>>, %arg7: memref<32x32xf32, #tpu.memory_space<vmem>>) attributes {dimension_semantics = [#tpu.dimension_semantics<parallel>, #tpu.dimension_semantics<parallel>, #tpu.dimension_semantics<arbitrary>], iteration_bounds = array<i64: 1, 1, 1>, scalar_prefetch = 0 : i64, scratch_operands = 1 : i64, tpu.core_type = #tpu.core_type<tc>, window_params = [{transform_indices = @transform_0, window_bounds = array<i64: 32, 192>}, {transform_indices = @transform_1, window_bounds = array<i64: 192, 32>}, {transform_indices = @transform_2, window_bounds = array<i64: 1, 32>}, {transform_indices = @transform_3, window_bounds = array<i64: 32, 32>}]} {
    %c0_i32 = arith.constant 0 : i32
    %0 = arith.cmpi eq, %arg2, %c0_i32 : i32
    %1 = arith.extui %0 : i1 to i32
    %c0_i32_0 = arith.constant 0 : i32
    %2 = arith.cmpi ne, %1, %c0_i32_0 : i32
    scf.if %2 {
      %cst_10 = arith.constant 0.000000e+00 : f32
      %12 = vector.broadcast %cst_10 : f32 to vector<32x32xf32>
      %c0_11 = arith.constant 0 : index
      %c0_12 = arith.constant 0 : index
      %13 = vector.load %arg7[%c0_11, %c0_12] : memref<32x32xf32, #tpu.memory_space<vmem>>, vector<32x32xf32>
      tpu.vector_store %arg7[%c0_11, %c0_12], %12 {strides = array<i32>} : memref<32x32xf32, #tpu.memory_space<vmem>>, vector<32x32xf32>,
    } else {
    }
    %c0 = arith.constant 0 : index
    %c0_1 = arith.constant 0 : index
    %3 = vector.load %arg7[%c0, %c0_1] : memref<32x32xf32, #tpu.memory_space<vmem>>, vector<32x32xf32>
    %c0_2 = arith.constant 0 : index
    %c0_3 = arith.constant 0 : index
    %4 = vector.load %arg3[%c0_2, %c0_3] : memref<32x192xbf16, #tpu.memory_space<vmem>>, vector<32x192xbf16>
    %c0_4 = arith.constant 0 : index
    %c0_5 = arith.constant 0 : index
    %5 = vector.load %arg4[%c0_4, %c0_5] : memref<192x32xbf16, #tpu.memory_space<vmem>>, vector<192x32xbf16>
    %cst = arith.constant dense<0.000000e+00> : vector<32x32xf32>
    %6 = tpu.matmul %4, %5, %cst {dimension_numbers = #tpu.dot_dimension_numbers<[1], [0], [0], [1], [0, 0, 1, 1], [], []>} : vector<32x192xbf16>, vector<192x32xbf16>, vector<32x32xf32> -> vector<32x32xf32>
    %7 = arith.addf %3, %6 : vector<32x32xf32>
    %c0_6 = arith.constant 0 : index
    %c0_7 = arith.constant 0 : index
    %8 = vector.load %arg7[%c0_6, %c0_7] : memref<32x32xf32, #tpu.memory_space<vmem>>, vector<32x32xf32>
    tpu.vector_store %arg7[%c0_6, %c0_7], %7 {strides = array<i32>} : memref<32x32xf32, #tpu.memory_space<vmem>>, vector<32x32xf32>,
    %c0_i32_8 = arith.constant 0 : i32
    %9 = arith.cmpi eq, %arg2, %c0_i32_8 : i32
    %10 = arith.extui %9 : i1 to i32
    %c0_i32_9 = arith.constant 0 : i32
    %11 = arith.cmpi ne, %10, %c0_i32_9 : i32
    scf.if %11 {
      %c0_10 = arith.constant 0 : index
      %c0_11 = arith.constant 0 : index
      %12 = vector.load %arg7[%c0_10, %c0_11] : memref<32x32xf32, #tpu.memory_space<vmem>>, vector<32x32xf32>
      %c0_12 = arith.constant 0 : index
      %c0_13 = arith.constant 0 : index
      %13 = vector.load %arg5[%c0_12, %c0_13] : memref<1x32xf32, #tpu.memory_space<vmem>>, vector<1x32xf32>
      %14 = vector.broadcast %13 : vector<1x32xf32> to vector<32x32xf32>
      %15 = arith.addf %12, %14 : vector<32x32xf32>
      %c0_14 = arith.constant 0 : index
      %c0_15 = arith.constant 0 : index
      %16 = vector.load %arg6[%c0_14, %c0_15] : memref<32x32xf32, #tpu.memory_space<vmem>>, vector<32x32xf32>
      tpu.vector_store %arg6[%c0_14, %c0_15], %15 {strides = array<i32>} : memref<32x32xf32, #tpu.memory_space<vmem>>, vector<32x32xf32>,
    } else {
    }
    return
  }
  func.func @transform_0(%arg0: i32, %arg1: i32, %arg2: i32) -> (i32, i32) {
    %c0_i32 = arith.constant 0 : i32
    return %arg0, %arg2 : i32, i32
  }
  func.func @transform_1(%arg0: i32, %arg1: i32, %arg2: i32) -> (i32, i32) {
    %c0_i32 = arith.constant 0 : i32
    return %arg2, %arg1 : i32, i32
  }
  func.func @transform_2(%arg0: i32, %arg1: i32, %arg2: i32) -> (i32, i32) {
    %c0_i32 = arith.constant 0 : i32
    %c0_i32_0 = arith.constant 0 : i32
    return %c0_i32, %arg1 : i32, i32
  }
  func.func @transform_3(%arg0: i32, %arg1: i32, %arg2: i32) -> (i32, i32) {
    %c0_i32 = arith.constant 0 : i32
    return %arg0, %arg1 : i32, i32
  }
}

module attributes {stable_mosaic.version = 11 : i64} {
  func.func @_ln_mm_kernel(%arg0: i32, %arg1: i32, %arg2: memref<32x32xf32, #tpu.memory_space<vmem>>, %arg3: memref<1x32xf32, #tpu.memory_space<vmem>>, %arg4: memref<1x32xf32, #tpu.memory_space<vmem>>, %arg5: memref<32x96xbf16, #tpu.memory_space<vmem>>, %arg6: memref<1x96xf32, #tpu.memory_space<vmem>>, %arg7: memref<32x96xf32, #tpu.memory_space<vmem>>) attributes {dimension_semantics = [#tpu.dimension_semantics<parallel>, #tpu.dimension_semantics<parallel>], iteration_bounds = array<i64: 1, 1>, scalar_prefetch = 0 : i64, scratch_operands = 0 : i64, tpu.core_type = #tpu.core_type<tc>, window_params = [{transform_indices = @transform_0, window_bounds = array<i64: 32, 32>}, {pipeline_mode = #tpu.pipeline_mode<synchronous>, transform_indices = @transform_1, window_bounds = array<i64: 1, 32>}, {pipeline_mode = #tpu.pipeline_mode<synchronous>, transform_indices = @transform_2, window_bounds = array<i64: 1, 32>}, {transform_indices = @transform_3, window_bounds = array<i64: 32, 96>}, {transform_indices = @transform_4, window_bounds = array<i64: 1, 96>}, {transform_indices = @transform_5, window_bounds = array<i64: 32, 96>}]} {
    %c0 = arith.constant 0 : index
    %c0_0 = arith.constant 0 : index
    %0 = vector.load %arg2[%c0, %c0_0] : memref<32x32xf32, #tpu.memory_space<vmem>>, vector<32x32xf32>
    %cst = arith.constant dense<0.000000e+00> : vector<32xf32>
    %1 = vector.multi_reduction <add>, %0, %cst [1] : vector<32x32xf32> to vector<32xf32>
    %2 = vector.shape_cast %1 : vector<32xf32> to vector<32x1xf32>
    %cst_1 = arith.constant 3.200000e+01 : f32
    %3 = vector.broadcast %cst_1 : f32 to vector<32x1xf32>
    %4 = arith.divf %2, %3 : vector<32x1xf32>
    %5 = vector.broadcast %4 : vector<32x1xf32> to vector<32x32xf32>
    %6 = arith.subf %0, %5 : vector<32x32xf32>
    %7 = arith.mulf %6, %6 : vector<32x32xf32>
    %cst_2 = arith.constant dense<0.000000e+00> : vector<32xf32>
    %8 = vector.multi_reduction <add>, %7, %cst_2 [1] : vector<32x32xf32> to vector<32xf32>
    %9 = vector.shape_cast %8 : vector<32xf32> to vector<32x1xf32>
    %cst_3 = arith.constant 3.200000e+01 : f32
    %10 = vector.broadcast %cst_3 : f32 to vector<32x1xf32>
    %11 = arith.divf %9, %10 : vector<32x1xf32>
    %cst_4 = arith.constant 9.99999997E-7 : f32
    %12 = vector.broadcast %cst_4 : f32 to vector<32x1xf32>
    %13 = arith.addf %11, %12 : vector<32x1xf32>
    %14 = math.rsqrt %13 : vector<32x1xf32>
    %15 = vector.broadcast %14 : vector<32x1xf32> to vector<32x32xf32>
    %16 = arith.mulf %6, %15 : vector<32x32xf32>
    %c0_5 = arith.constant 0 : index
    %c0_6 = arith.constant 0 : index
    %17 = vector.load %arg3[%c0_5, %c0_6] : memref<1x32xf32, #tpu.memory_space<vmem>>, vector<1x32xf32>
    %18 = vector.broadcast %17 : vector<1x32xf32> to vector<32x32xf32>
    %19 = arith.mulf %16, %18 : vector<32x32xf32>
    %c0_7 = arith.constant 0 : index
    %c0_8 = arith.constant 0 : index
    %20 = vector.load %arg4[%c0_7, %c0_8] : memref<1x32xf32, #tpu.memory_space<vmem>>, vector<1x32xf32>
    %21 = vector.broadcast %20 : vector<1x32xf32> to vector<32x32xf32>
    %22 = arith.addf %19, %21 : vector<32x32xf32>
    %23 = arith.truncf %22 : vector<32x32xf32> to vector<32x32xbf16>
    %c0_9 = arith.constant 0 : index
    %c0_10 = arith.constant 0 : index
    %24 = vector.load %arg5[%c0_9, %c0_10] : memref<32x96xbf16, #tpu.memory_space<vmem>>, vector<32x96xbf16>
    %cst_11 = arith.constant dense<0.000000e+00> : vector<32x96xf32>
    %25 = tpu.matmul %23, %24, %cst_11 {dimension_numbers = #tpu.dot_dimension_numbers<[1], [0], [0], [1], [0, 0, 1, 1], [], []>} : vector<32x32xbf16>, vector<32x96xbf16>, vector<32x96xf32> -> vector<32x96xf32>
    %c0_12 = arith.constant 0 : index
    %c0_13 = arith.constant 0 : index
    %26 = vector.load %arg6[%c0_12, %c0_13] : memref<1x96xf32, #tpu.memory_space<vmem>>, vector<1x96xf32>
    %27 = vector.broadcast %26 : vector<1x96xf32> to vector<32x96xf32>
    %28 = arith.addf %25, %27 : vector<32x96xf32>
    %c0_14 = arith.constant 0 : index
    %c0_15 = arith.constant 0 : index
    %29 = vector.load %arg7[%c0_14, %c0_15] : memref<32x96xf32, #tpu.memory_space<vmem>>, vector<32x96xf32>
    tpu.vector_store %arg7[%c0_14, %c0_15], %28 {strides = array<i32>} : memref<32x96xf32, #tpu.memory_space<vmem>>, vector<32x96xf32>,
    return
  }
  func.func @transform_0(%arg0: i32, %arg1: i32) -> (i32, i32) {
    %c0_i32 = arith.constant 0 : i32
    %c0_i32_0 = arith.constant 0 : i32
    return %arg0, %c0_i32 : i32, i32
  }
  func.func @transform_1(%arg0: i32, %arg1: i32) -> (i32, i32) {
    %c0_i32 = arith.constant 0 : i32
    %c0_i32_0 = arith.constant 0 : i32
    %c0_i32_1 = arith.constant 0 : i32
    return %c0_i32, %c0_i32_0 : i32, i32
  }
  func.func @transform_2(%arg0: i32, %arg1: i32) -> (i32, i32) {
    %c0_i32 = arith.constant 0 : i32
    %c0_i32_0 = arith.constant 0 : i32
    %c0_i32_1 = arith.constant 0 : i32
    return %c0_i32, %c0_i32_0 : i32, i32
  }
  func.func @transform_3(%arg0: i32, %arg1: i32) -> (i32, i32) {
    %c0_i32 = arith.constant 0 : i32
    %c0_i32_0 = arith.constant 0 : i32
    return %c0_i32, %arg1 : i32, i32
  }
  func.func @transform_4(%arg0: i32, %arg1: i32) -> (i32, i32) {
    %c0_i32 = arith.constant 0 : i32
    %c0_i32_0 = arith.constant 0 : i32
    return %c0_i32, %arg1 : i32, i32
  }
  func.func @transform_5(%arg0: i32, %arg1: i32) -> (i32, i32) {
    %c0_i32 = arith.constant 0 : i32
    return %arg0, %arg1 : i32, i32
  }
}

module attributes {stable_mosaic.version = 11 : i64} {
  func.func @_flash_kernel(%arg0: i32, %arg1: i32, %arg2: i32, %arg3: memref<1x16x16xbf16, #tpu.memory_space<vmem>>, %arg4: memref<1x16x16xbf16, #tpu.memory_space<vmem>>, %arg5: memref<1x16x16xbf16, #tpu.memory_space<vmem>>, %arg6: memref<1x16x16xf32, #tpu.memory_space<vmem>>, %arg7: memref<16x1xf32, #tpu.memory_space<vmem>>, %arg8: memref<16x1xf32, #tpu.memory_space<vmem>>, %arg9: memref<16x16xf32, #tpu.memory_space<vmem>>) attributes {dimension_semantics = [#tpu.dimension_semantics<parallel>, #tpu.dimension_semantics<parallel>, #tpu.dimension_semantics<arbitrary>], iteration_bounds = array<i64: 4, 1, 1>, scalar_prefetch = 0 : i64, scratch_operands = 3 : i64, tpu.core_type = #tpu.core_type<tc>, window_params = [{transform_indices = @transform_0, window_bounds = array<i64: 1, 16, 16>}, {transform_indices = @transform_1, window_bounds = array<i64: 1, 16, 16>}, {transform_indices = @transform_2, window_bounds = array<i64: 1, 16, 16>}, {transform_indices = @transform_3, window_bounds = array<i64: 1, 16, 16>}]} {
    %c0_i32 = arith.constant 0 : i32
    %0 = arith.cmpi eq, %arg2, %c0_i32 : i32
    %1 = arith.extui %0 : i1 to i32
    %c0_i32_0 = arith.constant 0 : i32
    %2 = arith.cmpi ne, %1, %c0_i32_0 : i32
    scf.if %2 {
      %cst_27 = arith.constant -1.000000e+30 : f32
      %38 = vector.broadcast %cst_27 : f32 to vector<16x1xf32>
      %c0_28 = arith.constant 0 : index
      %c0_29 = arith.constant 0 : index
      %39 = vector.load %arg7[%c0_28, %c0_29] : memref<16x1xf32, #tpu.memory_space<vmem>>, vector<16x1xf32>
      tpu.vector_store %arg7[%c0_28, %c0_29], %38 {strides = array<i32>} : memref<16x1xf32, #tpu.memory_space<vmem>>, vector<16x1xf32>,
      %cst_30 = arith.constant 0.000000e+00 : f32
      %40 = vector.broadcast %cst_30 : f32 to vector<16x1xf32>
      %c0_31 = arith.constant 0 : index
      %c0_32 = arith.constant 0 : index
      %41 = vector.load %arg8[%c0_31, %c0_32] : memref<16x1xf32, #tpu.memory_space<vmem>>, vector<16x1xf32>
      tpu.vector_store %arg8[%c0_31, %c0_32], %40 {strides = array<i32>} : memref<16x1xf32, #tpu.memory_space<vmem>>, vector<16x1xf32>,
      %cst_33 = arith.constant 0.000000e+00 : f32
      %42 = vector.broadcast %cst_33 : f32 to vector<16x16xf32>
      %c0_34 = arith.constant 0 : index
      %c0_35 = arith.constant 0 : index
      %43 = vector.load %arg9[%c0_34, %c0_35] : memref<16x16xf32, #tpu.memory_space<vmem>>, vector<16x16xf32>
      tpu.vector_store %arg9[%c0_34, %c0_35], %42 {strides = array<i32>} : memref<16x16xf32, #tpu.memory_space<vmem>>, vector<16x16xf32>,
    } else {
    }
    %c0 = arith.constant 0 : index
    %c0_1 = arith.constant 0 : index
    %c0_2 = arith.constant 0 : index
    %3 = vector.load %arg3[%c0, %c0_1, %c0_2] : memref<1x16x16xbf16, #tpu.memory_space<vmem>>, vector<1x16x16xbf16>
    %4 = vector.shape_cast %3 : vector<1x16x16xbf16> to vector<16x16xbf16>
    %c0_3 = arith.constant 0 : index
    %c0_4 = arith.constant 0 : index
    %c0_5 = arith.constant 0 : index
    %5 = vector.load %arg4[%c0_3, %c0_4, %c0_5] : memref<1x16x16xbf16, #tpu.memory_space<vmem>>, vector<1x16x16xbf16>
    %6 = vector.shape_cast %5 : vector<1x16x16xbf16> to vector<16x16xbf16>
    %c0_6 = arith.constant 0 : index
    %c0_7 = arith.constant 0 : index
    %c0_8 = arith.constant 0 : index
    %7 = vector.load %arg5[%c0_6, %c0_7, %c0_8] : memref<1x16x16xbf16, #tpu.memory_space<vmem>>, vector<1x16x16xbf16>
    %8 = vector.shape_cast %7 : vector<1x16x16xbf16> to vector<16x16xbf16>
    %cst = arith.constant dense<0.000000e+00> : vector<16x16xf32>
    %9 = tpu.matmul %4, %6, %cst {dimension_numbers = #tpu.dot_dimension_numbers<[1], [1], [0], [0], [0, 0, 1, 0], [], []>} : vector<16x16xbf16>, vector<16x16xbf16>, vector<16x16xf32> -> vector<16x16xf32>
    %cst_9 = arith.constant 2.500000e-01 : f32
    %10 = vector.broadcast %cst_9 : f32 to vector<16x16xf32>
    %11 = arith.mulf %9, %10 : vector<16x16xf32>
    %c0_10 = arith.constant 0 : index
    %c0_11 = arith.constant 0 : index
    %12 = vector.load %arg7[%c0_10, %c0_11] : memref<16x1xf32, #tpu.memory_space<vmem>>, vector<16x1xf32>
    %cst_12 = arith.constant dense<0xFF800000> : vector<16xf32>
    %13 = vector.multi_reduction <maximumf>, %11, %cst_12 [1] : vector<16x16xf32> to vector<16xf32>
    %14 = vector.shape_cast %13 : vector<16xf32> to vector<16x1xf32>
    %15 = arith.maximumf %12, %14 : vector<16x1xf32>
    %16 = arith.subf %12, %15 : vector<16x1xf32>
    %17 = math.exp %16 : vector<16x1xf32>
    %18 = vector.broadcast %15 : vector<16x1xf32> to vector<16x16xf32>
    %19 = arith.subf %11, %18 : vector<16x16xf32>
    %20 = math.exp %19 : vector<16x16xf32>
    %c0_13 = arith.constant 0 : index
    %c0_14 = arith.constant 0 : index
    %21 = vector.load %arg8[%c0_13, %c0_14] : memref<16x1xf32, #tpu.memory_space<vmem>>, vector<16x1xf32>
    %22 = arith.mulf %17, %21 : vector<16x1xf32>
    %cst_15 = arith.constant dense<0.000000e+00> : vector<16xf32>
    %23 = vector.multi_reduction <add>, %20, %cst_15 [1] : vector<16x16xf32> to vector<16xf32>
    %24 = vector.shape_cast %23 : vector<16xf32> to vector<16x1xf32>
    %25 = arith.addf %22, %24 : vector<16x1xf32>
    %c0_16 = arith.constant 0 : index
    %c0_17 = arith.constant 0 : index
    %26 = vector.load %arg8[%c0_16, %c0_17] : memref<16x1xf32, #tpu.memory_space<vmem>>, vector<16x1xf32>
    tpu.vector_store %arg8[%c0_16, %c0_17], %25 {strides = array<i32>} : memref<16x1xf32, #tpu.memory_space<vmem>>, vector<16x1xf32>,
    %c0_18 = arith.constant 0 : index
    %c0_19 = arith.constant 0 : index
    %27 = vector.load %arg9[%c0_18, %c0_19] : memref<16x16xf32, #tpu.memory_space<vmem>>, vector<16x16xf32>
    %28 = vector.broadcast %17 : vector<16x1xf32> to vector<16x16xf32>
    %29 = arith.mulf %28, %27 : vector<16x16xf32>
    %30 = arith.truncf %20 : vector<16x16xf32> to vector<16x16xbf16>
    %cst_20 = arith.constant dense<0.000000e+00> : vector<16x16xf32>
    %31 = tpu.matmul %30, %8, %cst_20 {dimension_numbers = #tpu.dot_dimension_numbers<[1], [0], [0], [1], [0, 0, 1, 1], [], []>} : vector<16x16xbf16>, vector<16x16xbf16>, vector<16x16xf32> -> vector<16x16xf32>
    %32 = arith.addf %29, %31 : vector<16x16xf32>
    %c0_21 = arith.constant 0 : index
    %c0_22 = arith.constant 0 : index
    %33 = vector.load %arg9[%c0_21, %c0_22] : memref<16x16xf32, #tpu.memory_space<vmem>>, vector<16x16xf32>
    tpu.vector_store %arg9[%c0_21, %c0_22], %32 {strides = array<i32>} : memref<16x16xf32, #tpu.memory_space<vmem>>, vector<16x16xf32>,
    %c0_23 = arith.constant 0 : index
    %c0_24 = arith.constant 0 : index
    %34 = vector.load %arg7[%c0_23, %c0_24] : memref<16x1xf32, #tpu.memory_space<vmem>>, vector<16x1xf32>
    tpu.vector_store %arg7[%c0_23, %c0_24], %15 {strides = array<i32>} : memref<16x1xf32, #tpu.memory_space<vmem>>, vector<16x1xf32>,
    %c0_i32_25 = arith.constant 0 : i32
    %35 = arith.cmpi eq, %arg2, %c0_i32_25 : i32
    %36 = arith.extui %35 : i1 to i32
    %c0_i32_26 = arith.constant 0 : i32
    %37 = arith.cmpi ne, %36, %c0_i32_26 : i32
    scf.if %37 {
      %c0_27 = arith.constant 0 : index
      %c0_28 = arith.constant 0 : index
      %38 = vector.load %arg9[%c0_27, %c0_28] : memref<16x16xf32, #tpu.memory_space<vmem>>, vector<16x16xf32>
      %c0_29 = arith.constant 0 : index
      %c0_30 = arith.constant 0 : index
      %39 = vector.load %arg8[%c0_29, %c0_30] : memref<16x1xf32, #tpu.memory_space<vmem>>, vector<16x1xf32>
      %40 = tpu.reciprocal %39 {approx = true} : vector<16x1xf32> -> vector<16x1xf32>
      %41 = vector.broadcast %40 : vector<16x1xf32> to vector<16x16xf32>
      %42 = arith.mulf %38, %41 : vector<16x16xf32>
      %c0_31 = arith.constant 0 : index
      %c0_32 = arith.constant 0 : index
      %c0_33 = arith.constant 0 : index
      %43 = vector.load %arg6[%c0_31, %c0_32, %c0_33] : memref<1x16x16xf32, #tpu.memory_space<vmem>>, vector<1x16x16xf32>
      %44 = vector.shape_cast %43 : vector<1x16x16xf32> to vector<16x16xf32>
      %45 = vector.shape_cast %42 : vector<16x16xf32> to vector<1x16x16xf32>
      tpu.vector_store %arg6[%c0_31, %c0_32, %c0_33], %45 {strides = array<i32>} : memref<1x16x16xf32, #tpu.memory_space<vmem>>, vector<1x16x16xf32>,
    } else {
    }
    return
  }
  func.func @transform_0(%arg0: i32, %arg1: i32, %arg2: i32) -> (i32, i32, i32) {
    %c0_i32 = arith.constant 0 : i32
    %c0_i32_0 = arith.constant 0 : i32
    return %arg0, %arg1, %c0_i32 : i32, i32, i32
  }
  func.func @transform_1(%arg0: i32, %arg1: i32, %arg2: i32) -> (i32, i32, i32) {
    %c0_i32 = arith.constant 0 : i32
    %c0_i32_0 = arith.constant 0 : i32
    return %arg0, %arg2, %c0_i32 : i32, i32, i32
  }
  func.func @transform_2(%arg0: i32, %arg1: i32, %arg2: i32) -> (i32, i32, i32) {
    %c0_i32 = arith.constant 0 : i32
    %c0_i32_0 = arith.constant 0 : i32
    return %arg0, %arg2, %c0_i32 : i32, i32, i32
  }
  func.func @transform_3(%arg0: i32, %arg1: i32, %arg2: i32) -> (i32, i32, i32) {
    %c0_i32 = arith.constant 0 : i32
    %c0_i32_0 = arith.constant 0 : i32
    return %arg0, %arg1, %c0_i32 : i32, i32, i32
  }
}

module attributes {stable_mosaic.version = 11 : i64} {
  func.func @_ln_mm_kernel(%arg0: i32, %arg1: i32, %arg2: memref<32x32xf32, #tpu.memory_space<vmem>>, %arg3: memref<1x32xf32, #tpu.memory_space<vmem>>, %arg4: memref<1x32xf32, #tpu.memory_space<vmem>>, %arg5: memref<32x64xbf16, #tpu.memory_space<vmem>>, %arg6: memref<1x64xf32, #tpu.memory_space<vmem>>, %arg7: memref<32x64xf32, #tpu.memory_space<vmem>>) attributes {dimension_semantics = [#tpu.dimension_semantics<parallel>, #tpu.dimension_semantics<parallel>], iteration_bounds = array<i64: 1, 1>, scalar_prefetch = 0 : i64, scratch_operands = 0 : i64, tpu.core_type = #tpu.core_type<tc>, window_params = [{transform_indices = @transform_0, window_bounds = array<i64: 32, 32>}, {pipeline_mode = #tpu.pipeline_mode<synchronous>, transform_indices = @transform_1, window_bounds = array<i64: 1, 32>}, {pipeline_mode = #tpu.pipeline_mode<synchronous>, transform_indices = @transform_2, window_bounds = array<i64: 1, 32>}, {transform_indices = @transform_3, window_bounds = array<i64: 32, 64>}, {transform_indices = @transform_4, window_bounds = array<i64: 1, 64>}, {transform_indices = @transform_5, window_bounds = array<i64: 32, 64>}]} {
    %c0 = arith.constant 0 : index
    %c0_0 = arith.constant 0 : index
    %0 = vector.load %arg2[%c0, %c0_0] : memref<32x32xf32, #tpu.memory_space<vmem>>, vector<32x32xf32>
    %cst = arith.constant dense<0.000000e+00> : vector<32xf32>
    %1 = vector.multi_reduction <add>, %0, %cst [1] : vector<32x32xf32> to vector<32xf32>
    %2 = vector.shape_cast %1 : vector<32xf32> to vector<32x1xf32>
    %cst_1 = arith.constant 3.200000e+01 : f32
    %3 = vector.broadcast %cst_1 : f32 to vector<32x1xf32>
    %4 = arith.divf %2, %3 : vector<32x1xf32>
    %5 = vector.broadcast %4 : vector<32x1xf32> to vector<32x32xf32>
    %6 = arith.subf %0, %5 : vector<32x32xf32>
    %7 = arith.mulf %6, %6 : vector<32x32xf32>
    %cst_2 = arith.constant dense<0.000000e+00> : vector<32xf32>
    %8 = vector.multi_reduction <add>, %7, %cst_2 [1] : vector<32x32xf32> to vector<32xf32>
    %9 = vector.shape_cast %8 : vector<32xf32> to vector<32x1xf32>
    %cst_3 = arith.constant 3.200000e+01 : f32
    %10 = vector.broadcast %cst_3 : f32 to vector<32x1xf32>
    %11 = arith.divf %9, %10 : vector<32x1xf32>
    %cst_4 = arith.constant 9.99999997E-7 : f32
    %12 = vector.broadcast %cst_4 : f32 to vector<32x1xf32>
    %13 = arith.addf %11, %12 : vector<32x1xf32>
    %14 = math.rsqrt %13 : vector<32x1xf32>
    %15 = vector.broadcast %14 : vector<32x1xf32> to vector<32x32xf32>
    %16 = arith.mulf %6, %15 : vector<32x32xf32>
    %c0_5 = arith.constant 0 : index
    %c0_6 = arith.constant 0 : index
    %17 = vector.load %arg3[%c0_5, %c0_6] : memref<1x32xf32, #tpu.memory_space<vmem>>, vector<1x32xf32>
    %18 = vector.broadcast %17 : vector<1x32xf32> to vector<32x32xf32>
    %19 = arith.mulf %16, %18 : vector<32x32xf32>
    %c0_7 = arith.constant 0 : index
    %c0_8 = arith.constant 0 : index
    %20 = vector.load %arg4[%c0_7, %c0_8] : memref<1x32xf32, #tpu.memory_space<vmem>>, vector<1x32xf32>
    %21 = vector.broadcast %20 : vector<1x32xf32> to vector<32x32xf32>
    %22 = arith.addf %19, %21 : vector<32x32xf32>
    %23 = arith.truncf %22 : vector<32x32xf32> to vector<32x32xbf16>
    %c0_9 = arith.constant 0 : index
    %c0_10 = arith.constant 0 : index
    %24 = vector.load %arg5[%c0_9, %c0_10] : memref<32x64xbf16, #tpu.memory_space<vmem>>, vector<32x64xbf16>
    %cst_11 = arith.constant dense<0.000000e+00> : vector<32x64xf32>
    %25 = tpu.matmul %23, %24, %cst_11 {dimension_numbers = #tpu.dot_dimension_numbers<[1], [0], [0], [1], [0, 0, 1, 1], [], []>} : vector<32x32xbf16>, vector<32x64xbf16>, vector<32x64xf32> -> vector<32x64xf32>
    %c0_12 = arith.constant 0 : index
    %c0_13 = arith.constant 0 : index
    %26 = vector.load %arg6[%c0_12, %c0_13] : memref<1x64xf32, #tpu.memory_space<vmem>>, vector<1x64xf32>
    %27 = vector.broadcast %26 : vector<1x64xf32> to vector<32x64xf32>
    %28 = arith.addf %25, %27 : vector<32x64xf32>
    %c0_14 = arith.constant 0 : index
    %c0_15 = arith.constant 0 : index
    %29 = vector.load %arg7[%c0_14, %c0_15] : memref<32x64xf32, #tpu.memory_space<vmem>>, vector<32x64xf32>
    tpu.vector_store %arg7[%c0_14, %c0_15], %28 {strides = array<i32>} : memref<32x64xf32, #tpu.memory_space<vmem>>, vector<32x64xf32>,
    return
  }
  func.func @transform_0(%arg0: i32, %arg1: i32) -> (i32, i32) {
    %c0_i32 = arith.constant 0 : i32
    %c0_i32_0 = arith.constant 0 : i32
    return %arg0, %c0_i32 : i32, i32
  }
  func.func @transform_1(%arg0: i32, %arg1: i32) -> (i32, i32) {
    %c0_i32 = arith.constant 0 : i32
    %c0_i32_0 = arith.constant 0 : i32
    %c0_i32_1 = arith.constant 0 : i32
    return %c0_i32, %c0_i32_0 : i32, i32
  }
  func.func @transform_2(%arg0: i32, %arg1: i32) -> (i32, i32) {
    %c0_i32 = arith.constant 0 : i32
    %c0_i32_0 = arith.constant 0 : i32
    %c0_i32_1 = arith.constant 0 : i32
    return %c0_i32, %c0_i32_0 : i32, i32
  }
  func.func @transform_3(%arg0: i32, %arg1: i32) -> (i32, i32) {
    %c0_i32 = arith.constant 0 : i32
    %c0_i32_0 = arith.constant 0 : i32
    return %c0_i32, %arg1 : i32, i32
  }
  func.func @transform_4(%arg0: i32, %arg1: i32) -> (i32, i32) {
    %c0_i32 = arith.constant 0 : i32
    %c0_i32_0 = arith.constant 0 : i32
    return %c0_i32, %arg1 : i32, i32
  }
  func.func @transform_5(%arg0: i32, %arg1: i32) -> (i32, i32) {
    %c0_i32 = arith.constant 0 : i32
    return %arg0, %arg1 : i32, i32
  }
}

module attributes {stable_mosaic.version = 11 : i64} {
  func.func @_mm_kernel(%arg0: i32, %arg1: i32, %arg2: i32, %arg3: memref<32x32xbf16, #tpu.memory_space<vmem>>, %arg4: memref<32x32xbf16, #tpu.memory_space<vmem>>, %arg5: memref<1x32xf32, #tpu.memory_space<vmem>>, %arg6: memref<32x32xf32, #tpu.memory_space<vmem>>, %arg7: memref<32x32xf32, #tpu.memory_space<vmem>>, %arg8: memref<32x32xf32, #tpu.memory_space<vmem>>) attributes {dimension_semantics = [#tpu.dimension_semantics<parallel>, #tpu.dimension_semantics<parallel>, #tpu.dimension_semantics<arbitrary>], iteration_bounds = array<i64: 1, 1, 1>, scalar_prefetch = 0 : i64, scratch_operands = 1 : i64, tpu.core_type = #tpu.core_type<tc>, window_params = [{transform_indices = @transform_0, window_bounds = array<i64: 32, 32>}, {transform_indices = @transform_1, window_bounds = array<i64: 32, 32>}, {transform_indices = @transform_2, window_bounds = array<i64: 1, 32>}, {transform_indices = @transform_3, window_bounds = array<i64: 32, 32>}, {transform_indices = @transform_4, window_bounds = array<i64: 32, 32>}]} {
    %c0_i32 = arith.constant 0 : i32
    %0 = arith.cmpi eq, %arg2, %c0_i32 : i32
    %1 = arith.extui %0 : i1 to i32
    %c0_i32_0 = arith.constant 0 : i32
    %2 = arith.cmpi ne, %1, %c0_i32_0 : i32
    scf.if %2 {
      %cst_10 = arith.constant 0.000000e+00 : f32
      %12 = vector.broadcast %cst_10 : f32 to vector<32x32xf32>
      %c0_11 = arith.constant 0 : index
      %c0_12 = arith.constant 0 : index
      %13 = vector.load %arg8[%c0_11, %c0_12] : memref<32x32xf32, #tpu.memory_space<vmem>>, vector<32x32xf32>
      tpu.vector_store %arg8[%c0_11, %c0_12], %12 {strides = array<i32>} : memref<32x32xf32, #tpu.memory_space<vmem>>, vector<32x32xf32>,
    } else {
    }
    %c0 = arith.constant 0 : index
    %c0_1 = arith.constant 0 : index
    %3 = vector.load %arg8[%c0, %c0_1] : memref<32x32xf32, #tpu.memory_space<vmem>>, vector<32x32xf32>
    %c0_2 = arith.constant 0 : index
    %c0_3 = arith.constant 0 : index
    %4 = vector.load %arg3[%c0_2, %c0_3] : memref<32x32xbf16, #tpu.memory_space<vmem>>, vector<32x32xbf16>
    %c0_4 = arith.constant 0 : index
    %c0_5 = arith.constant 0 : index
    %5 = vector.load %arg4[%c0_4, %c0_5] : memref<32x32xbf16, #tpu.memory_space<vmem>>, vector<32x32xbf16>
    %cst = arith.constant dense<0.000000e+00> : vector<32x32xf32>
    %6 = tpu.matmul %4, %5, %cst {dimension_numbers = #tpu.dot_dimension_numbers<[1], [0], [0], [1], [0, 0, 1, 1], [], []>} : vector<32x32xbf16>, vector<32x32xbf16>, vector<32x32xf32> -> vector<32x32xf32>
    %7 = arith.addf %3, %6 : vector<32x32xf32>
    %c0_6 = arith.constant 0 : index
    %c0_7 = arith.constant 0 : index
    %8 = vector.load %arg8[%c0_6, %c0_7] : memref<32x32xf32, #tpu.memory_space<vmem>>, vector<32x32xf32>
    tpu.vector_store %arg8[%c0_6, %c0_7], %7 {strides = array<i32>} : memref<32x32xf32, #tpu.memory_space<vmem>>, vector<32x32xf32>,
    %c0_i32_8 = arith.constant 0 : i32
    %9 = arith.cmpi eq, %arg2, %c0_i32_8 : i32
    %10 = arith.extui %9 : i1 to i32
    %c0_i32_9 = arith.constant 0 : i32
    %11 = arith.cmpi ne, %10, %c0_i32_9 : i32
    scf.if %11 {
      %c0_10 = arith.constant 0 : index
      %c0_11 = arith.constant 0 : index
      %12 = vector.load %arg8[%c0_10, %c0_11] : memref<32x32xf32, #tpu.memory_space<vmem>>, vector<32x32xf32>
      %c0_12 = arith.constant 0 : index
      %c0_13 = arith.constant 0 : index
      %13 = vector.load %arg5[%c0_12, %c0_13] : memref<1x32xf32, #tpu.memory_space<vmem>>, vector<1x32xf32>
      %14 = vector.broadcast %13 : vector<1x32xf32> to vector<32x32xf32>
      %15 = arith.addf %12, %14 : vector<32x32xf32>
      %c0_14 = arith.constant 0 : index
      %c0_15 = arith.constant 0 : index
      %16 = vector.load %arg6[%c0_14, %c0_15] : memref<32x32xf32, #tpu.memory_space<vmem>>, vector<32x32xf32>
      %17 = arith.addf %15, %16 : vector<32x32xf32>
      %c0_16 = arith.constant 0 : index
      %c0_17 = arith.constant 0 : index
      %18 = vector.load %arg7[%c0_16, %c0_17] : memref<32x32xf32, #tpu.memory_space<vmem>>, vector<32x32xf32>
      tpu.vector_store %arg7[%c0_16, %c0_17], %17 {strides = array<i32>} : memref<32x32xf32, #tpu.memory_space<vmem>>, vector<32x32xf32>,
    } else {
    }
    return
  }
  func.func @transform_0(%arg0: i32, %arg1: i32, %arg2: i32) -> (i32, i32) {
    %c0_i32 = arith.constant 0 : i32
    return %arg0, %arg2 : i32, i32
  }
  func.func @transform_1(%arg0: i32, %arg1: i32, %arg2: i32) -> (i32, i32) {
    %c0_i32 = arith.constant 0 : i32
    return %arg2, %arg1 : i32, i32
  }
  func.func @transform_2(%arg0: i32, %arg1: i32, %arg2: i32) -> (i32, i32) {
    %c0_i32 = arith.constant 0 : i32
    %c0_i32_0 = arith.constant 0 : i32
    return %c0_i32, %arg1 : i32, i32
  }
  func.func @transform_3(%arg0: i32, %arg1: i32, %arg2: i32) -> (i32, i32) {
    %c0_i32 = arith.constant 0 : i32
    return %arg0, %arg1 : i32, i32
  }
  func.func @transform_4(%arg0: i32, %arg1: i32, %arg2: i32) -> (i32, i32) {
    %c0_i32 = arith.constant 0 : i32
    return %arg0, %arg1 : i32, i32
  }
}

module attributes {stable_mosaic.version = 11 : i64} {
  func.func @_mm_kernel(%arg0: i32, %arg1: i32, %arg2: i32, %arg3: memref<32x64xbf16, #tpu.memory_space<vmem>>, %arg4: memref<64x32xbf16, #tpu.memory_space<vmem>>, %arg5: memref<1x32xf32, #tpu.memory_space<vmem>>, %arg6: memref<32x32xf32, #tpu.memory_space<vmem>>, %arg7: memref<32x32xf32, #tpu.memory_space<vmem>>, %arg8: memref<32x32xf32, #tpu.memory_space<vmem>>) attributes {dimension_semantics = [#tpu.dimension_semantics<parallel>, #tpu.dimension_semantics<parallel>, #tpu.dimension_semantics<arbitrary>], iteration_bounds = array<i64: 1, 1, 1>, scalar_prefetch = 0 : i64, scratch_operands = 1 : i64, tpu.core_type = #tpu.core_type<tc>, window_params = [{transform_indices = @transform_0, window_bounds = array<i64: 32, 64>}, {transform_indices = @transform_1, window_bounds = array<i64: 64, 32>}, {transform_indices = @transform_2, window_bounds = array<i64: 1, 32>}, {transform_indices = @transform_3, window_bounds = array<i64: 32, 32>}, {transform_indices = @transform_4, window_bounds = array<i64: 32, 32>}]} {
    %c0_i32 = arith.constant 0 : i32
    %0 = arith.cmpi eq, %arg2, %c0_i32 : i32
    %1 = arith.extui %0 : i1 to i32
    %c0_i32_0 = arith.constant 0 : i32
    %2 = arith.cmpi ne, %1, %c0_i32_0 : i32
    scf.if %2 {
      %cst_10 = arith.constant 0.000000e+00 : f32
      %12 = vector.broadcast %cst_10 : f32 to vector<32x32xf32>
      %c0_11 = arith.constant 0 : index
      %c0_12 = arith.constant 0 : index
      %13 = vector.load %arg8[%c0_11, %c0_12] : memref<32x32xf32, #tpu.memory_space<vmem>>, vector<32x32xf32>
      tpu.vector_store %arg8[%c0_11, %c0_12], %12 {strides = array<i32>} : memref<32x32xf32, #tpu.memory_space<vmem>>, vector<32x32xf32>,
    } else {
    }
    %c0 = arith.constant 0 : index
    %c0_1 = arith.constant 0 : index
    %3 = vector.load %arg8[%c0, %c0_1] : memref<32x32xf32, #tpu.memory_space<vmem>>, vector<32x32xf32>
    %c0_2 = arith.constant 0 : index
    %c0_3 = arith.constant 0 : index
    %4 = vector.load %arg3[%c0_2, %c0_3] : memref<32x64xbf16, #tpu.memory_space<vmem>>, vector<32x64xbf16>
    %c0_4 = arith.constant 0 : index
    %c0_5 = arith.constant 0 : index
    %5 = vector.load %arg4[%c0_4, %c0_5] : memref<64x32xbf16, #tpu.memory_space<vmem>>, vector<64x32xbf16>
    %cst = arith.constant dense<0.000000e+00> : vector<32x32xf32>
    %6 = tpu.matmul %4, %5, %cst {dimension_numbers = #tpu.dot_dimension_numbers<[1], [0], [0], [1], [0, 0, 1, 1], [], []>} : vector<32x64xbf16>, vector<64x32xbf16>, vector<32x32xf32> -> vector<32x32xf32>
    %7 = arith.addf %3, %6 : vector<32x32xf32>
    %c0_6 = arith.constant 0 : index
    %c0_7 = arith.constant 0 : index
    %8 = vector.load %arg8[%c0_6, %c0_7] : memref<32x32xf32, #tpu.memory_space<vmem>>, vector<32x32xf32>
    tpu.vector_store %arg8[%c0_6, %c0_7], %7 {strides = array<i32>} : memref<32x32xf32, #tpu.memory_space<vmem>>, vector<32x32xf32>,
    %c0_i32_8 = arith.constant 0 : i32
    %9 = arith.cmpi eq, %arg2, %c0_i32_8 : i32
    %10 = arith.extui %9 : i1 to i32
    %c0_i32_9 = arith.constant 0 : i32
    %11 = arith.cmpi ne, %10, %c0_i32_9 : i32
    scf.if %11 {
      %c0_10 = arith.constant 0 : index
      %c0_11 = arith.constant 0 : index
      %12 = vector.load %arg8[%c0_10, %c0_11] : memref<32x32xf32, #tpu.memory_space<vmem>>, vector<32x32xf32>
      %c0_12 = arith.constant 0 : index
      %c0_13 = arith.constant 0 : index
      %13 = vector.load %arg5[%c0_12, %c0_13] : memref<1x32xf32, #tpu.memory_space<vmem>>, vector<1x32xf32>
      %14 = vector.broadcast %13 : vector<1x32xf32> to vector<32x32xf32>
      %15 = arith.addf %12, %14 : vector<32x32xf32>
      %c0_14 = arith.constant 0 : index
      %c0_15 = arith.constant 0 : index
      %16 = vector.load %arg6[%c0_14, %c0_15] : memref<32x32xf32, #tpu.memory_space<vmem>>, vector<32x32xf32>
      %17 = arith.addf %15, %16 : vector<32x32xf32>
      %c0_16 = arith.constant 0 : index
      %c0_17 = arith.constant 0 : index
      %18 = vector.load %arg7[%c0_16, %c0_17] : memref<32x32xf32, #tpu.memory_space<vmem>>, vector<32x32xf32>
      tpu.vector_store %arg7[%c0_16, %c0_17], %17 {strides = array<i32>} : memref<32x32xf32, #tpu.memory_space<vmem>>, vector<32x32xf32>,
    } else {
    }
    return
  }
  func.func @transform_0(%arg0: i32, %arg1: i32, %arg2: i32) -> (i32, i32) {
    %c0_i32 = arith.constant 0 : i32
    return %arg0, %arg2 : i32, i32
  }
  func.func @transform_1(%arg0: i32, %arg1: i32, %arg2: i32) -> (i32, i32) {
    %c0_i32 = arith.constant 0 : i32
    return %arg2, %arg1 : i32, i32
  }
  func.func @transform_2(%arg0: i32, %arg1: i32, %arg2: i32) -> (i32, i32) {
    %c0_i32 = arith.constant 0 : i32
    %c0_i32_0 = arith.constant 0 : i32
    return %c0_i32, %arg1 : i32, i32
  }
  func.func @transform_3(%arg0: i32, %arg1: i32, %arg2: i32) -> (i32, i32) {
    %c0_i32 = arith.constant 0 : i32
    return %arg0, %arg1 : i32, i32
  }
  func.func @transform_4(%arg0: i32, %arg1: i32, %arg2: i32) -> (i32, i32) {
    %c0_i32 = arith.constant 0 : i32
    return %arg0, %arg1 : i32, i32
  }
}

module attributes {stable_mosaic.version = 11 : i64} {
  func.func @_mm_ln_kernel(%arg0: i32, %arg1: i32, %arg2: memref<32x32xbf16, #tpu.memory_space<vmem>>, %arg3: memref<32x32xbf16, #tpu.memory_space<vmem>>, %arg4: memref<1x32xf32, #tpu.memory_space<vmem>>, %arg5: memref<1x32xf32, #tpu.memory_space<vmem>>, %arg6: memref<32x32xf32, #tpu.memory_space<vmem>>, %arg7: memref<32x32xf32, #tpu.memory_space<vmem>>) attributes {dimension_semantics = [#tpu.dimension_semantics<parallel>, #tpu.dimension_semantics<arbitrary>], iteration_bounds = array<i64: 1, 1>, scalar_prefetch = 0 : i64, scratch_operands = 1 : i64, tpu.core_type = #tpu.core_type<tc>, window_params = [{transform_indices = @transform_0, window_bounds = array<i64: 32, 32>}, {transform_indices = @transform_1, window_bounds = array<i64: 32, 32>}, {pipeline_mode = #tpu.pipeline_mode<synchronous>, transform_indices = @transform_2, window_bounds = array<i64: 1, 32>}, {pipeline_mode = #tpu.pipeline_mode<synchronous>, transform_indices = @transform_3, window_bounds = array<i64: 1, 32>}, {transform_indices = @transform_4, window_bounds = array<i64: 32, 32>}]} {
    %c0_i32 = arith.constant 0 : i32
    %0 = arith.cmpi eq, %arg1, %c0_i32 : i32
    %1 = arith.extui %0 : i1 to i32
    %c0_i32_0 = arith.constant 0 : i32
    %2 = arith.cmpi ne, %1, %c0_i32_0 : i32
    scf.if %2 {
      %cst_10 = arith.constant 0.000000e+00 : f32
      %12 = vector.broadcast %cst_10 : f32 to vector<32x32xf32>
      %c0_11 = arith.constant 0 : index
      %c0_12 = arith.constant 0 : index
      %13 = vector.load %arg7[%c0_11, %c0_12] : memref<32x32xf32, #tpu.memory_space<vmem>>, vector<32x32xf32>
      tpu.vector_store %arg7[%c0_11, %c0_12], %12 {strides = array<i32>} : memref<32x32xf32, #tpu.memory_space<vmem>>, vector<32x32xf32>,
    } else {
    }
    %c0 = arith.constant 0 : index
    %c0_1 = arith.constant 0 : index
    %3 = vector.load %arg7[%c0, %c0_1] : memref<32x32xf32, #tpu.memory_space<vmem>>, vector<32x32xf32>
    %c0_2 = arith.constant 0 : index
    %c0_3 = arith.constant 0 : index
    %4 = vector.load %arg2[%c0_2, %c0_3] : memref<32x32xbf16, #tpu.memory_space<vmem>>, vector<32x32xbf16>
    %c0_4 = arith.constant 0 : index
    %c0_5 = arith.constant 0 : index
    %5 = vector.load %arg3[%c0_4, %c0_5] : memref<32x32xbf16, #tpu.memory_space<vmem>>, vector<32x32xbf16>
    %cst = arith.constant dense<0.000000e+00> : vector<32x32xf32>
    %6 = tpu.matmul %4, %5, %cst {dimension_numbers = #tpu.dot_dimension_numbers<[1], [0], [0], [1], [0, 0, 1, 1], [], []>} : vector<32x32xbf16>, vector<32x32xbf16>, vector<32x32xf32> -> vector<32x32xf32>
    %7 = arith.addf %3, %6 : vector<32x32xf32>
    %c0_6 = arith.constant 0 : index
    %c0_7 = arith.constant 0 : index
    %8 = vector.load %arg7[%c0_6, %c0_7] : memref<32x32xf32, #tpu.memory_space<vmem>>, vector<32x32xf32>
    tpu.vector_store %arg7[%c0_6, %c0_7], %7 {strides = array<i32>} : memref<32x32xf32, #tpu.memory_space<vmem>>, vector<32x32xf32>,
    %c0_i32_8 = arith.constant 0 : i32
    %9 = arith.cmpi eq, %arg1, %c0_i32_8 : i32
    %10 = arith.extui %9 : i1 to i32
    %c0_i32_9 = arith.constant 0 : i32
    %11 = arith.cmpi ne, %10, %c0_i32_9 : i32
    scf.if %11 {
      %c0_10 = arith.constant 0 : index
      %c0_11 = arith.constant 0 : index
      %12 = vector.load %arg7[%c0_10, %c0_11] : memref<32x32xf32, #tpu.memory_space<vmem>>, vector<32x32xf32>
      %cst_12 = arith.constant dense<0.000000e+00> : vector<32xf32>
      %13 = vector.multi_reduction <add>, %12, %cst_12 [1] : vector<32x32xf32> to vector<32xf32>
      %14 = vector.shape_cast %13 : vector<32xf32> to vector<32x1xf32>
      %cst_13 = arith.constant 3.200000e+01 : f32
      %15 = vector.broadcast %cst_13 : f32 to vector<32x1xf32>
      %16 = arith.divf %14, %15 : vector<32x1xf32>
      %17 = vector.broadcast %16 : vector<32x1xf32> to vector<32x32xf32>
      %18 = arith.subf %12, %17 : vector<32x32xf32>
      %19 = arith.mulf %18, %18 : vector<32x32xf32>
      %cst_14 = arith.constant dense<0.000000e+00> : vector<32xf32>
      %20 = vector.multi_reduction <add>, %19, %cst_14 [1] : vector<32x32xf32> to vector<32xf32>
      %21 = vector.shape_cast %20 : vector<32xf32> to vector<32x1xf32>
      %cst_15 = arith.constant 3.200000e+01 : f32
      %22 = vector.broadcast %cst_15 : f32 to vector<32x1xf32>
      %23 = arith.divf %21, %22 : vector<32x1xf32>
      %cst_16 = arith.constant 9.99999997E-7 : f32
      %24 = vector.broadcast %cst_16 : f32 to vector<32x1xf32>
      %25 = arith.addf %23, %24 : vector<32x1xf32>
      %26 = math.rsqrt %25 : vector<32x1xf32>
      %27 = vector.broadcast %26 : vector<32x1xf32> to vector<32x32xf32>
      %28 = arith.mulf %18, %27 : vector<32x32xf32>
      %c0_17 = arith.constant 0 : index
      %c0_18 = arith.constant 0 : index
      %29 = vector.load %arg4[%c0_17, %c0_18] : memref<1x32xf32, #tpu.memory_space<vmem>>, vector<1x32xf32>
      %30 = vector.broadcast %29 : vector<1x32xf32> to vector<32x32xf32>
      %31 = arith.mulf %28, %30 : vector<32x32xf32>
      %c0_19 = arith.constant 0 : index
      %c0_20 = arith.constant 0 : index
      %32 = vector.load %arg5[%c0_19, %c0_20] : memref<1x32xf32, #tpu.memory_space<vmem>>, vector<1x32xf32>
      %33 = vector.broadcast %32 : vector<1x32xf32> to vector<32x32xf32>
      %34 = arith.addf %31, %33 : vector<32x32xf32>
      %c0_21 = arith.constant 0 : index
      %c0_22 = arith.constant 0 : index
      %35 = vector.load %arg6[%c0_21, %c0_22] : memref<32x32xf32, #tpu.memory_space<vmem>>, vector<32x32xf32>
      tpu.vector_store %arg6[%c0_21, %c0_22], %34 {strides = array<i32>} : memref<32x32xf32, #tpu.memory_space<vmem>>, vector<32x32xf32>,
    } else {
    }
    return
  }
  func.func @transform_0(%arg0: i32, %arg1: i32) -> (i32, i32) {
    %c0_i32 = arith.constant 0 : i32
    return %arg0, %arg1 : i32, i32
  }
  func.func @transform_1(%arg0: i32, %arg1: i32) -> (i32, i32) {
    %c0_i32 = arith.constant 0 : i32
    %c0_i32_0 = arith.constant 0 : i32
    return %arg1, %c0_i32 : i32, i32
  }
  func.func @transform_2(%arg0: i32, %arg1: i32) -> (i32, i32) {
    %c0_i32 = arith.constant 0 : i32
    %c0_i32_0 = arith.constant 0 : i32
    %c0_i32_1 = arith.constant 0 : i32
    return %c0_i32, %c0_i32_0 : i32, i32
  }
  func.func @transform_3(%arg0: i32, %arg1: i32) -> (i32, i32) {
    %c0_i32 = arith.constant 0 : i32
    %c0_i32_0 = arith.constant 0 : i32
    %c0_i32_1 = arith.constant 0 : i32
    return %c0_i32, %c0_i32_0 : i32, i32
  }
  func.func @transform_4(%arg0: i32, %arg1: i32) -> (i32, i32) {
    %c0_i32 = arith.constant 0 : i32
    %c0_i32_0 = arith.constant 0 : i32
    return %arg0, %c0_i32 : i32, i32
  }
}

module attributes {stable_mosaic.version = 11 : i64} {
  func.func @_neck3x3_ln_kernel(%arg0: i32, %arg1: memref<1x42x32xbf16, #tpu.memory_space<vmem>>, %arg2: memref<9x32x32xbf16, #tpu.memory_space<vmem>>, %arg3: memref<1x32xf32, #tpu.memory_space<vmem>>, %arg4: memref<1x32xf32, #tpu.memory_space<vmem>>, %arg5: memref<1x24x32xf32, #tpu.memory_space<vmem>>) attributes {dimension_semantics = [#tpu.dimension_semantics<parallel>], iteration_bounds = array<i64: 2>, scalar_prefetch = 0 : i64, scratch_operands = 0 : i64, tpu.core_type = #tpu.core_type<tc>, window_params = [{transform_indices = @transform_0, window_bounds = array<i64: 1, 42, 32>}, {pipeline_mode = #tpu.pipeline_mode<synchronous>, transform_indices = @transform_1, window_bounds = array<i64: 9, 32, 32>}, {pipeline_mode = #tpu.pipeline_mode<synchronous>, transform_indices = @transform_2, window_bounds = array<i64: 1, 32>}, {pipeline_mode = #tpu.pipeline_mode<synchronous>, transform_indices = @transform_3, window_bounds = array<i64: 1, 32>}, {transform_indices = @transform_4, window_bounds = array<i64: 1, 24, 32>}]} {
    %cst = arith.constant 0.000000e+00 : f32
    %0 = vector.broadcast %cst : f32 to vector<24x32xf32>
    %c0 = arith.constant 0 : index
    %c0_0 = arith.constant 0 : index
    %c0_1 = arith.constant 0 : index
    %1 = vector.load %arg1[%c0, %c0_0, %c0_1] : memref<1x42x32xbf16, #tpu.memory_space<vmem>>, vector<1x24x32xbf16>
    %2 = vector.shape_cast %1 : vector<1x24x32xbf16> to vector<24x32xbf16>
    %c0_2 = arith.constant 0 : index
    %c0_3 = arith.constant 0 : index
    %c0_4 = arith.constant 0 : index
    %3 = vector.load %arg2[%c0_2, %c0_3, %c0_4] : memref<9x32x32xbf16, #tpu.memory_space<vmem>>, vector<1x32x32xbf16>
    %4 = vector.shape_cast %3 : vector<1x32x32xbf16> to vector<32x32xbf16>
    %cst_5 = arith.constant dense<0.000000e+00> : vector<24x32xf32>
    %5 = tpu.matmul %2, %4, %cst_5 {dimension_numbers = #tpu.dot_dimension_numbers<[1], [0], [0], [1], [0, 0, 1, 1], [], []>} : vector<24x32xbf16>, vector<32x32xbf16>, vector<24x32xf32> -> vector<24x32xf32>
    %6 = arith.addf %0, %5 : vector<24x32xf32>
    %c0_6 = arith.constant 0 : index
    %c1 = arith.constant 1 : index
    %c0_7 = arith.constant 0 : index
    %7 = vector.load %arg1[%c0_6, %c1, %c0_7] : memref<1x42x32xbf16, #tpu.memory_space<vmem>>, vector<1x24x32xbf16>
    %8 = vector.shape_cast %7 : vector<1x24x32xbf16> to vector<24x32xbf16>
    %c1_8 = arith.constant 1 : index
    %c0_9 = arith.constant 0 : index
    %c0_10 = arith.constant 0 : index
    %9 = vector.load %arg2[%c1_8, %c0_9, %c0_10] : memref<9x32x32xbf16, #tpu.memory_space<vmem>>, vector<1x32x32xbf16>
    %10 = vector.shape_cast %9 : vector<1x32x32xbf16> to vector<32x32xbf16>
    %cst_11 = arith.constant dense<0.000000e+00> : vector<24x32xf32>
    %11 = tpu.matmul %8, %10, %cst_11 {dimension_numbers = #tpu.dot_dimension_numbers<[1], [0], [0], [1], [0, 0, 1, 1], [], []>} : vector<24x32xbf16>, vector<32x32xbf16>, vector<24x32xf32> -> vector<24x32xf32>
    %12 = arith.addf %6, %11 : vector<24x32xf32>
    %c0_12 = arith.constant 0 : index
    %c2 = arith.constant 2 : index
    %c0_13 = arith.constant 0 : index
    %13 = vector.load %arg1[%c0_12, %c2, %c0_13] : memref<1x42x32xbf16, #tpu.memory_space<vmem>>, vector<1x24x32xbf16>
    %14 = vector.shape_cast %13 : vector<1x24x32xbf16> to vector<24x32xbf16>
    %c2_14 = arith.constant 2 : index
    %c0_15 = arith.constant 0 : index
    %c0_16 = arith.constant 0 : index
    %15 = vector.load %arg2[%c2_14, %c0_15, %c0_16] : memref<9x32x32xbf16, #tpu.memory_space<vmem>>, vector<1x32x32xbf16>
    %16 = vector.shape_cast %15 : vector<1x32x32xbf16> to vector<32x32xbf16>
    %cst_17 = arith.constant dense<0.000000e+00> : vector<24x32xf32>
    %17 = tpu.matmul %14, %16, %cst_17 {dimension_numbers = #tpu.dot_dimension_numbers<[1], [0], [0], [1], [0, 0, 1, 1], [], []>} : vector<24x32xbf16>, vector<32x32xbf16>, vector<24x32xf32> -> vector<24x32xf32>
    %18 = arith.addf %12, %17 : vector<24x32xf32>
    %c0_18 = arith.constant 0 : index
    %c6 = arith.constant 6 : index
    %c0_19 = arith.constant 0 : index
    %19 = vector.load %arg1[%c0_18, %c6, %c0_19] : memref<1x42x32xbf16, #tpu.memory_space<vmem>>, vector<1x24x32xbf16>
    %20 = vector.shape_cast %19 : vector<1x24x32xbf16> to vector<24x32xbf16>
    %c3 = arith.constant 3 : index
    %c0_20 = arith.constant 0 : index
    %c0_21 = arith.constant 0 : index
    %21 = vector.load %arg2[%c3, %c0_20, %c0_21] : memref<9x32x32xbf16, #tpu.memory_space<vmem>>, vector<1x32x32xbf16>
    %22 = vector.shape_cast %21 : vector<1x32x32xbf16> to vector<32x32xbf16>
    %cst_22 = arith.constant dense<0.000000e+00> : vector<24x32xf32>
    %23 = tpu.matmul %20, %22, %cst_22 {dimension_numbers = #tpu.dot_dimension_numbers<[1], [0], [0], [1], [0, 0, 1, 1], [], []>} : vector<24x32xbf16>, vector<32x32xbf16>, vector<24x32xf32> -> vector<24x32xf32>
    %24 = arith.addf %18, %23 : vector<24x32xf32>
    %c0_23 = arith.constant 0 : index
    %c7 = arith.constant 7 : index
    %c0_24 = arith.constant 0 : index
    %25 = vector.load %arg1[%c0_23, %c7, %c0_24] : memref<1x42x32xbf16, #tpu.memory_space<vmem>>, vector<1x24x32xbf16>
    %26 = vector.shape_cast %25 : vector<1x24x32xbf16> to vector<24x32xbf16>
    %c4 = arith.constant 4 : index
    %c0_25 = arith.constant 0 : index
    %c0_26 = arith.constant 0 : index
    %27 = vector.load %arg2[%c4, %c0_25, %c0_26] : memref<9x32x32xbf16, #tpu.memory_space<vmem>>, vector<1x32x32xbf16>
    %28 = vector.shape_cast %27 : vector<1x32x32xbf16> to vector<32x32xbf16>
    %cst_27 = arith.constant dense<0.000000e+00> : vector<24x32xf32>
    %29 = tpu.matmul %26, %28, %cst_27 {dimension_numbers = #tpu.dot_dimension_numbers<[1], [0], [0], [1], [0, 0, 1, 1], [], []>} : vector<24x32xbf16>, vector<32x32xbf16>, vector<24x32xf32> -> vector<24x32xf32>
    %30 = arith.addf %24, %29 : vector<24x32xf32>
    %c0_28 = arith.constant 0 : index
    %c8 = arith.constant 8 : index
    %c0_29 = arith.constant 0 : index
    %31 = vector.load %arg1[%c0_28, %c8, %c0_29] : memref<1x42x32xbf16, #tpu.memory_space<vmem>>, vector<1x24x32xbf16>
    %32 = vector.shape_cast %31 : vector<1x24x32xbf16> to vector<24x32xbf16>
    %c5 = arith.constant 5 : index
    %c0_30 = arith.constant 0 : index
    %c0_31 = arith.constant 0 : index
    %33 = vector.load %arg2[%c5, %c0_30, %c0_31] : memref<9x32x32xbf16, #tpu.memory_space<vmem>>, vector<1x32x32xbf16>
    %34 = vector.shape_cast %33 : vector<1x32x32xbf16> to vector<32x32xbf16>
    %cst_32 = arith.constant dense<0.000000e+00> : vector<24x32xf32>
    %35 = tpu.matmul %32, %34, %cst_32 {dimension_numbers = #tpu.dot_dimension_numbers<[1], [0], [0], [1], [0, 0, 1, 1], [], []>} : vector<24x32xbf16>, vector<32x32xbf16>, vector<24x32xf32> -> vector<24x32xf32>
    %36 = arith.addf %30, %35 : vector<24x32xf32>
    %c0_33 = arith.constant 0 : index
    %c12 = arith.constant 12 : index
    %c0_34 = arith.constant 0 : index
    %37 = vector.load %arg1[%c0_33, %c12, %c0_34] : memref<1x42x32xbf16, #tpu.memory_space<vmem>>, vector<1x24x32xbf16>
    %38 = vector.shape_cast %37 : vector<1x24x32xbf16> to vector<24x32xbf16>
    %c6_35 = arith.constant 6 : index
    %c0_36 = arith.constant 0 : index
    %c0_37 = arith.constant 0 : index
    %39 = vector.load %arg2[%c6_35, %c0_36, %c0_37] : memref<9x32x32xbf16, #tpu.memory_space<vmem>>, vector<1x32x32xbf16>
    %40 = vector.shape_cast %39 : vector<1x32x32xbf16> to vector<32x32xbf16>
    %cst_38 = arith.constant dense<0.000000e+00> : vector<24x32xf32>
    %41 = tpu.matmul %38, %40, %cst_38 {dimension_numbers = #tpu.dot_dimension_numbers<[1], [0], [0], [1], [0, 0, 1, 1], [], []>} : vector<24x32xbf16>, vector<32x32xbf16>, vector<24x32xf32> -> vector<24x32xf32>
    %42 = arith.addf %36, %41 : vector<24x32xf32>
    %c0_39 = arith.constant 0 : index
    %c13 = arith.constant 13 : index
    %c0_40 = arith.constant 0 : index
    %43 = vector.load %arg1[%c0_39, %c13, %c0_40] : memref<1x42x32xbf16, #tpu.memory_space<vmem>>, vector<1x24x32xbf16>
    %44 = vector.shape_cast %43 : vector<1x24x32xbf16> to vector<24x32xbf16>
    %c7_41 = arith.constant 7 : index
    %c0_42 = arith.constant 0 : index
    %c0_43 = arith.constant 0 : index
    %45 = vector.load %arg2[%c7_41, %c0_42, %c0_43] : memref<9x32x32xbf16, #tpu.memory_space<vmem>>, vector<1x32x32xbf16>
    %46 = vector.shape_cast %45 : vector<1x32x32xbf16> to vector<32x32xbf16>
    %cst_44 = arith.constant dense<0.000000e+00> : vector<24x32xf32>
    %47 = tpu.matmul %44, %46, %cst_44 {dimension_numbers = #tpu.dot_dimension_numbers<[1], [0], [0], [1], [0, 0, 1, 1], [], []>} : vector<24x32xbf16>, vector<32x32xbf16>, vector<24x32xf32> -> vector<24x32xf32>
    %48 = arith.addf %42, %47 : vector<24x32xf32>
    %c0_45 = arith.constant 0 : index
    %c14 = arith.constant 14 : index
    %c0_46 = arith.constant 0 : index
    %49 = vector.load %arg1[%c0_45, %c14, %c0_46] : memref<1x42x32xbf16, #tpu.memory_space<vmem>>, vector<1x24x32xbf16>
    %50 = vector.shape_cast %49 : vector<1x24x32xbf16> to vector<24x32xbf16>
    %c8_47 = arith.constant 8 : index
    %c0_48 = arith.constant 0 : index
    %c0_49 = arith.constant 0 : index
    %51 = vector.load %arg2[%c8_47, %c0_48, %c0_49] : memref<9x32x32xbf16, #tpu.memory_space<vmem>>, vector<1x32x32xbf16>
    %52 = vector.shape_cast %51 : vector<1x32x32xbf16> to vector<32x32xbf16>
    %cst_50 = arith.constant dense<0.000000e+00> : vector<24x32xf32>
    %53 = tpu.matmul %50, %52, %cst_50 {dimension_numbers = #tpu.dot_dimension_numbers<[1], [0], [0], [1], [0, 0, 1, 1], [], []>} : vector<24x32xbf16>, vector<32x32xbf16>, vector<24x32xf32> -> vector<24x32xf32>
    %54 = arith.addf %48, %53 : vector<24x32xf32>
    %cst_51 = arith.constant dense<0.000000e+00> : vector<24xf32>
    %55 = vector.multi_reduction <add>, %54, %cst_51 [1] : vector<24x32xf32> to vector<24xf32>
    %56 = vector.shape_cast %55 : vector<24xf32> to vector<24x1xf32>
    %cst_52 = arith.constant 3.200000e+01 : f32
    %57 = vector.broadcast %cst_52 : f32 to vector<24x1xf32>
    %58 = arith.divf %56, %57 : vector<24x1xf32>
    %59 = vector.broadcast %58 : vector<24x1xf32> to vector<24x32xf32>
    %60 = arith.subf %54, %59 : vector<24x32xf32>
    %61 = arith.mulf %60, %60 : vector<24x32xf32>
    %cst_53 = arith.constant dense<0.000000e+00> : vector<24xf32>
    %62 = vector.multi_reduction <add>, %61, %cst_53 [1] : vector<24x32xf32> to vector<24xf32>
    %63 = vector.shape_cast %62 : vector<24xf32> to vector<24x1xf32>
    %cst_54 = arith.constant 3.200000e+01 : f32
    %64 = vector.broadcast %cst_54 : f32 to vector<24x1xf32>
    %65 = arith.divf %63, %64 : vector<24x1xf32>
    %cst_55 = arith.constant 9.99999997E-7 : f32
    %66 = vector.broadcast %cst_55 : f32 to vector<24x1xf32>
    %67 = arith.addf %65, %66 : vector<24x1xf32>
    %68 = math.rsqrt %67 : vector<24x1xf32>
    %69 = vector.broadcast %68 : vector<24x1xf32> to vector<24x32xf32>
    %70 = arith.mulf %60, %69 : vector<24x32xf32>
    %c0_56 = arith.constant 0 : index
    %c0_57 = arith.constant 0 : index
    %71 = vector.load %arg3[%c0_56, %c0_57] : memref<1x32xf32, #tpu.memory_space<vmem>>, vector<1x32xf32>
    %72 = vector.broadcast %71 : vector<1x32xf32> to vector<24x32xf32>
    %73 = arith.mulf %70, %72 : vector<24x32xf32>
    %c0_58 = arith.constant 0 : index
    %c0_59 = arith.constant 0 : index
    %74 = vector.load %arg4[%c0_58, %c0_59] : memref<1x32xf32, #tpu.memory_space<vmem>>, vector<1x32xf32>
    %75 = vector.broadcast %74 : vector<1x32xf32> to vector<24x32xf32>
    %76 = arith.addf %73, %75 : vector<24x32xf32>
    %c0_60 = arith.constant 0 : index
    %c0_61 = arith.constant 0 : index
    %c0_62 = arith.constant 0 : index
    %77 = vector.load %arg5[%c0_60, %c0_61, %c0_62] : memref<1x24x32xf32, #tpu.memory_space<vmem>>, vector<1x24x32xf32>
    %78 = vector.shape_cast %77 : vector<1x24x32xf32> to vector<24x32xf32>
    %79 = vector.shape_cast %76 : vector<24x32xf32> to vector<1x24x32xf32>
    tpu.vector_store %arg5[%c0_60, %c0_61, %c0_62], %79 {strides = array<i32>} : memref<1x24x32xf32, #tpu.memory_space<vmem>>, vector<1x24x32xf32>,
    return
  }
  func.func @transform_0(%arg0: i32) -> (i32, i32, i32) {
    %c0_i32 = arith.constant 0 : i32
    %c0_i32_0 = arith.constant 0 : i32
    %c0_i32_1 = arith.constant 0 : i32
    return %arg0, %c0_i32, %c0_i32_0 : i32, i32, i32
  }
  func.func @transform_1(%arg0: i32) -> (i32, i32, i32) {
    %c0_i32 = arith.constant 0 : i32
    %c0_i32_0 = arith.constant 0 : i32
    %c0_i32_1 = arith.constant 0 : i32
    %c0_i32_2 = arith.constant 0 : i32
    return %c0_i32, %c0_i32_0, %c0_i32_1 : i32, i32, i32
  }
  func.func @transform_2(%arg0: i32) -> (i32, i32) {
    %c0_i32 = arith.constant 0 : i32
    %c0_i32_0 = arith.constant 0 : i32
    %c0_i32_1 = arith.constant 0 : i32
    return %c0_i32, %c0_i32_0 : i32, i32
  }
  func.func @transform_3(%arg0: i32) -> (i32, i32) {
    %c0_i32 = arith.constant 0 : i32
    %c0_i32_0 = arith.constant 0 : i32
    %c0_i32_1 = arith.constant 0 : i32
    return %c0_i32, %c0_i32_0 : i32, i32
  }
  func.func @transform_4(%arg0: i32) -> (i32, i32, i32) {
    %c0_i32 = arith.constant 0 : i32
    %c0_i32_0 = arith.constant 0 : i32
    %c0_i32_1 = arith.constant 0 : i32
    return %arg0, %c0_i32, %c0_i32_0 : i32, i32, i32
  }
}

module attributes {stable_mosaic.version = 11 : i64} {
  func.func @_mm_kernel(%arg0: i32, %arg1: i32, %arg2: i32, %arg3: memref<32x32xbf16, #tpu.memory_space<vmem>>, %arg4: memref<32x32xbf16, #tpu.memory_space<vmem>>, %arg5: memref<1x32xf32, #tpu.memory_space<vmem>>, %arg6: memref<32x32xf32, #tpu.memory_space<vmem>>, %arg7: memref<32x32xf32, #tpu.memory_space<vmem>>) attributes {dimension_semantics = [#tpu.dimension_semantics<parallel>, #tpu.dimension_semantics<parallel>, #tpu.dimension_semantics<arbitrary>], iteration_bounds = array<i64: 1, 1, 1>, scalar_prefetch = 0 : i64, scratch_operands = 1 : i64, tpu.core_type = #tpu.core_type<tc>, window_params = [{transform_indices = @transform_0, window_bounds = array<i64: 32, 32>}, {transform_indices = @transform_1, window_bounds = array<i64: 32, 32>}, {transform_indices = @transform_2, window_bounds = array<i64: 1, 32>}, {transform_indices = @transform_3, window_bounds = array<i64: 32, 32>}]} {
    %c0_i32 = arith.constant 0 : i32
    %0 = arith.cmpi eq, %arg2, %c0_i32 : i32
    %1 = arith.extui %0 : i1 to i32
    %c0_i32_0 = arith.constant 0 : i32
    %2 = arith.cmpi ne, %1, %c0_i32_0 : i32
    scf.if %2 {
      %cst_10 = arith.constant 0.000000e+00 : f32
      %12 = vector.broadcast %cst_10 : f32 to vector<32x32xf32>
      %c0_11 = arith.constant 0 : index
      %c0_12 = arith.constant 0 : index
      %13 = vector.load %arg7[%c0_11, %c0_12] : memref<32x32xf32, #tpu.memory_space<vmem>>, vector<32x32xf32>
      tpu.vector_store %arg7[%c0_11, %c0_12], %12 {strides = array<i32>} : memref<32x32xf32, #tpu.memory_space<vmem>>, vector<32x32xf32>,
    } else {
    }
    %c0 = arith.constant 0 : index
    %c0_1 = arith.constant 0 : index
    %3 = vector.load %arg7[%c0, %c0_1] : memref<32x32xf32, #tpu.memory_space<vmem>>, vector<32x32xf32>
    %c0_2 = arith.constant 0 : index
    %c0_3 = arith.constant 0 : index
    %4 = vector.load %arg3[%c0_2, %c0_3] : memref<32x32xbf16, #tpu.memory_space<vmem>>, vector<32x32xbf16>
    %c0_4 = arith.constant 0 : index
    %c0_5 = arith.constant 0 : index
    %5 = vector.load %arg4[%c0_4, %c0_5] : memref<32x32xbf16, #tpu.memory_space<vmem>>, vector<32x32xbf16>
    %cst = arith.constant dense<0.000000e+00> : vector<32x32xf32>
    %6 = tpu.matmul %4, %5, %cst {dimension_numbers = #tpu.dot_dimension_numbers<[1], [0], [0], [1], [0, 0, 1, 1], [], []>} : vector<32x32xbf16>, vector<32x32xbf16>, vector<32x32xf32> -> vector<32x32xf32>
    %7 = arith.addf %3, %6 : vector<32x32xf32>
    %c0_6 = arith.constant 0 : index
    %c0_7 = arith.constant 0 : index
    %8 = vector.load %arg7[%c0_6, %c0_7] : memref<32x32xf32, #tpu.memory_space<vmem>>, vector<32x32xf32>
    tpu.vector_store %arg7[%c0_6, %c0_7], %7 {strides = array<i32>} : memref<32x32xf32, #tpu.memory_space<vmem>>, vector<32x32xf32>,
    %c0_i32_8 = arith.constant 0 : i32
    %9 = arith.cmpi eq, %arg2, %c0_i32_8 : i32
    %10 = arith.extui %9 : i1 to i32
    %c0_i32_9 = arith.constant 0 : i32
    %11 = arith.cmpi ne, %10, %c0_i32_9 : i32
    scf.if %11 {
      %c0_10 = arith.constant 0 : index
      %c0_11 = arith.constant 0 : index
      %12 = vector.load %arg7[%c0_10, %c0_11] : memref<32x32xf32, #tpu.memory_space<vmem>>, vector<32x32xf32>
      %c0_12 = arith.constant 0 : index
      %c0_13 = arith.constant 0 : index
      %13 = vector.load %arg5[%c0_12, %c0_13] : memref<1x32xf32, #tpu.memory_space<vmem>>, vector<1x32xf32>
      %14 = vector.broadcast %13 : vector<1x32xf32> to vector<32x32xf32>
      %15 = arith.addf %12, %14 : vector<32x32xf32>
      %c0_14 = arith.constant 0 : index
      %c0_15 = arith.constant 0 : index
      %16 = vector.load %arg6[%c0_14, %c0_15] : memref<32x32xf32, #tpu.memory_space<vmem>>, vector<32x32xf32>
      tpu.vector_store %arg6[%c0_14, %c0_15], %15 {strides = array<i32>} : memref<32x32xf32, #tpu.memory_space<vmem>>, vector<32x32xf32>,
    } else {
    }
    return
  }
  func.func @transform_0(%arg0: i32, %arg1: i32, %arg2: i32) -> (i32, i32) {
    %c0_i32 = arith.constant 0 : i32
    return %arg0, %arg2 : i32, i32
  }
  func.func @transform_1(%arg0: i32, %arg1: i32, %arg2: i32) -> (i32, i32) {
    %c0_i32 = arith.constant 0 : i32
    return %arg2, %arg1 : i32, i32
  }
  func.func @transform_2(%arg0: i32, %arg1: i32, %arg2: i32) -> (i32, i32) {
    %c0_i32 = arith.constant 0 : i32
    %c0_i32_0 = arith.constant 0 : i32
    return %c0_i32, %arg1 : i32, i32
  }
  func.func @transform_3(%arg0: i32, %arg1: i32, %arg2: i32) -> (i32, i32) {
    %c0_i32 = arith.constant 0 : i32
    return %arg0, %arg1 : i32, i32
  }
}

module attributes {stable_mosaic.version = 11 : i64} {
  func.func @_ln_kernel(%arg0: i32, %arg1: memref<128x8xf32, #tpu.memory_space<vmem>>, %arg2: memref<1x8xf32, #tpu.memory_space<vmem>>, %arg3: memref<1x8xf32, #tpu.memory_space<vmem>>, %arg4: memref<128x8xf32, #tpu.memory_space<vmem>>) attributes {dimension_semantics = [#tpu.dimension_semantics<parallel>], iteration_bounds = array<i64: 1>, scalar_prefetch = 0 : i64, scratch_operands = 0 : i64, tpu.core_type = #tpu.core_type<tc>, window_params = [{transform_indices = @transform_0, window_bounds = array<i64: 128, 8>}, {pipeline_mode = #tpu.pipeline_mode<synchronous>, transform_indices = @transform_1, window_bounds = array<i64: 1, 8>}, {pipeline_mode = #tpu.pipeline_mode<synchronous>, transform_indices = @transform_2, window_bounds = array<i64: 1, 8>}, {transform_indices = @transform_3, window_bounds = array<i64: 128, 8>}]} {
    %c0 = arith.constant 0 : index
    %c0_0 = arith.constant 0 : index
    %0 = vector.load %arg1[%c0, %c0_0] : memref<128x8xf32, #tpu.memory_space<vmem>>, vector<128x8xf32>
    %cst = arith.constant dense<0.000000e+00> : vector<128xf32>
    %1 = vector.multi_reduction <add>, %0, %cst [1] : vector<128x8xf32> to vector<128xf32>
    %2 = vector.shape_cast %1 : vector<128xf32> to vector<128x1xf32>
    %cst_1 = arith.constant 8.000000e+00 : f32
    %3 = vector.broadcast %cst_1 : f32 to vector<128x1xf32>
    %4 = arith.divf %2, %3 : vector<128x1xf32>
    %5 = vector.broadcast %4 : vector<128x1xf32> to vector<128x8xf32>
    %6 = arith.subf %0, %5 : vector<128x8xf32>
    %7 = arith.mulf %6, %6 : vector<128x8xf32>
    %cst_2 = arith.constant dense<0.000000e+00> : vector<128xf32>
    %8 = vector.multi_reduction <add>, %7, %cst_2 [1] : vector<128x8xf32> to vector<128xf32>
    %9 = vector.shape_cast %8 : vector<128xf32> to vector<128x1xf32>
    %cst_3 = arith.constant 8.000000e+00 : f32
    %10 = vector.broadcast %cst_3 : f32 to vector<128x1xf32>
    %11 = arith.divf %9, %10 : vector<128x1xf32>
    %cst_4 = arith.constant 9.99999997E-7 : f32
    %12 = vector.broadcast %cst_4 : f32 to vector<128x1xf32>
    %13 = arith.addf %11, %12 : vector<128x1xf32>
    %14 = math.rsqrt %13 : vector<128x1xf32>
    %15 = vector.broadcast %14 : vector<128x1xf32> to vector<128x8xf32>
    %16 = arith.mulf %6, %15 : vector<128x8xf32>
    %c0_5 = arith.constant 0 : index
    %c0_6 = arith.constant 0 : index
    %17 = vector.load %arg2[%c0_5, %c0_6] : memref<1x8xf32, #tpu.memory_space<vmem>>, vector<1x8xf32>
    %18 = vector.broadcast %17 : vector<1x8xf32> to vector<128x8xf32>
    %19 = arith.mulf %16, %18 : vector<128x8xf32>
    %c0_7 = arith.constant 0 : index
    %c0_8 = arith.constant 0 : index
    %20 = vector.load %arg3[%c0_7, %c0_8] : memref<1x8xf32, #tpu.memory_space<vmem>>, vector<1x8xf32>
    %21 = vector.broadcast %20 : vector<1x8xf32> to vector<128x8xf32>
    %22 = arith.addf %19, %21 : vector<128x8xf32>
    %c0_9 = arith.constant 0 : index
    %c0_10 = arith.constant 0 : index
    %23 = vector.load %arg4[%c0_9, %c0_10] : memref<128x8xf32, #tpu.memory_space<vmem>>, vector<128x8xf32>
    tpu.vector_store %arg4[%c0_9, %c0_10], %22 {strides = array<i32>} : memref<128x8xf32, #tpu.memory_space<vmem>>, vector<128x8xf32>,
    return
  }
  func.func @transform_0(%arg0: i32) -> (i32, i32) {
    %c0_i32 = arith.constant 0 : i32
    %c0_i32_0 = arith.constant 0 : i32
    return %arg0, %c0_i32 : i32, i32
  }
  func.func @transform_1(%arg0: i32) -> (i32, i32) {
    %c0_i32 = arith.constant 0 : i32
    %c0_i32_0 = arith.constant 0 : i32
    %c0_i32_1 = arith.constant 0 : i32
    return %c0_i32, %c0_i32_0 : i32, i32
  }
  func.func @transform_2(%arg0: i32) -> (i32, i32) {
    %c0_i32 = arith.constant 0 : i32
    %c0_i32_0 = arith.constant 0 : i32
    %c0_i32_1 = arith.constant 0 : i32
    return %c0_i32, %c0_i32_0 : i32, i32
  }
  func.func @transform_3(%arg0: i32) -> (i32, i32) {
    %c0_i32 = arith.constant 0 : i32
    %c0_i32_0 = arith.constant 0 : i32
    return %arg0, %c0_i32 : i32, i32
  }
}

module attributes {stable_mosaic.version = 11 : i64} {
  func.func @_mm_kernel(%arg0: i32, %arg1: i32, %arg2: i32, %arg3: memref<128x8xbf16, #tpu.memory_space<vmem>>, %arg4: memref<8x16xbf16, #tpu.memory_space<vmem>>, %arg5: memref<1x16xf32, #tpu.memory_space<vmem>>, %arg6: memref<128x16xf32, #tpu.memory_space<vmem>>, %arg7: memref<128x16xf32, #tpu.memory_space<vmem>>) attributes {dimension_semantics = [#tpu.dimension_semantics<parallel>, #tpu.dimension_semantics<parallel>, #tpu.dimension_semantics<arbitrary>], iteration_bounds = array<i64: 1, 1, 1>, scalar_prefetch = 0 : i64, scratch_operands = 1 : i64, tpu.core_type = #tpu.core_type<tc>, window_params = [{transform_indices = @transform_0, window_bounds = array<i64: 128, 8>}, {transform_indices = @transform_1, window_bounds = array<i64: 8, 16>}, {transform_indices = @transform_2, window_bounds = array<i64: 1, 16>}, {transform_indices = @transform_3, window_bounds = array<i64: 128, 16>}]} {
    %c0_i32 = arith.constant 0 : i32
    %0 = arith.cmpi eq, %arg2, %c0_i32 : i32
    %1 = arith.extui %0 : i1 to i32
    %c0_i32_0 = arith.constant 0 : i32
    %2 = arith.cmpi ne, %1, %c0_i32_0 : i32
    scf.if %2 {
      %cst_10 = arith.constant 0.000000e+00 : f32
      %12 = vector.broadcast %cst_10 : f32 to vector<128x16xf32>
      %c0_11 = arith.constant 0 : index
      %c0_12 = arith.constant 0 : index
      %13 = vector.load %arg7[%c0_11, %c0_12] : memref<128x16xf32, #tpu.memory_space<vmem>>, vector<128x16xf32>
      tpu.vector_store %arg7[%c0_11, %c0_12], %12 {strides = array<i32>} : memref<128x16xf32, #tpu.memory_space<vmem>>, vector<128x16xf32>,
    } else {
    }
    %c0 = arith.constant 0 : index
    %c0_1 = arith.constant 0 : index
    %3 = vector.load %arg7[%c0, %c0_1] : memref<128x16xf32, #tpu.memory_space<vmem>>, vector<128x16xf32>
    %c0_2 = arith.constant 0 : index
    %c0_3 = arith.constant 0 : index
    %4 = vector.load %arg3[%c0_2, %c0_3] : memref<128x8xbf16, #tpu.memory_space<vmem>>, vector<128x8xbf16>
    %c0_4 = arith.constant 0 : index
    %c0_5 = arith.constant 0 : index
    %5 = vector.load %arg4[%c0_4, %c0_5] : memref<8x16xbf16, #tpu.memory_space<vmem>>, vector<8x16xbf16>
    %cst = arith.constant dense<0.000000e+00> : vector<128x16xf32>
    %6 = tpu.matmul %4, %5, %cst {dimension_numbers = #tpu.dot_dimension_numbers<[1], [0], [0], [1], [0, 0, 1, 1], [], []>} : vector<128x8xbf16>, vector<8x16xbf16>, vector<128x16xf32> -> vector<128x16xf32>
    %7 = arith.addf %3, %6 : vector<128x16xf32>
    %c0_6 = arith.constant 0 : index
    %c0_7 = arith.constant 0 : index
    %8 = vector.load %arg7[%c0_6, %c0_7] : memref<128x16xf32, #tpu.memory_space<vmem>>, vector<128x16xf32>
    tpu.vector_store %arg7[%c0_6, %c0_7], %7 {strides = array<i32>} : memref<128x16xf32, #tpu.memory_space<vmem>>, vector<128x16xf32>,
    %c0_i32_8 = arith.constant 0 : i32
    %9 = arith.cmpi eq, %arg2, %c0_i32_8 : i32
    %10 = arith.extui %9 : i1 to i32
    %c0_i32_9 = arith.constant 0 : i32
    %11 = arith.cmpi ne, %10, %c0_i32_9 : i32
    scf.if %11 {
      %c0_10 = arith.constant 0 : index
      %c0_11 = arith.constant 0 : index
      %12 = vector.load %arg7[%c0_10, %c0_11] : memref<128x16xf32, #tpu.memory_space<vmem>>, vector<128x16xf32>
      %c0_12 = arith.constant 0 : index
      %c0_13 = arith.constant 0 : index
      %13 = vector.load %arg5[%c0_12, %c0_13] : memref<1x16xf32, #tpu.memory_space<vmem>>, vector<1x16xf32>
      %14 = vector.broadcast %13 : vector<1x16xf32> to vector<128x16xf32>
      %15 = arith.addf %12, %14 : vector<128x16xf32>
      %c0_14 = arith.constant 0 : index
      %c0_15 = arith.constant 0 : index
      %16 = vector.load %arg6[%c0_14, %c0_15] : memref<128x16xf32, #tpu.memory_space<vmem>>, vector<128x16xf32>
      tpu.vector_store %arg6[%c0_14, %c0_15], %15 {strides = array<i32>} : memref<128x16xf32, #tpu.memory_space<vmem>>, vector<128x16xf32>,
    } else {
    }
    return
  }
  func.func @transform_0(%arg0: i32, %arg1: i32, %arg2: i32) -> (i32, i32) {
    %c0_i32 = arith.constant 0 : i32
    return %arg0, %arg2 : i32, i32
  }
  func.func @transform_1(%arg0: i32, %arg1: i32, %arg2: i32) -> (i32, i32) {
    %c0_i32 = arith.constant 0 : i32
    return %arg2, %arg1 : i32, i32
  }
  func.func @transform_2(%arg0: i32, %arg1: i32, %arg2: i32) -> (i32, i32) {
    %c0_i32 = arith.constant 0 : i32
    %c0_i32_0 = arith.constant 0 : i32
    return %c0_i32, %arg1 : i32, i32
  }
  func.func @transform_3(%arg0: i32, %arg1: i32, %arg2: i32) -> (i32, i32) {
    %c0_i32 = arith.constant 0 : i32
    return %arg0, %arg1 : i32, i32
  }
}

module attributes {stable_mosaic.version = 11 : i64} {
  func.func @_bilinear_kernel(%arg0: i32, %arg1: memref<1x16x16xf32, #tpu.memory_space<vmem>>, %arg2: memref<32x16xf32, #tpu.memory_space<vmem>>, %arg3: memref<16x32xf32, #tpu.memory_space<vmem>>, %arg4: memref<1x32x32xf32, #tpu.memory_space<vmem>>) attributes {dimension_semantics = [#tpu.dimension_semantics<parallel>], iteration_bounds = array<i64: 6>, scalar_prefetch = 0 : i64, scratch_operands = 0 : i64, tpu.core_type = #tpu.core_type<tc>, window_params = [{transform_indices = @transform_0, window_bounds = array<i64: 1, 16, 16>}, {pipeline_mode = #tpu.pipeline_mode<synchronous>, transform_indices = @transform_1, window_bounds = array<i64: 32, 16>}, {pipeline_mode = #tpu.pipeline_mode<synchronous>, transform_indices = @transform_2, window_bounds = array<i64: 16, 32>}, {transform_indices = @transform_3, window_bounds = array<i64: 1, 32, 32>}]} {
    %c0 = arith.constant 0 : index
    %c0_0 = arith.constant 0 : index
    %c0_1 = arith.constant 0 : index
    %0 = vector.load %arg1[%c0, %c0_0, %c0_1] : memref<1x16x16xf32, #tpu.memory_space<vmem>>, vector<1x16x16xf32>
    %1 = vector.shape_cast %0 : vector<1x16x16xf32> to vector<16x16xf32>
    %c0_2 = arith.constant 0 : index
    %c0_3 = arith.constant 0 : index
    %2 = vector.load %arg2[%c0_2, %c0_3] : memref<32x16xf32, #tpu.memory_space<vmem>>, vector<32x16xf32>
    %cst = arith.constant dense<0.000000e+00> : vector<32x16xf32>
    %3 = tpu.matmul %2, %1, %cst {dimension_numbers = #tpu.dot_dimension_numbers<[1], [0], [0], [1], [0, 0, 1, 1], [], []>} : vector<32x16xf32>, vector<16x16xf32>, vector<32x16xf32> -> vector<32x16xf32>
    %c0_4 = arith.constant 0 : index
    %c0_5 = arith.constant 0 : index
    %4 = vector.load %arg3[%c0_4, %c0_5] : memref<16x32xf32, #tpu.memory_space<vmem>>, vector<16x32xf32>
    %cst_6 = arith.constant dense<0.000000e+00> : vector<32x32xf32>
    %5 = tpu.matmul %3, %4, %cst_6 {dimension_numbers = #tpu.dot_dimension_numbers<[1], [0], [0], [1], [0, 0, 1, 1], [], []>} : vector<32x16xf32>, vector<16x32xf32>, vector<32x32xf32> -> vector<32x32xf32>
    %c0_7 = arith.constant 0 : index
    %c0_8 = arith.constant 0 : index
    %c0_9 = arith.constant 0 : index
    %6 = vector.load %arg4[%c0_7, %c0_8, %c0_9] : memref<1x32x32xf32, #tpu.memory_space<vmem>>, vector<1x32x32xf32>
    %7 = vector.shape_cast %6 : vector<1x32x32xf32> to vector<32x32xf32>
    %8 = vector.shape_cast %5 : vector<32x32xf32> to vector<1x32x32xf32>
    tpu.vector_store %arg4[%c0_7, %c0_8, %c0_9], %8 {strides = array<i32>} : memref<1x32x32xf32, #tpu.memory_space<vmem>>, vector<1x32x32xf32>,
    return
  }
  func.func @transform_0(%arg0: i32) -> (i32, i32, i32) {
    %c0_i32 = arith.constant 0 : i32
    %c0_i32_0 = arith.constant 0 : i32
    %c0_i32_1 = arith.constant 0 : i32
    return %arg0, %c0_i32, %c0_i32_0 : i32, i32, i32
  }
  func.func @transform_1(%arg0: i32) -> (i32, i32) {
    %c0_i32 = arith.constant 0 : i32
    %c0_i32_0 = arith.constant 0 : i32
    %c0_i32_1 = arith.constant 0 : i32
    return %c0_i32, %c0_i32_0 : i32, i32
  }
  func.func @transform_2(%arg0: i32) -> (i32, i32) {
    %c0_i32 = arith.constant 0 : i32
    %c0_i32_0 = arith.constant 0 : i32
    %c0_i32_1 = arith.constant 0 : i32
    return %c0_i32, %c0_i32_0 : i32, i32
  }
  func.func @transform_3(%arg0: i32) -> (i32, i32, i32) {
    %c0_i32 = arith.constant 0 : i32
    %c0_i32_0 = arith.constant 0 : i32
    %c0_i32_1 = arith.constant 0 : i32
    return %arg0, %c0_i32, %c0_i32_0 : i32, i32, i32
  }
}

module attributes {stable_mosaic.version = 11 : i64} {
  func.func @_hyper_kernel(%arg0: i32, %arg1: i32, %arg2: memref<1x4x4xbf16, #tpu.memory_space<vmem>>, %arg3: memref<1x256x4xbf16, #tpu.memory_space<vmem>>, %arg4: memref<1x4x256xf32, #tpu.memory_space<vmem>>) attributes {dimension_semantics = [#tpu.dimension_semantics<parallel>, #tpu.dimension_semantics<parallel>], iteration_bounds = array<i64: 2, 1>, scalar_prefetch = 0 : i64, scratch_operands = 0 : i64, tpu.core_type = #tpu.core_type<tc>, window_params = [{transform_indices = @transform_0, window_bounds = array<i64: 1, 4, 4>}, {transform_indices = @transform_1, window_bounds = array<i64: 1, 256, 4>}, {transform_indices = @transform_2, window_bounds = array<i64: 1, 4, 256>}]} {
    %c0 = arith.constant 0 : index
    %c0_0 = arith.constant 0 : index
    %c0_1 = arith.constant 0 : index
    %0 = vector.load %arg2[%c0, %c0_0, %c0_1] : memref<1x4x4xbf16, #tpu.memory_space<vmem>>, vector<1x4x4xbf16>
    %1 = vector.shape_cast %0 : vector<1x4x4xbf16> to vector<4x4xbf16>
    %c0_2 = arith.constant 0 : index
    %c0_3 = arith.constant 0 : index
    %c0_4 = arith.constant 0 : index
    %2 = vector.load %arg3[%c0_2, %c0_3, %c0_4] : memref<1x256x4xbf16, #tpu.memory_space<vmem>>, vector<1x256x4xbf16>
    %3 = vector.shape_cast %2 : vector<1x256x4xbf16> to vector<256x4xbf16>
    %cst = arith.constant dense<0.000000e+00> : vector<4x256xf32>
    %4 = tpu.matmul %1, %3, %cst {dimension_numbers = #tpu.dot_dimension_numbers<[1], [1], [0], [0], [0, 0, 1, 0], [], []>} : vector<4x4xbf16>, vector<256x4xbf16>, vector<4x256xf32> -> vector<4x256xf32>
    %c0_5 = arith.constant 0 : index
    %c0_6 = arith.constant 0 : index
    %c0_7 = arith.constant 0 : index
    %5 = vector.load %arg4[%c0_5, %c0_6, %c0_7] : memref<1x4x256xf32, #tpu.memory_space<vmem>>, vector<1x4x256xf32>
    %6 = vector.shape_cast %5 : vector<1x4x256xf32> to vector<4x256xf32>
    %7 = vector.shape_cast %4 : vector<4x256xf32> to vector<1x4x256xf32>
    tpu.vector_store %arg4[%c0_5, %c0_6, %c0_7], %7 {strides = array<i32>} : memref<1x4x256xf32, #tpu.memory_space<vmem>>, vector<1x4x256xf32>,
    return
  }
  func.func @transform_0(%arg0: i32, %arg1: i32) -> (i32, i32, i32) {
    %c0_i32 = arith.constant 0 : i32
    %c0_i32_0 = arith.constant 0 : i32
    %c0_i32_1 = arith.constant 0 : i32
    return %arg0, %c0_i32, %c0_i32_0 : i32, i32, i32
  }
  func.func @transform_1(%arg0: i32, %arg1: i32) -> (i32, i32, i32) {
    %c0_i32 = arith.constant 0 : i32
    %c0_i32_0 = arith.constant 0 : i32
    return %arg0, %arg1, %c0_i32 : i32, i32, i32
  }
  func.func @transform_2(%arg0: i32, %arg1: i32) -> (i32, i32, i32) {
    %c0_i32 = arith.constant 0 : i32
    %c0_i32_0 = arith.constant 0 : i32
    return %arg0, %c0_i32, %arg1 : i32, i32, i32
  }
}

</mosaic_0001>

<llo_original>
// kernel: _lambda_.19
$region0: #{_lambda_.19}
  #allocation0 [shape = 'u32[]', space=smem, size = 0x4, offset = 0x4, fixed_abs, tag = 'smem constant byte address 0x4 - core index']
  #allocation1 [shape = 'u32[144,128]{1,0:T(1,128)}', space=vmem, size = 0x12000, scoped, tag = 'internal scratch']
  %s0 = inlined_call_operand.vmem [shape: f32[32,32], index: 0, kind: input, shape index: {}]
  %s1 = inlined_call_operand.vmem [shape: f32[1,32], index: 1, kind: input, shape index: {}]
  %s2 = inlined_call_operand.vmem [shape: f32[1,32], index: 2, kind: input, shape index: {}]
  %s3 = inlined_call_operand.vmem [shape: bf16[32,96], index: 3, kind: input, shape index: {}]
  %s4 = inlined_call_operand.vmem [shape: f32[1,96], index: 4, kind: input, shape index: {}]
  %s5 = inlined_call_operand.vmem [shape: f32[32,96], index: 5, kind: output, shape index: {}]
  %s6 = sld [smem:[#allocation0]]
  $region30: #{_lambda_.19} parent=0
    _
  %s8 = ssub.s32 1, %s6
  %s9 = scalar_select 0, %s8, %s6
  // Predicated region
  $region2: #{_lambda_.19} parent=0 // pred_check
    _
  $region3: #{_lambda_.19} parent=0 // pred_check_branch
    %11 = sbr.rel (0) target = $region5
  $region4: #{_lambda_.19} parent=0 // pred_region
    _
  $region5: #{_lambda_.19} parent=0 // pred_fallthru
    _
  // Predicated region
  $region6: #{_lambda_.19} parent=0 // pred_check
    _
  $region7: #{_lambda_.19} parent=0 // pred_check_branch
    %13 = sbr.rel (0) target = $region9
  $region8: #{_lambda_.19} parent=0 // pred_region
    _
  $region9: #{_lambda_.19} parent=0 // pred_fallthru
    _
  // Predicated region
  $region10: #{_lambda_.19} parent=0 // pred_check
    _
  $region11: #{_lambda_.19} parent=0 // pred_check_branch
    %15 = sbr.rel (0) target = $region13
  $region12: #{_lambda_.19} parent=0 // pred_region
    _
  $region13: #{_lambda_.19} parent=0 // pred_fallthru
    _
  // Predicated region
  $region14: #{_lambda_.19} parent=0 // pred_check
    _
  $region15: #{_lambda_.19} parent=0 // pred_check_branch
    %17 = sbr.rel (0) target = $region17
  $region16: #{_lambda_.19} parent=0 // pred_region
    _
  $region17: #{_lambda_.19} parent=0 // pred_fallthru
    _
  // Predicated region
  $region18: #{_lambda_.19} parent=0 // pred_check
    _
  $region19: #{_lambda_.19} parent=0 // pred_check_branch
    %19 = sbr.rel (0) target = $region21
  $region20: #{_lambda_.19} parent=0 // pred_region
    _
  $region21: #{_lambda_.19} parent=0 // pred_fallthru
    _
  %v21 = vld [vmem:[%s0] sm:$0xff]
  %v22 = vld [vmem:[%s0 + $0x8] sm:$0xff]
  %v23 = vld [vmem:[%s0 + $0x10] sm:$0xff]
  %v24 = vld [vmem:[%s0 + $0x18] sm:$0xff]
  %vm25 = vcmask 261120
  %v26 = vsel %vm25, %v21, 0.0
  %27 = vadd.xlane.f32.xlu0 %v26
  %v28 = vpop.xlane.xlu0 %27
  %v29 = vsel %vm25, %v22, 0.0
  %30 = vadd.xlane.f32.xlu0 %v29
  %v31 = vpop.xlane.xlu0 %30
  %v32 = vsel %vm25, %v23, 0.0
  %33 = vadd.xlane.f32.xlu0 %v32
  %v34 = vpop.xlane.xlu0 %33
  %v35 = vsel %vm25, %v24, 0.0
  %36 = vadd.xlane.f32.xlu0 %v35
  %v37 = vpop.xlane.xlu0 %36
  %v38 = vrcp.pop 32.0
  %v39 = vmul.f32 %v28, %v38
  %v40 = vmul.f32 %v31, %v38
  %v41 = vmul.f32 %v34, %v38
  %v42 = vmul.f32 %v37, %v38
  %v43 = vsub.f32 %v21, %v39
  %v44 = vsub.f32 %v22, %v40
  %v45 = vsub.f32 %v23, %v41
  %v46 = vsub.f32 %v24, %v42
  %v47 = vmul.f32 %v43, %v43
  %v48 = vmul.f32 %v44, %v44
  %v49 = vmul.f32 %v45, %v45
  %v50 = vmul.f32 %v46, %v46
  %v51 = vsel %vm25, %v47, 0.0
  %52 = vadd.xlane.f32.xlu0 %v51
  %v53 = vpop.xlane.xlu0 %52
  %v54 = vsel %vm25, %v48, 0.0
  %55 = vadd.xlane.f32.xlu0 %v54
  %v56 = vpop.xlane.xlu0 %55
  %v57 = vsel %vm25, %v49, 0.0
  %58 = vadd.xlane.f32.xlu0 %v57
  %v59 = vpop.xlane.xlu0 %58
  %v60 = vsel %vm25, %v50, 0.0
  %61 = vadd.xlane.f32.xlu0 %v60
  %v62 = vpop.xlane.xlu0 %61
  %v63 = vmul.f32 %v53, %v38
  %v64 = vmul.f32 %v56, %v38
  %v65 = vmul.f32 %v59, %v38
  %v66 = vmul.f32 %v62, %v38
  %v67 = vadd.f32 %v63, 1e-06
  %v68 = vadd.f32 %v64, 1e-06
  %v69 = vadd.f32 %v65, 1e-06
  %v70 = vadd.f32 %v66, 1e-06
  %v71 = vrsqrt.pop %v67
  %v72 = vrsqrt.pop %v68
  %v73 = vrsqrt.pop %v69
  %v74 = vrsqrt.pop %v70
  %v75 = vmul.f32 %v43, %v71
  %v76 = vmul.f32 %v44, %v72
  %v77 = vmul.f32 %v45, %v73
  %v78 = vmul.f32 %v46, %v74
  %v79 = vld [vmem:[%s1] sm:$0x1]
  %v81 = vlaneseq
  %v82 = vshrl.u32 %v81, 7
  %v83 = vsub.s32 0, %v82
  %v84 = vrot.slane %v79, %v83
  %v86 = vmul.f32 %v75, %v84
  %v87 = vmul.f32 %v76, %v84
  %v88 = vmul.f32 %v77, %v84
  %v89 = vmul.f32 %v78, %v84
  %v90 = vld [vmem:[%s2] sm:$0x1]
  %v92 = vlaneseq
  %v93 = vshrl.u32 %v92, 7
  %v94 = vsub.s32 0, %v93
  %v95 = vrot.slane %v90, %v94
  %v97 = vadd.f32 %v86, %v95
  %v98 = vadd.f32 %v87, %v95
  %v99 = vadd.f32 %v88, %v95
  %v100 = vadd.f32 %v89, %v95
  %v101 = vpack.c.bf16 %v98, %v97
  %v102 = vpack.c.bf16 %v100, %v99
  %v103 = vld [vmem:[%s3] sm:$0xf]
  %v104 = vld [vmem:[%s3 + $0x4] sm:$0xf]
  %v105 = vld [vmem:[%s3 + $0x8] sm:$0xf]
  %v106 = vld [vmem:[%s3 + $0xc] sm:$0xf]
  %v107 = vld [vmem:[%s4] sm:$0x1]
  %v109 = vlaneseq
  %v110 = vshrl.u32 %v109, 7
  %v111 = vsub.s32 0, %v110
  %v112 = vrot.slane %v107, %v111
  %v118 = vunpack.c.l.b16 %v103
  %v119 = vunpack.c.l.b16 %v104
  %v120 = vunpack.c.l.b16 %v105
  %v121 = vunpack.c.l.b16 %v106
  %v122 = vpack.c.b16 %v119, %v118
  %v123 = vpack.c.b16 %v121, %v120
  %v127 = vsel %vm25, %v101, 0
  %v130 = vsel %vm25, %v102, 0
  %132 = vmatprep.subr.bf16.mxu0 0
  %133 = vmatpush1.bf16.msra.mxu0 %v122
  %134 = vmatprep.subr.bf16.mxu0 0
  %135 = vmatpush1.bf16.msra.mxu0 %v123
  %136 = vmatprep.subr.bf16.mxu0 0
  %137 = vmatpush1.bf16.msra.mxu0 0
  %138 = vmatprep.subr.bf16.mxu0 0
  %139 = vmatpush1.bf16.msra.mxu0 0
  %140 = vmatprep.subr.bf16.mxu0 0
  %141 = vmatpush1.bf16.msra.mxu0 0
  %142 = vmatprep.subr.bf16.mxu0 0
  %143 = vmatpush1.bf16.msra.mxu0 0
  %144 = vmatprep.subr.bf16.mxu0 0
  %145 = vmatpush1.bf16.msra.mxu0 0
  %146 = vmatprep.subr.bf16.mxu0 0
  %147 = vmatpush1.bf16.msra.mxu0 0
  %148 = vmatprep.subr.bf16.mxu0 0
  %149 = vmatpush1.bf16.msra.mxu0 0
  %150 = vmatprep.subr.bf16.mxu0 0
  %151 = vmatpush1.bf16.msra.mxu0 0
  %152 = vmatprep.subr.bf16.mxu0 0
  %153 = vmatpush1.bf16.msra.mxu0 0
  %154 = vmatprep.subr.bf16.mxu0 0
  %155 = vmatpush1.bf16.msra.mxu0 0
  %156 = vmatprep.subr.bf16.mxu0 0
  %157 = vmatpush1.bf16.msra.mxu0 0
  %158 = vmatprep.subr.bf16.mxu0 0
  %159 = vmatpush1.bf16.msra.mxu0 0
  %160 = vmatprep.subr.bf16.mxu0 0
  %161 = vmatpush1.bf16.msra.mxu0 0
  %162 = vmatprep.subr.bf16.mxu0 0
  %163 = vmatpush1.bf16.msra.mxu0 0
  %164 = vmatprep.mubr.bf16.mxu0 0
  %165 = vmatmul.mubr.bf16.gmra.mrb[0].mxu0 %v127
  %v166 = vpop.f32.mrb[0].mxu0
  %v167 = vadd.f32 %v112, %v166
  %v168 = vpop.f32.mrb[0].mxu0
  %v169 = vpop.f32.mrb[0].mxu0
  %v170 = vadd.f32 %v112, %v169
  %v171 = vpop.f32.mrb[0].mxu0
  %172 = vmatprep.mubr.bf16.mxu0 0
  %173 = vmatmul.mubr.bf16.gmra.mrb[0].mxu0 %v130
  %v174 = vpop.f32.mrb[0].mxu0
  %v175 = vadd.f32 %v112, %v174
  %v176 = vpop.f32.mrb[0].mxu0
  %v177 = vpop.f32.mrb[0].mxu0
  %v178 = vadd.f32 %v112, %v177
  %v179 = vpop.f32.mrb[0].mxu0
  %180 = vdwg.mxu0
  %vm181 = vcmask 785408
  %182 = vst.msk [vmem:[%s5] sm:$0xff] %vm181, %v167
  %183 = vst.msk [vmem:[%s5 + $0x8] sm:$0xff] %vm181, %v170
  %184 = vst.msk [vmem:[%s5 + $0x10] sm:$0xff] %vm181, %v175
  %185 = vst.msk [vmem:[%s5 + $0x18] sm:$0xff] %vm181, %v178
  // Predicated region
  $region22: #{_lambda_.19} parent=0 // pred_check
    _
  $region23: #{_lambda_.19} parent=0 // pred_check_branch
    %187 = sbr.rel (0) target = $region25
  $region24: #{_lambda_.19} parent=0 // pred_region
    _
  $region25: #{_lambda_.19} parent=0 // pred_fallthru
    _
  // Predicated region
  $region26: #{_lambda_.19} parent=0 // pred_check
    _
  $region27: #{_lambda_.19} parent=0 // pred_check_branch
    %189 = sbr.rel (0) target = $region29
  $region28: #{_lambda_.19} parent=0 // pred_region
    _
  $region29: #{_lambda_.19} parent=0 // pred_fallthru
    _

// kernel: _lambda_.18
$region0: #{_lambda_.18}
  #allocation0 [shape = 'u32[]', space=smem, size = 0x4, offset = 0x4, fixed_abs, tag = 'smem constant byte address 0x4 - core index']
  #allocation1 [shape = 'u32[144,128]{1,0:T(1,128)}', space=vmem, size = 0x12000, scoped, tag = 'internal scratch']
  #allocation2 [shape = 'f32[32,32]{1,0:T(8,128)}', space=vmem, size = 0x4000, scoped, tag = 'scratch operand']
  %s0 = inlined_call_operand.vmem [shape: bf16[32,192], index: 0, kind: input, shape index: {}]
  %s1 = inlined_call_operand.vmem [shape: bf16[192,32], index: 1, kind: input, shape index: {}]
  %s2 = inlined_call_operand.vmem [shape: f32[1,32], index: 2, kind: input, shape index: {}]
  %s3 = inlined_call_operand.vmem [shape: f32[32,32], index: 3, kind: output, shape index: {}]
  %s4 = sld [smem:[#allocation0]]
  $region30: #{_lambda_.18} parent=0
    _
  %s6 = ssub.s32 1, %s4
  %s7 = scalar_select 0, %s6, %s4
  // Predicated region
  $region2: #{_lambda_.18} parent=0 // pred_check
    _
  $region3: #{_lambda_.18} parent=0 // pred_check_branch
    %9 = sbr.rel (0) target = $region5
  $region4: #{_lambda_.18} parent=0 // pred_region
    _
  $region5: #{_lambda_.18} parent=0 // pred_fallthru
    _
  // Predicated region
  $region6: #{_lambda_.18} parent=0 // pred_check
    _
  $region7: #{_lambda_.18} parent=0 // pred_check_branch
    %11 = sbr.rel (0) target = $region9
  $region8: #{_lambda_.18} parent=0 // pred_region
    _
  $region9: #{_lambda_.18} parent=0 // pred_fallthru
    _
  // Predicated region
  $region10: #{_lambda_.18} parent=0 // pred_check
    _
  $region11: #{_lambda_.18} parent=0 // pred_check_branch
    %13 = sbr.rel (0) target = $region13
  $region12: #{_lambda_.18} parent=0 // pred_region
    _
  $region13: #{_lambda_.18} parent=0 // pred_fallthru
    _
  %p15 = scmp.eq.s32.totalorder 0, 0
  // Predicated region
  $region14: #{_lambda_.18} parent=0 // pred_check
    %p16 = pneg %p15
  $region15: #{_lambda_.18} parent=0 // pred_check_branch
    %18 = sbr.rel (%p16) target = $region17
  $region16: #{_lambda_.18} parent=0 // pred_region
    %vm19 = vcmask 261120
    %20 = vst.msk [vmem:[#allocation2] sm:$0xff] %vm19, 0.0
    %21 = vst.msk [vmem:[#allocation2 + $0x8] sm:$0xff] %vm19, 0.0
    %22 = vst.msk [vmem:[#allocation2 + $0x10] sm:$0xff] %vm19, 0.0
    %23 = vst.msk [vmem:[#allocation2 + $0x18] sm:$0xff] %vm19, 0.0
  $region17: #{_lambda_.18} parent=0 // pred_fallthru
    _
  %v24 = vld [vmem:[#allocation2] sm:$0xff]
  %v25 = vld [vmem:[#allocation2 + $0x8] sm:$0xff]
  %v26 = vld [vmem:[#allocation2 + $0x10] sm:$0xff]
  %v27 = vld [vmem:[#allocation2 + $0x18] sm:$0xff]
  %v28 = vld [vmem:[%s0] sm:$0xff]
  %v29 = vld [vmem:[%s0 + $0x8] sm:$0xff]
  %v30 = vld [vmem:[%s0 + $0x10] sm:$0xff]
  %v31 = vld [vmem:[%s0 + $0x18] sm:$0xff]
  %v32 = vld [vmem:[%s1] sm:$0xf]
  %v33 = vld [vmem:[%s1 + $0x4] sm:$0xf]
  %v34 = vld [vmem:[%s1 + $0x8] sm:$0xf]
  %v35 = vld [vmem:[%s1 + $0xc] sm:$0xf]
  %v36 = vld [vmem:[%s1 + $0x10] sm:$0xf]
  %v37 = vld [vmem:[%s1 + $0x14] sm:$0xf]
  %v38 = vld [vmem:[%s1 + $0x18] sm:$0xf]
  %v39 = vld [vmem:[%s1 + $0x1c] sm:$0xf]
  %v40 = vld [vmem:[%s1 + $0x20] sm:$0xf]
  %v41 = vld [vmem:[%s1 + $0x24] sm:$0xf]
  %v42 = vld [vmem:[%s1 + $0x28] sm:$0xf]
  %v43 = vld [vmem:[%s1 + $0x2c] sm:$0xf]
  %v44 = vld [vmem:[%s1 + $0x30] sm:$0xf]
  %v45 = vld [vmem:[%s1 + $0x34] sm:$0xf]
  %v46 = vld [vmem:[%s1 + $0x38] sm:$0xf]
  %v47 = vld [vmem:[%s1 + $0x3c] sm:$0xf]
  %v48 = vld [vmem:[%s1 + $0x40] sm:$0xf]
  %v49 = vld [vmem:[%s1 + $0x44] sm:$0xf]
  %v50 = vld [vmem:[%s1 + $0x48] sm:$0xf]
  %v51 = vld [vmem:[%s1 + $0x4c] sm:$0xf]
  %v52 = vld [vmem:[%s1 + $0x50] sm:$0xf]
  %v53 = vld [vmem:[%s1 + $0x54] sm:$0xf]
  %v54 = vld [vmem:[%s1 + $0x58] sm:$0xf]
  %v55 = vld [vmem:[%s1 + $0x5c] sm:$0xf]
  %v60 = vunpack.c.l.b16 %v28
  %v61 = vunpack.c.h.b16 %v28
  %v62 = vunpack.c.l.b16 %v29
  %v63 = vunpack.c.h.b16 %v29
  %v64 = vunpack.c.l.b16 %v30
  %v65 = vunpack.c.h.b16 %v30
  %v66 = vunpack.c.l.b16 %v31
  %v67 = vunpack.c.h.b16 %v31
  %v68 = vpack.c.b16 %v62, %v60
  %v69 = vpack.c.b16 %v63, %v61
  %v70 = vpack.c.b16 %v66, %v64
  %v71 = vpack.c.b16 %v67, %v65
  %v98 = vunpack.c.l.b16 %v32
  %v99 = vunpack.c.l.b16 %v33
  %v100 = vunpack.c.l.b16 %v34
  %v101 = vunpack.c.l.b16 %v35
  %v102 = vunpack.c.l.b16 %v36
  %v103 = vunpack.c.l.b16 %v37
  %v104 = vunpack.c.l.b16 %v38
  %v105 = vunpack.c.l.b16 %v39
  %v106 = vunpack.c.l.b16 %v40
  %v107 = vunpack.c.l.b16 %v41
  %v108 = vunpack.c.l.b16 %v42
  %v109 = vunpack.c.l.b16 %v43
  %v110 = vunpack.c.l.b16 %v44
  %v111 = vunpack.c.l.b16 %v45
  %v112 = vunpack.c.l.b16 %v46
  %v113 = vunpack.c.l.b16 %v47
  %v114 = vunpack.c.l.b16 %v48
  %v115 = vunpack.c.l.b16 %v49
  %v116 = vunpack.c.l.b16 %v50
  %v117 = vunpack.c.l.b16 %v51
  %v118 = vunpack.c.l.b16 %v52
  %v119 = vunpack.c.l.b16 %v53
  %v120 = vunpack.c.l.b16 %v54
  %v121 = vunpack.c.l.b16 %v55
  %v122 = vpack.c.b16 %v99, %v98
  %v123 = vpack.c.b16 %v101, %v100
  %v124 = vpack.c.b16 %v103, %v102
  %v125 = vpack.c.b16 %v105, %v104
  %v126 = vpack.c.b16 %v107, %v106
  %v127 = vpack.c.b16 %v109, %v108
  %v128 = vpack.c.b16 %v111, %v110
  %v129 = vpack.c.b16 %v113, %v112
  %v130 = vpack.c.b16 %v115, %v114
  %v131 = vpack.c.b16 %v117, %v116
  %v132 = vpack.c.b16 %v119, %v118
  %v133 = vpack.c.b16 %v121, %v120
  %vm146 = vcmask 523264
  %v148 = vsel %vm146, %v69, 0
  %v151 = vsel %vm146, %v71, 0
  %153 = vmatprep.subr.bf16.mxu0 0
  %154 = vmatpush1.bf16.msra.mxu0 %v122
  %155 = vmatprep.subr.bf16.mxu0 0
  %156 = vmatpush1.bf16.msra.mxu0 %v123
  %157 = vmatprep.subr.bf16.mxu0 0
  %158 = vmatpush1.bf16.msra.mxu0 %v124
  %159 = vmatprep.subr.bf16.mxu0 0
  %160 = vmatpush1.bf16.msra.mxu0 %v125
  %161 = vmatprep.subr.bf16.mxu0 0
  %162 = vmatpush1.bf16.msra.mxu0 %v126
  %163 = vmatprep.subr.bf16.mxu0 0
  %164 = vmatpush1.bf16.msra.mxu0 %v127
  %165 = vmatprep.subr.bf16.mxu0 0
  %166 = vmatpush1.bf16.msra.mxu0 %v128
  %167 = vmatprep.subr.bf16.mxu0 0
  %168 = vmatpush1.bf16.msra.mxu0 %v129
  %169 = vmatprep.subr.bf16.mxu0 0
  %170 = vmatpush1.bf16.msra.mxu0 %v130
  %171 = vmatprep.subr.bf16.mxu0 0
  %172 = vmatpush1.bf16.msra.mxu0 %v131
  %173 = vmatprep.subr.bf16.mxu0 0
  %174 = vmatpush1.bf16.msra.mxu0 %v132
  %175 = vmatprep.subr.bf16.mxu0 0
  %176 = vmatpush1.bf16.msra.mxu0 %v133
  %177 = vmatprep.subr.bf16.mxu0 0
  %178 = vmatpush1.bf16.msra.mxu0 0
  %179 = vmatprep.subr.bf16.mxu0 0
  %180 = vmatpush1.bf16.msra.mxu0 0
  %181 = vmatprep.subr.bf16.mxu0 0
  %182 = vmatpush1.bf16.msra.mxu0 0
  %183 = vmatprep.subr.bf16.mxu0 0
  %184 = vmatpush1.bf16.msra.mxu0 0
  %185 = vmatprep.mubr.bf16.mxu0 %v148
  %186 = vmatmul.mubr.bf16.gmra.mrb[0].mxu0 %v68
  %v187 = vpop.f32.mrb[0].mxu0
  %v188 = vadd.f32 0.0, %v187
  %v189 = vpop.f32.mrb[0].mxu0
  %v190 = vpop.f32.mrb[0].mxu0
  %v191 = vadd.f32 0.0, %v190
  %v192 = vpop.f32.mrb[0].mxu0
  %193 = vmatprep.mubr.bf16.mxu0 %v151
  %194 = vmatmul.mubr.bf16.gmra.mrb[0].mxu0 %v70
  %v195 = vpop.f32.mrb[0].mxu0
  %v196 = vadd.f32 0.0, %v195
  %v197 = vpop.f32.mrb[0].mxu0
  %v198 = vpop.f32.mrb[0].mxu0
  %v199 = vadd.f32 0.0, %v198
  %v200 = vpop.f32.mrb[0].mxu0
  %201 = vdwg.mxu0
  %v202 = vadd.f32 %v24, %v188
  %v203 = vadd.f32 %v25, %v191
  %v204 = vadd.f32 %v26, %v196
  %v205 = vadd.f32 %v27, %v199
  %vm206 = vcmask 261120
  %207 = vst.msk [vmem:[#allocation2] sm:$0xff] %vm206, %v202
  %208 = vst.msk [vmem:[#allocation2 + $0x8] sm:$0xff] %vm206, %v203
  %209 = vst.msk [vmem:[#allocation2 + $0x10] sm:$0xff] %vm206, %v204
  %210 = vst.msk [vmem:[#allocation2 + $0x18] sm:$0xff] %vm206, %v205
  // Predicated region
  $region18: #{_lambda_.18} parent=0 // pred_check
    %p211 = pneg %p15
  $region19: #{_lambda_.18} parent=0 // pred_check_branch
    %213 = sbr.rel (%p211) target = $region21
  $region20: #{_lambda_.18} parent=0 // pred_region
    %v214 = vld [vmem:[#allocation2] sm:$0xff]
    %v215 = vld [vmem:[#allocation2 + $0x8] sm:$0xff]
    %v216 = vld [vmem:[#allocation2 + $0x10] sm:$0xff]
    %v217 = vld [vmem:[#allocation2 + $0x18] sm:$0xff]
    %v218 = vld [vmem:[%s2] sm:$0x1]
    %v220 = vlaneseq
    %v221 = vshrl.u32 %v220, 7
    %v222 = vsub.s32 0, %v221
    %v223 = vrot.slane %v218, %v222
    %v225 = vadd.f32 %v214, %v223
    %v226 = vadd.f32 %v215, %v223
    %v227 = vadd.f32 %v216, %v223
    %v228 = vadd.f32 %v217, %v223
    %229 = vst.msk [vmem:[%s3] sm:$0xff] %vm206, %v225
    %230 = vst.msk [vmem:[%s3 + $0x8] sm:$0xff] %vm206, %v226
    %231 = vst.msk [vmem:[%s3 + $0x10] sm:$0xff] %vm206, %v227
    %232 = vst.msk [vmem:[%s3 + $0x18] sm:$0xff] %vm206, %v228
  $region21: #{_lambda_.18} parent=0 // pred_fallthru
    _
  // Predicated region
  $region22: #{_lambda_.18} parent=0 // pred_check
    _
  $region23: #{_lambda_.18} parent=0 // pred_check_branch
    %234 = sbr.rel (0) target = $region25
  $region24: #{_lambda_.18} parent=0 // pred_region
    _
  $region25: #{_lambda_.18} parent=0 // pred_fallthru
    _
  // Predicated region
  $region26: #{_lambda_.18} parent=0 // pred_check
    _
  $region27: #{_lambda_.18} parent=0 // pred_check_branch
    %236 = sbr.rel (0) target = $region29
  $region28: #{_lambda_.18} parent=0 // pred_region
    _
  $region29: #{_lambda_.18} parent=0 // pred_fallthru
    _

// kernel: _lambda_.21
$region0: #{_lambda_.21}
  #allocation0 [shape = 'u32[]', space=smem, size = 0x4, offset = 0x4, fixed_abs, tag = 'smem constant byte address 0x4 - core index']
  #allocation1 [shape = 'u32[144,128]{1,0:T(1,128)}', space=vmem, size = 0x12000, scoped, tag = 'internal scratch']
  #allocation2 [shape = 'f32[32,32]{1,0:T(8,128)}', space=vmem, size = 0x4000, scoped, tag = 'scratch operand']
  %s0 = inlined_call_operand.vmem [shape: bf16[32,32], index: 0, kind: input, shape index: {}]
  %s1 = inlined_call_operand.vmem [shape: bf16[32,32], index: 1, kind: input, shape index: {}]
  %s2 = inlined_call_operand.vmem [shape: f32[1,32], index: 2, kind: input, shape index: {}]
  %s3 = inlined_call_operand.vmem [shape: f32[32,32], index: 3, kind: input, shape index: {}]
  %s4 = inlined_call_operand.vmem [shape: f32[32,32], index: 4, kind: output, shape index: {}]
  %s5 = sld [smem:[#allocation0]]
  $region34: #{_lambda_.21} parent=0
    _
  %s7 = ssub.s32 1, %s5
  %s8 = scalar_select 0, %s7, %s5
  // Predicated region
  $region2: #{_lambda_.21} parent=0 // pred_check
    _
  $region3: #{_lambda_.21} parent=0 // pred_check_branch
    %10 = sbr.rel (0) target = $region5
  $region4: #{_lambda_.21} parent=0 // pred_region
    _
  $region5: #{_lambda_.21} parent=0 // pred_fallthru
    _
  // Predicated region
  $region6: #{_lambda_.21} parent=0 // pred_check
    _
  $region7: #{_lambda_.21} parent=0 // pred_check_branch
    %12 = sbr.rel (0) target = $region9
  $region8: #{_lambda_.21} parent=0 // pred_region
    _
  $region9: #{_lambda_.21} parent=0 // pred_fallthru
    _
  // Predicated region
  $region10: #{_lambda_.21} parent=0 // pred_check
    _
  $region11: #{_lambda_.21} parent=0 // pred_check_branch
    %14 = sbr.rel (0) target = $region13
  $region12: #{_lambda_.21} parent=0 // pred_region
    _
  $region13: #{_lambda_.21} parent=0 // pred_fallthru
    _
  // Predicated region
  $region14: #{_lambda_.21} parent=0 // pred_check
    _
  $region15: #{_lambda_.21} parent=0 // pred_check_branch
    %16 = sbr.rel (0) target = $region17
  $region16: #{_lambda_.21} parent=0 // pred_region
    _
  $region17: #{_lambda_.21} parent=0 // pred_fallthru
    _
  %p18 = scmp.eq.s32.totalorder 0, 0
  // Predicated region
  $region18: #{_lambda_.21} parent=0 // pred_check
    %p19 = pneg %p18
  $region19: #{_lambda_.21} parent=0 // pred_check_branch
    %21 = sbr.rel (%p19) target = $region21
  $region20: #{_lambda_.21} parent=0 // pred_region
    %vm22 = vcmask 261120
    %23 = vst.msk [vmem:[#allocation2] sm:$0xff] %vm22, 0.0
    %24 = vst.msk [vmem:[#allocation2 + $0x8] sm:$0xff] %vm22, 0.0
    %25 = vst.msk [vmem:[#allocation2 + $0x10] sm:$0xff] %vm22, 0.0
    %26 = vst.msk [vmem:[#allocation2 + $0x18] sm:$0xff] %vm22, 0.0
  $region21: #{_lambda_.21} parent=0 // pred_fallthru
    _
  %v27 = vld [vmem:[#allocation2] sm:$0xff]
  %v28 = vld [vmem:[#allocation2 + $0x8] sm:$0xff]
  %v29 = vld [vmem:[#allocation2 + $0x10] sm:$0xff]
  %v30 = vld [vmem:[#allocation2 + $0x18] sm:$0xff]
  %v31 = vld [vmem:[%s0] sm:$0xf]
  %v32 = vld [vmem:[%s0 + $0x4] sm:$0xf]
  %v33 = vld [vmem:[%s0 + $0x8] sm:$0xf]
  %v34 = vld [vmem:[%s0 + $0xc] sm:$0xf]
  %v35 = vld [vmem:[%s1] sm:$0xf]
  %v36 = vld [vmem:[%s1 + $0x4] sm:$0xf]
  %v37 = vld [vmem:[%s1 + $0x8] sm:$0xf]
  %v38 = vld [vmem:[%s1 + $0xc] sm:$0xf]
  %v43 = vunpack.c.l.b16 %v31
  %v44 = vunpack.c.l.b16 %v32
  %v45 = vunpack.c.l.b16 %v33
  %v46 = vunpack.c.l.b16 %v34
  %v47 = vpack.c.b16 %v44, %v43
  %v48 = vpack.c.b16 %v46, %v45
  %v53 = vunpack.c.l.b16 %v35
  %v54 = vunpack.c.l.b16 %v36
  %v55 = vunpack.c.l.b16 %v37
  %v56 = vunpack.c.l.b16 %v38
  %v57 = vpack.c.b16 %v54, %v53
  %v58 = vpack.c.b16 %v56, %v55
  %vm61 = vcmask 261120
  %v63 = vsel %vm61, %v47, 0
  %v66 = vsel %vm61, %v48, 0
  %68 = vmatprep.subr.bf16.mxu0 0
  %69 = vmatpush1.bf16.msra.mxu0 %v57
  %70 = vmatprep.subr.bf16.mxu0 0
  %71 = vmatpush1.bf16.msra.mxu0 %v58
  %72 = vmatprep.subr.bf16.mxu0 0
  %73 = vmatpush1.bf16.msra.mxu0 0
  %74 = vmatprep.subr.bf16.mxu0 0
  %75 = vmatpush1.bf16.msra.mxu0 0
  %76 = vmatprep.subr.bf16.mxu0 0
  %77 = vmatpush1.bf16.msra.mxu0 0
  %78 = vmatprep.subr.bf16.mxu0 0
  %79 = vmatpush1.bf16.msra.mxu0 0
  %80 = vmatprep.subr.bf16.mxu0 0
  %81 = vmatpush1.bf16.msra.mxu0 0
  %82 = vmatprep.subr.bf16.mxu0 0
  %83 = vmatpush1.bf16.msra.mxu0 0
  %84 = vmatprep.subr.bf16.mxu0 0
  %85 = vmatpush1.bf16.msra.mxu0 0
  %86 = vmatprep.subr.bf16.mxu0 0
  %87 = vmatpush1.bf16.msra.mxu0 0
  %88 = vmatprep.subr.bf16.mxu0 0
  %89 = vmatpush1.bf16.msra.mxu0 0
  %90 = vmatprep.subr.bf16.mxu0 0
  %91 = vmatpush1.bf16.msra.mxu0 0
  %92 = vmatprep.subr.bf16.mxu0 0
  %93 = vmatpush1.bf16.msra.mxu0 0
  %94 = vmatprep.subr.bf16.mxu0 0
  %95 = vmatpush1.bf16.msra.mxu0 0
  %96 = vmatprep.subr.bf16.mxu0 0
  %97 = vmatpush1.bf16.msra.mxu0 0
  %98 = vmatprep.subr.bf16.mxu0 0
  %99 = vmatpush1.bf16.msra.mxu0 0
  %100 = vmatprep.mubr.bf16.mxu0 0
  %101 = vmatmul.mubr.bf16.gmra.mrb[0].mxu0 %v63
  %v102 = vpop.f32.mrb[0].mxu0
  %v103 = vadd.f32 0.0, %v102
  %v104 = vpop.f32.mrb[0].mxu0
  %v105 = vpop.f32.mrb[0].mxu0
  %v106 = vadd.f32 0.0, %v105
  %v107 = vpop.f32.mrb[0].mxu0
  %108 = vmatprep.mubr.bf16.mxu0 0
  %109 = vmatmul.mubr.bf16.gmra.mrb[0].mxu0 %v66
  %v110 = vpop.f32.mrb[0].mxu0
  %v111 = vadd.f32 0.0, %v110
  %v112 = vpop.f32.mrb[0].mxu0
  %v113 = vpop.f32.mrb[0].mxu0
  %v114 = vadd.f32 0.0, %v113
  %v115 = vpop.f32.mrb[0].mxu0
  %116 = vdwg.mxu0
  %v117 = vadd.f32 %v27, %v103
  %v118 = vadd.f32 %v28, %v106
  %v119 = vadd.f32 %v29, %v111
  %v120 = vadd.f32 %v30, %v114
  %121 = vst.msk [vmem:[#allocation2] sm:$0xff] %vm61, %v117
  %122 = vst.msk [vmem:[#allocation2 + $0x8] sm:$0xff] %vm61, %v118
  %123 = vst.msk [vmem:[#allocation2 + $0x10] sm:$0xff] %vm61, %v119
  %124 = vst.msk [vmem:[#allocation2 + $0x18] sm:$0xff] %vm61, %v120
  // Predicated region
  $region22: #{_lambda_.21} parent=0 // pred_check
    %p125 = pneg %p18
  $region23: #{_lambda_.21} parent=0 // pred_check_branch
    %127 = sbr.rel (%p125) target = $region25
  $region24: #{_lambda_.21} parent=0 // pred_region
    %v128 = vld [vmem:[#allocation2] sm:$0xff]
    %v129 = vld [vmem:[#allocation2 + $0x8] sm:$0xff]
    %v130 = vld [vmem:[#allocation2 + $0x10] sm:$0xff]
    %v131 = vld [vmem:[#allocation2 + $0x18] sm:$0xff]
    %v132 = vld [vmem:[%s2] sm:$0x1]
    %v134 = vlaneseq
    %v135 = vshrl.u32 %v134, 7
    %v136 = vsub.s32 0, %v135
    %v137 = vrot.slane %v132, %v136
    %v139 = vadd.f32 %v128, %v137
    %v140 = vadd.f32 %v129, %v137
    %v141 = vadd.f32 %v130, %v137
    %v142 = vadd.f32 %v131, %v137
    %v143 = vld [vmem:[%s3] sm:$0xff]
    %v144 = vld [vmem:[%s3 + $0x8] sm:$0xff]
    %v145 = vld [vmem:[%s3 + $0x10] sm:$0xff]
    %v146 = vld [vmem:[%s3 + $0x18] sm:$0xff]
    %v147 = vadd.f32 %v139, %v143
    %v148 = vadd.f32 %v140, %v144
    %v149 = vadd.f32 %v141, %v145
    %v150 = vadd.f32 %v142, %v146
    %151 = vst.msk [vmem:[%s4] sm:$0xff] %vm61, %v147
    %152 = vst.msk [vmem:[%s4 + $0x8] sm:$0xff] %vm61, %v148
    %153 = vst.msk [vmem:[%s4 + $0x10] sm:$0xff] %vm61, %v149
    %154 = vst.msk [vmem:[%s4 + $0x18] sm:$0xff] %vm61, %v150
  $region25: #{_lambda_.21} parent=0 // pred_fallthru
    _
  // Predicated region
  $region26: #{_lambda_.21} parent=0 // pred_check
    _
  $region27: #{_lambda_.21} parent=0 // pred_check_branch
    %156 = sbr.rel (0) target = $region29
  $region28: #{_lambda_.21} parent=0 // pred_region
    _
  $region29: #{_lambda_.21} parent=0 // pred_fallthru
    _
  // Predicated region
  $region30: #{_lambda_.21} parent=0 // pred_check
    _
  $region31: #{_lambda_.21} parent=0 // pred_check_branch
    %158 = sbr.rel (0) target = $region33
  $region32: #{_lambda_.21} parent=0 // pred_region
    _
  $region33: #{_lambda_.21} parent=0 // pred_fallthru
    _

// kernel: _lambda_.22
$region0: #{_lambda_.22}
  #allocation0 [shape = 'u32[]', space=smem, size = 0x4, offset = 0x4, fixed_abs, tag = 'smem constant byte address 0x4 - core index']
  #allocation1 [shape = 'u32[144,128]{1,0:T(1,128)}', space=vmem, size = 0x12000, scoped, tag = 'internal scratch']
  %s0 = inlined_call_operand.vmem [shape: f32[32,32], index: 0, kind: input, shape index: {}]
  %s1 = inlined_call_operand.vmem [shape: f32[1,32], index: 1, kind: input, shape index: {}]
  %s2 = inlined_call_operand.vmem [shape: f32[1,32], index: 2, kind: input, shape index: {}]
  %s3 = inlined_call_operand.vmem [shape: bf16[32,64], index: 3, kind: input, shape index: {}]
  %s4 = inlined_call_operand.vmem [shape: f32[1,64], index: 4, kind: input, shape index: {}]
  %s5 = inlined_call_operand.vmem [shape: f32[32,64], index: 5, kind: output, shape index: {}]
  %s6 = sld [smem:[#allocation0]]
  $region30: #{_lambda_.22} parent=0
    _
  %s8 = ssub.s32 1, %s6
  %s9 = scalar_select 0, %s8, %s6
  // Predicated region
  $region2: #{_lambda_.22} parent=0 // pred_check
    _
  $region3: #{_lambda_.22} parent=0 // pred_check_branch
    %11 = sbr.rel (0) target = $region5
  $region4: #{_lambda_.22} parent=0 // pred_region
    _
  $region5: #{_lambda_.22} parent=0 // pred_fallthru
    _
  // Predicated region
  $region6: #{_lambda_.22} parent=0 // pred_check
    _
  $region7: #{_lambda_.22} parent=0 // pred_check_branch
    %13 = sbr.rel (0) target = $region9
  $region8: #{_lambda_.22} parent=0 // pred_region
    _
  $region9: #{_lambda_.22} parent=0 // pred_fallthru
    _
  // Predicated region
  $region10: #{_lambda_.22} parent=0 // pred_check
    _
  $region11: #{_lambda_.22} parent=0 // pred_check_branch
    %15 = sbr.rel (0) target = $region13
  $region12: #{_lambda_.22} parent=0 // pred_region
    _
  $region13: #{_lambda_.22} parent=0 // pred_fallthru
    _
  // Predicated region
  $region14: #{_lambda_.22} parent=0 // pred_check
    _
  $region15: #{_lambda_.22} parent=0 // pred_check_branch
    %17 = sbr.rel (0) target = $region17
  $region16: #{_lambda_.22} parent=0 // pred_region
    _
  $region17: #{_lambda_.22} parent=0 // pred_fallthru
    _
  // Predicated region
  $region18: #{_lambda_.22} parent=0 // pred_check
    _
  $region19: #{_lambda_.22} parent=0 // pred_check_branch
    %19 = sbr.rel (0) target = $region21
  $region20: #{_lambda_.22} parent=0 // pred_region
    _
  $region21: #{_lambda_.22} parent=0 // pred_fallthru
    _
  %v21 = vld [vmem:[%s0] sm:$0xff]
  %v22 = vld [vmem:[%s0 + $0x8] sm:$0xff]
  %v23 = vld [vmem:[%s0 + $0x10] sm:$0xff]
  %v24 = vld [vmem:[%s0 + $0x18] sm:$0xff]
  %vm25 = vcmask 261120
  %v26 = vsel %vm25, %v21, 0.0
  %27 = vadd.xlane.f32.xlu0 %v26
  %v28 = vpop.xlane.xlu0 %27
  %v29 = vsel %vm25, %v22, 0.0
  %30 = vadd.xlane.f32.xlu0 %v29
  %v31 = vpop.xlane.xlu0 %30
  %v32 = vsel %vm25, %v23, 0.0
  %33 = vadd.xlane.f32.xlu0 %v32
  %v34 = vpop.xlane.xlu0 %33
  %v35 = vsel %vm25, %v24, 0.0
  %36 = vadd.xlane.f32.xlu0 %v35
  %v37 = vpop.xlane.xlu0 %36
  %v38 = vrcp.pop 32.0
  %v39 = vmul.f32 %v28, %v38
  %v40 = vmul.f32 %v31, %v38
  %v41 = vmul.f32 %v34, %v38
  %v42 = vmul.f32 %v37, %v38
  %v43 = vsub.f32 %v21, %v39
  %v44 = vsub.f32 %v22, %v40
  %v45 = vsub.f32 %v23, %v41
  %v46 = vsub.f32 %v24, %v42
  %v47 = vmul.f32 %v43, %v43
  %v48 = vmul.f32 %v44, %v44
  %v49 = vmul.f32 %v45, %v45
  %v50 = vmul.f32 %v46, %v46
  %v51 = vsel %vm25, %v47, 0.0
  %52 = vadd.xlane.f32.xlu0 %v51
  %v53 = vpop.xlane.xlu0 %52
  %v54 = vsel %vm25, %v48, 0.0
  %55 = vadd.xlane.f32.xlu0 %v54
  %v56 = vpop.xlane.xlu0 %55
  %v57 = vsel %vm25, %v49, 0.0
  %58 = vadd.xlane.f32.xlu0 %v57
  %v59 = vpop.xlane.xlu0 %58
  %v60 = vsel %vm25, %v50, 0.0
  %61 = vadd.xlane.f32.xlu0 %v60
  %v62 = vpop.xlane.xlu0 %61
  %v63 = vmul.f32 %v53, %v38
  %v64 = vmul.f32 %v56, %v38
  %v65 = vmul.f32 %v59, %v38
  %v66 = vmul.f32 %v62, %v38
  %v67 = vadd.f32 %v63, 1e-06
  %v68 = vadd.f32 %v64, 1e-06
  %v69 = vadd.f32 %v65, 1e-06
  %v70 = vadd.f32 %v66, 1e-06
  %v71 = vrsqrt.pop %v67
  %v72 = vrsqrt.pop %v68
  %v73 = vrsqrt.pop %v69
  %v74 = vrsqrt.pop %v70
  %v75 = vmul.f32 %v43, %v71
  %v76 = vmul.f32 %v44, %v72
  %v77 = vmul.f32 %v45, %v73
  %v78 = vmul.f32 %v46, %v74
  %v79 = vld [vmem:[%s1] sm:$0x1]
  %v81 = vlaneseq
  %v82 = vshrl.u32 %v81, 7
  %v83 = vsub.s32 0, %v82
  %v84 = vrot.slane %v79, %v83
  %v86 = vmul.f32 %v75, %v84
  %v87 = vmul.f32 %v76, %v84
  %v88 = vmul.f32 %v77, %v84
  %v89 = vmul.f32 %v78, %v84
  %v90 = vld [vmem:[%s2] sm:$0x1]
  %v92 = vlaneseq
  %v93 = vshrl.u32 %v92, 7
  %v94 = vsub.s32 0, %v93
  %v95 = vrot.slane %v90, %v94
  %v97 = vadd.f32 %v86, %v95
  %v98 = vadd.f32 %v87, %v95
  %v99 = vadd.f32 %v88, %v95
  %v100 = vadd.f32 %v89, %v95
  %v101 = vpack.c.bf16 %v98, %v97
  %v102 = vpack.c.bf16 %v100, %v99
  %v103 = vld [vmem:[%s3] sm:$0xf]
  %v104 = vld [vmem:[%s3 + $0x4] sm:$0xf]
  %v105 = vld [vmem:[%s3 + $0x8] sm:$0xf]
  %v106 = vld [vmem:[%s3 + $0xc] sm:$0xf]
  %v107 = vld [vmem:[%s4] sm:$0x1]
  %v109 = vlaneseq
  %v110 = vshrl.u32 %v109, 7
  %v111 = vsub.s32 0, %v110
  %v112 = vrot.slane %v107, %v111
  %v118 = vunpack.c.l.b16 %v103
  %v119 = vunpack.c.l.b16 %v104
  %v120 = vunpack.c.l.b16 %v105
  %v121 = vunpack.c.l.b16 %v106
  %v122 = vpack.c.b16 %v119, %v118
  %v123 = vpack.c.b16 %v121, %v120
  %v127 = vsel %vm25, %v101, 0
  %v130 = vsel %vm25, %v102, 0
  %132 = vmatprep.subr.bf16.mxu0 0
  %133 = vmatpush1.bf16.msra.mxu0 %v122
  %134 = vmatprep.subr.bf16.mxu0 0
  %135 = vmatpush1.bf16.msra.mxu0 %v123
  %136 = vmatprep.subr.bf16.mxu0 0
  %137 = vmatpush1.bf16.msra.mxu0 0
  %138 = vmatprep.subr.bf16.mxu0 0
  %139 = vmatpush1.bf16.msra.mxu0 0
  %140 = vmatprep.subr.bf16.mxu0 0
  %141 = vmatpush1.bf16.msra.mxu0 0
  %142 = vmatprep.subr.bf16.mxu0 0
  %143 = vmatpush1.bf16.msra.mxu0 0
  %144 = vmatprep.subr.bf16.mxu0 0
  %145 = vmatpush1.bf16.msra.mxu0 0
  %146 = vmatprep.subr.bf16.mxu0 0
  %147 = vmatpush1.bf16.msra.mxu0 0
  %148 = vmatprep.subr.bf16.mxu0 0
  %149 = vmatpush1.bf16.msra.mxu0 0
  %150 = vmatprep.subr.bf16.mxu0 0
  %151 = vmatpush1.bf16.msra.mxu0 0
  %152 = vmatprep.subr.bf16.mxu0 0
  %153 = vmatpush1.bf16.msra.mxu0 0
  %154 = vmatprep.subr.bf16.mxu0 0
  %155 = vmatpush1.bf16.msra.mxu0 0
  %156 = vmatprep.subr.bf16.mxu0 0
  %157 = vmatpush1.bf16.msra.mxu0 0
  %158 = vmatprep.subr.bf16.mxu0 0
  %159 = vmatpush1.bf16.msra.mxu0 0
  %160 = vmatprep.subr.bf16.mxu0 0
  %161 = vmatpush1.bf16.msra.mxu0 0
  %162 = vmatprep.subr.bf16.mxu0 0
  %163 = vmatpush1.bf16.msra.mxu0 0
  %164 = vmatprep.mubr.bf16.mxu0 0
  %165 = vmatmul.mubr.bf16.gmra.mrb[0].mxu0 %v127
  %v166 = vpop.f32.mrb[0].mxu0
  %v167 = vadd.f32 %v112, %v166
  %v168 = vpop.f32.mrb[0].mxu0
  %v169 = vpop.f32.mrb[0].mxu0
  %v170 = vadd.f32 %v112, %v169
  %v171 = vpop.f32.mrb[0].mxu0
  %172 = vmatprep.mubr.bf16.mxu0 0
  %173 = vmatmul.mubr.bf16.gmra.mrb[0].mxu0 %v130
  %v174 = vpop.f32.mrb[0].mxu0
  %v175 = vadd.f32 %v112, %v174
  %v176 = vpop.f32.mrb[0].mxu0
  %v177 = vpop.f32.mrb[0].mxu0
  %v178 = vadd.f32 %v112, %v177
  %v179 = vpop.f32.mrb[0].mxu0
  %180 = vdwg.mxu0
  %vm181 = vcmask 523264
  %182 = vst.msk [vmem:[%s5] sm:$0xff] %vm181, %v167
  %183 = vst.msk [vmem:[%s5 + $0x8] sm:$0xff] %vm181, %v170
  %184 = vst.msk [vmem:[%s5 + $0x10] sm:$0xff] %vm181, %v175
  %185 = vst.msk [vmem:[%s5 + $0x18] sm:$0xff] %vm181, %v178
  // Predicated region
  $region22: #{_lambda_.22} parent=0 // pred_check
    _
  $region23: #{_lambda_.22} parent=0 // pred_check_branch
    %187 = sbr.rel (0) target = $region25
  $region24: #{_lambda_.22} parent=0 // pred_region
    _
  $region25: #{_lambda_.22} parent=0 // pred_fallthru
    _
  // Predicated region
  $region26: #{_lambda_.22} parent=0 // pred_check
    _
  $region27: #{_lambda_.22} parent=0 // pred_check_branch
    %189 = sbr.rel (0) target = $region29
  $region28: #{_lambda_.22} parent=0 // pred_region
    _
  $region29: #{_lambda_.22} parent=0 // pred_fallthru
    _

// kernel: _lambda_.20
$region0: #{_lambda_.20}
  #allocation0 [shape = 'u32[]', space=smem, size = 0x4, offset = 0x4, fixed_abs, tag = 'smem constant byte address 0x4 - core index']
  #allocation1 [shape = 'u32[144,128]{1,0:T(1,128)}', space=vmem, size = 0x12000, scoped, tag = 'internal scratch']
  #allocation2 [shape = 'f32[16,1]{1,0:T(8,128)}', space=vmem, size = 0x2000, scoped, tag = 'scratch operand']
  #allocation3 [shape = 'f32[16,1]{1,0:T(8,128)}', space=vmem, size = 0x2000, scoped, tag = 'scratch operand']
  #allocation4 [shape = 'f32[16,16]{1,0:T(8,128)}', space=vmem, size = 0x2000, scoped, tag = 'scratch operand']
  %s0 = inlined_call_operand.vmem [shape: bf16[4,16,16], index: 0, kind: input, shape index: {}]
  %s1 = inlined_call_operand.vmem [shape: bf16[4,16,16], index: 1, kind: input, shape index: {}]
  %s2 = inlined_call_operand.vmem [shape: bf16[4,16,16], index: 2, kind: input, shape index: {}]
  %s3 = inlined_call_operand.vmem [shape: f32[4,16,16], index: 3, kind: output, shape index: {}]
  %s4 = sld [smem:[#allocation0]]
  $region53: #{_lambda_.20} parent=0
    _
  %s6 = ssub.s32 1, %s4
  %s7 = scalar_select 0, %s6, %s4
  loop: start=0, step=1, limit=6
  $region2: #{_lambda_.20} parent=0 // loop_pre_header
    _
  $region3: #{_lambda_.20} parent=0 // loop_header
    %s9 = sphi 0, %s13
    %p10 = scmp.ge.s32.totalorder %s9, 6
    %s16 = sphi 0, %s35
    %s17 = sphi 0, %s31
    %s18 = sphi 0, %s27
    %s19 = sphi 0, %s16
    %s20 = sphi 0, %s17
    %s21 = sphi 0, %s18
    %s22 = sphi 0, %s19
    %s23 = sphi 0, %s20
    %s24 = sphi 0, %s21
    %s40 = sphi 0, %s42
    %s43 = sphi 0, %s40
    %s44 = sphi 0, %s43
    %s60 = sphi 0, %s44
    %s68 = sphi 0, %s70
    %s71 = sphi 0, %s68
    %s72 = sphi 0, %s71
    %s88 = sphi 0, %s72
    %s96 = sphi 0, %s98
    %s99 = sphi 0, %s96
    %s100 = sphi 0, %s99
    %s116 = sphi 0, %s100
    %s124 = sphi 0, %s126
    %s127 = sphi 0, %s124
    %s128 = sphi 0, %s127
    %s144 = sphi 0, %s128
  $region4: #{_lambda_.20} parent=0 // loop_header_branch
    %12 = sbr.rel (%p10) target = $region8
  $region5: #{_lambda_.20} parent=0 // loop_body
    %s14 = ssub.s32 %s9, 1
    %s15 = ssub.s32 %s9, 2
    %s25 = sadd.s32 1, %s18
    %p26 = scmp.ge.s32.totalorder %s25, 1
    %s27 = scalar_select %p26, 0, %s25
    %s28 = sadd.s32 1, %s17
    %s29 = scalar_select %p26, %s28, %s17
    %p30 = scmp.ge.s32.totalorder %s29, 1
    %s31 = scalar_select %p30, 0, %s29
    %s32 = sadd.s32 1, %s16
    %s33 = scalar_select %p30, %s32, %s16
    %p34 = scmp.ge.s32.totalorder %s33, 4
    %s35 = scalar_select %p34, 0, %s33
    %s36 = ssub.s32 %s16, %s35
    %s37 = ssub.s32 %s17, %s31
    %s38 = sor.u32 %s36, %s37
    %p39 = scmp.eq.s32.totalorder %s38, 0
    %s41 = sadd.s32 %s40, 1
    %s42 = scalar_select %p39, %s40, %s41
    %p45 = pneg %p39
    %p46 = scmp.eq.s32.totalorder %s9, 3
    %p47 = por %p45, %p46
    %p48 = scmp.ne.s32.totalorder %s40, %s43
    %p49 = scmp.eq.s32.totalorder %s9, 0
    %p50 = por %p48, %p49
    %p51 = scmp.ne.s32.totalorder %s40, %s43
    %p52 = scmp.eq.s32.totalorder %s14, 3
    %p53 = por %p51, %p52
    %p54 = scmp.ne.s32.totalorder %s43, %s44
    %p55 = scmp.eq.s32.totalorder %s14, 0
    %p56 = por %p54, %p55
    %p57 = scmp.ne.s32.totalorder %s43, %s44
    %p58 = scmp.eq.s32.totalorder %s15, 3
    %p59 = por %p57, %p58
    %p61 = scmp.ne.s32.totalorder %s44, %s60
    %p62 = scmp.eq.s32.totalorder %s15, 0
    %p63 = por %p61, %p62
    %s64 = ssub.s32 %s16, %s35
    %s65 = ssub.s32 %s18, %s27
    %s66 = sor.u32 %s64, %s65
    %p67 = scmp.eq.s32.totalorder %s66, 0
    %s69 = sadd.s32 %s68, 1
    %s70 = scalar_select %p67, %s68, %s69
    %p73 = pneg %p67
    %p74 = scmp.eq.s32.totalorder %s9, 3
    %p75 = por %p73, %p74
    %p76 = scmp.ne.s32.totalorder %s68, %s71
    %p77 = scmp.eq.s32.totalorder %s9, 0
    %p78 = por %p76, %p77
    %p79 = scmp.ne.s32.totalorder %s68, %s71
    %p80 = scmp.eq.s32.totalorder %s14, 3
    %p81 = por %p79, %p80
    %p82 = scmp.ne.s32.totalorder %s71, %s72
    %p83 = scmp.eq.s32.totalorder %s14, 0
    %p84 = por %p82, %p83
    %p85 = scmp.ne.s32.totalorder %s71, %s72
    %p86 = scmp.eq.s32.totalorder %s15, 3
    %p87 = por %p85, %p86
    %p89 = scmp.ne.s32.totalorder %s72, %s88
    %p90 = scmp.eq.s32.totalorder %s15, 0
    %p91 = por %p89, %p90
    %s92 = ssub.s32 %s16, %s35
    %s93 = ssub.s32 %s18, %s27
    %s94 = sor.u32 %s92, %s93
    %p95 = scmp.eq.s32.totalorder %s94, 0
    %s97 = sadd.s32 %s96, 1
    %s98 = scalar_select %p95, %s96, %s97
    %p101 = pneg %p95
    %p102 = scmp.eq.s32.totalorder %s9, 3
    %p103 = por %p101, %p102
    %p104 = scmp.ne.s32.totalorder %s96, %s99
    %p105 = scmp.eq.s32.totalorder %s9, 0
    %p106 = por %p104, %p105
    %p107 = scmp.ne.s32.totalorder %s96, %s99
    %p108 = scmp.eq.s32.totalorder %s14, 3
    %p109 = por %p107, %p108
    %p110 = scmp.ne.s32.totalorder %s99, %s100
    %p111 = scmp.eq.s32.totalorder %s14, 0
    %p112 = por %p110, %p111
    %p113 = scmp.ne.s32.totalorder %s99, %s100
    %p114 = scmp.eq.s32.totalorder %s15, 3
    %p115 = por %p113, %p114
    %p117 = scmp.ne.s32.totalorder %s100, %s116
    %p118 = scmp.eq.s32.totalorder %s15, 0
    %p119 = por %p117, %p118
    %s120 = ssub.s32 %s16, %s35
    %s121 = ssub.s32 %s17, %s31
    %s122 = sor.u32 %s120, %s121
    %p123 = scmp.eq.s32.totalorder %s122, 0
    %s125 = sadd.s32 %s124, 1
    %s126 = scalar_select %p123, %s124, %s125
    %p129 = pneg %p123
    %p130 = scmp.eq.s32.totalorder %s9, 3
    %p131 = por %p129, %p130
    %p132 = scmp.ne.s32.totalorder %s124, %s127
    %p133 = scmp.eq.s32.totalorder %s9, 0
    %p134 = por %p132, %p133
    %p135 = scmp.ne.s32.totalorder %s124, %s127
    %p136 = scmp.eq.s32.totalorder %s14, 3
    %p137 = por %p135, %p136
    %p138 = scmp.ne.s32.totalorder %s127, %s128
    %p139 = scmp.eq.s32.totalorder %s14, 0
    %p140 = por %p138, %p139
    %p141 = scmp.ne.s32.totalorder %s127, %s128
    %p142 = scmp.eq.s32.totalorder %s15, 3
    %p143 = por %p141, %p142
    %p145 = scmp.ne.s32.totalorder %s128, %s144
    %p146 = scmp.eq.s32.totalorder %s15, 0
    %p147 = por %p145, %p146
    %p148 = scmp.le.s32.totalorder 1, %s9
    %p149 = scmp.lt.s32.totalorder %s9, 5
    %p150 = pnand %p148, %p149
    %p151 = pneg %p150
    // Predicated region
    $region9: #{_lambda_.20} parent=5 // pred_check
      _
    $region10: #{_lambda_.20} parent=5 // pred_check_branch
      %153 = sbr.rel (%p150) target = $region12
    $region11: #{_lambda_.20} parent=5 // pred_region
      %s154 = ssub.s32 %s9, 1
    $region12: #{_lambda_.20} parent=5 // pred_fallthru
      _
    %p155 = scmp.lt.s32.totalorder %s9, 4
    // Predicated region
    $region13: #{_lambda_.20} parent=5 // pred_check
      %p156 = pneg %p155
    $region14: #{_lambda_.20} parent=5 // pred_check_branch
      %158 = sbr.rel (%p156) target = $region16
    $region15: #{_lambda_.20} parent=5 // pred_region
      // Predicated region
      $region17: #{_lambda_.20} parent=15 // pred_check
        %p159 = pneg %p50
      $region18: #{_lambda_.20} parent=15 // pred_check_branch
        %161 = sbr.rel (%p159) target = $region20
      $region19: #{_lambda_.20} parent=15 // pred_region
        %s162 = smul.u32 2, %s17
        %p163 = scmp.lt.s32.totalorder %s16, 3
        %s164 = scalar_select %p163, %s16, 3
        %p165 = scmp.lt.s32.totalorder %s162, 1
        %s166 = scalar_select %p165, %s162, 1
        %s167 = smul.addr %s164, 2
        %s168 = sadd.s32 %s166, %s167
        %s169 = smul.addr %s168, 4
        %s170 = scalar_lea.vmem %s0, %s169
        %s171 = smul.u32 2, %s17
      $region20: #{_lambda_.20} parent=15 // pred_fallthru
        _
      // Predicated region
      $region21: #{_lambda_.20} parent=15 // pred_check
        %p172 = pneg %p78
      $region22: #{_lambda_.20} parent=15 // pred_check_branch
        %174 = sbr.rel (%p172) target = $region24
      $region23: #{_lambda_.20} parent=15 // pred_region
        %s175 = smul.u32 2, %s18
        %p176 = scmp.lt.s32.totalorder %s16, 3
        %s177 = scalar_select %p176, %s16, 3
        %p178 = scmp.lt.s32.totalorder %s175, 1
        %s179 = scalar_select %p178, %s175, 1
        %s180 = smul.addr %s177, 2
        %s181 = sadd.s32 %s179, %s180
        %s182 = smul.addr %s181, 4
        %s183 = scalar_lea.vmem %s1, %s182
        %s184 = smul.u32 2, %s18
      $region24: #{_lambda_.20} parent=15 // pred_fallthru
        _
      // Predicated region
      $region25: #{_lambda_.20} parent=15 // pred_check
        %p185 = pneg %p106
      $region26: #{_lambda_.20} parent=15 // pred_check_branch
        %187 = sbr.rel (%p185) target = $region28
      $region27: #{_lambda_.20} parent=15 // pred_region
        %s188 = smul.u32 2, %s18
        %p189 = scmp.lt.s32.totalorder %s16, 3
        %s190 = scalar_select %p189, %s16, 3
        %p191 = scmp.lt.s32.totalorder %s188, 1
        %s192 = scalar_select %p191, %s188, 1
        %s193 = smul.addr %s190, 2
        %s194 = sadd.s32 %s192, %s193
        %s195 = smul.addr %s194, 4
        %s196 = scalar_lea.vmem %s2, %s195
        %s197 = smul.u32 2, %s18
      $region28: #{_lambda_.20} parent=15 // pred_fallthru
        _
    $region16: #{_lambda_.20} parent=5 // pred_fallthru
      _
    %p198 = scmp.le.s32.totalorder 1, %s9
    %p199 = scmp.lt.s32.totalorder %s9, 5
    %p200 = pnand %p198, %p199
    %p201 = pneg %p200
    // Predicated region
    $region29: #{_lambda_.20} parent=5 // pred_check
      _
    $region30: #{_lambda_.20} parent=5 // pred_check_branch
      %203 = sbr.rel (%p200) target = $region32
    $region31: #{_lambda_.20} parent=5 // pred_region
      %s204 = ssub.s32 %s9, 1
      %s205 = smul.u32 2, %s20
      %p206 = scmp.lt.s32.totalorder %s19, 3
      %s207 = scalar_select %p206, %s19, 3
      %p208 = scmp.lt.s32.totalorder %s205, 1
      %s209 = scalar_select %p208, %s205, 1
      %s210 = smul.addr %s207, 2
      %s211 = sadd.s32 %s209, %s210
      %s212 = smul.addr %s211, 4
      %s213 = scalar_lea.vmem %s0, %s212
      %p214 = pneg %p56
      %p215 = pneg %p53
      %s216 = smul.u32 2, %s21
      %p217 = scmp.lt.s32.totalorder %s19, 3
      %s218 = scalar_select %p217, %s19, 3
      %p219 = scmp.lt.s32.totalorder %s216, 1
      %s220 = scalar_select %p219, %s216, 1
      %s221 = smul.addr %s218, 2
      %s222 = sadd.s32 %s220, %s221
      %s223 = smul.addr %s222, 4
      %s224 = scalar_lea.vmem %s1, %s223
      %p225 = pneg %p84
      %p226 = pneg %p81
      %s227 = smul.u32 2, %s21
      %p228 = scmp.lt.s32.totalorder %s19, 3
      %s229 = scalar_select %p228, %s19, 3
      %p230 = scmp.lt.s32.totalorder %s227, 1
      %s231 = scalar_select %p230, %s227, 1
      %s232 = smul.addr %s229, 2
      %s233 = sadd.s32 %s231, %s232
      %s234 = smul.addr %s233, 4
      %s235 = scalar_lea.vmem %s2, %s234
      %p236 = pneg %p112
      %p237 = pneg %p109
      %p238 = pneg %p140
      %p239 = pneg %p137
      %s240 = smul.u32 2, %s20
      %p241 = scmp.lt.s32.totalorder %s19, 3
      %s242 = scalar_select %p241, %s19, 3
      %p243 = scmp.lt.s32.totalorder %s240, 1
      %s244 = scalar_select %p243, %s240, 1
      %s245 = smul.addr %s242, 2
      %s246 = sadd.s32 %s244, %s245
      %s247 = smul.addr %s246, 8
      %s248 = scalar_lea.vmem %s3, %s247
      %s249 = smul.u32 2, %s20
      %p250 = scmp.lt.s32.totalorder %s19, 3
      %s251 = scalar_select %p250, %s19, 3
      %p252 = scmp.lt.s32.totalorder %s249, 1
      %s253 = scalar_select %p252, %s249, 1
      %s254 = smul.addr %s251, 2
      %s255 = sadd.s32 %s253, %s254
      %s256 = smul.addr %s255, 4
      %s257 = scalar_lea.vmem %s0, %s256
      %s258 = smul.u32 2, %s20
      %s259 = smul.u32 2, %s21
      %p260 = scmp.lt.s32.totalorder %s19, 3
      %s261 = scalar_select %p260, %s19, 3
      %p262 = scmp.lt.s32.totalorder %s259, 1
      %s263 = scalar_select %p262, %s259, 1
      %s264 = smul.addr %s261, 2
      %s265 = sadd.s32 %s263, %s264
      %s266 = smul.addr %s265, 4
      %s267 = scalar_lea.vmem %s1, %s266
      %s268 = smul.u32 2, %s21
      %s269 = smul.u32 2, %s21
      %p270 = scmp.lt.s32.totalorder %s19, 3
      %s271 = scalar_select %p270, %s19, 3
      %p272 = scmp.lt.s32.totalorder %s269, 1
      %s273 = scalar_select %p272, %s269, 1
      %s274 = smul.addr %s271, 2
      %s275 = sadd.s32 %s273, %s274
      %s276 = smul.addr %s275, 4
      %s277 = scalar_lea.vmem %s2, %s276
      %s278 = smul.u32 2, %s21
      %s279 = smul.u32 2, %s20
      %p280 = scmp.lt.s32.totalorder %s19, 3
      %s281 = scalar_select %p280, %s19, 3
      %p282 = scmp.lt.s32.totalorder %s279, 1
      %s283 = scalar_select %p282, %s279, 1
      %s284 = smul.addr %s281, 2
      %s285 = sadd.s32 %s283, %s284
      %s286 = smul.addr %s285, 8
      %s287 = scalar_lea.vmem %s3, %s286
      %s288 = smul.u32 2, %s20
      %p290 = scmp.eq.s32.totalorder %s21, 0
      // Predicated region
      $region33: #{_lambda_.20} parent=31 // pred_check
        %p291 = pneg %p290
      $region34: #{_lambda_.20} parent=31 // pred_check_branch
        %293 = sbr.rel (%p291) target = $region36
      $region35: #{_lambda_.20} parent=31 // pred_region
        %vm294 = vcmask 7168
        %295 = vst.msk [vmem:[#allocation2] sm:$0xff] %vm294, -1e+30
        %296 = vst.msk [vmem:[#allocation2 + $0x8] sm:$0xff] %vm294, -1e+30
        %297 = vst.msk [vmem:[#allocation3] sm:$0xff] %vm294, 0.0
        %298 = vst.msk [vmem:[#allocation3 + $0x8] sm:$0xff] %vm294, 0.0
        %vm299 = vcmask 130048
        %300 = vst.msk [vmem:[#allocation4] sm:$0xff] %vm299, 0.0
        %301 = vst.msk [vmem:[#allocation4 + $0x8] sm:$0xff] %vm299, 0.0
      $region36: #{_lambda_.20} parent=31 // pred_fallthru
        _
      %v302 = vld [vmem:[%s257] sm:$0xf]
      %v303 = vld [vmem:[%s257 + $0x4] sm:$0xf]
      %v304 = vld [vmem:[%s267] sm:$0xf]
      %v305 = vld [vmem:[%s267 + $0x4] sm:$0xf]
      %v306 = vld [vmem:[%s277] sm:$0xf]
      %v307 = vld [vmem:[%s277 + $0x4] sm:$0xf]
      %v310 = vunpack.c.l.b16 %v302
      %v311 = vunpack.c.l.b16 %v303
      %v312 = vpack.c.b16 %v311, %v310
      %v315 = vunpack.c.l.b16 %v304
      %v316 = vunpack.c.l.b16 %v305
      %v317 = vpack.c.b16 %v316, %v315
      %vm318 = vcmask 130048
      %v320 = vsel %vm318, %v312, 0
      %v323 = vsel %vm318, %v317, 0
      %325 = vmatprep.subr.bf16.mxu0 0
      %326 = vmatpush1.bf16.xpose.msra.mxu0 %v323
      %327 = vmatprep.subr.bf16.mxu0 0
      %328 = vmatpush1.bf16.xpose.msra.mxu0 0
      %329 = vmatprep.subr.bf16.mxu0 0
      %330 = vmatpush1.bf16.xpose.msra.mxu0 0
      %331 = vmatprep.subr.bf16.mxu0 0
      %332 = vmatpush1.bf16.xpose.msra.mxu0 0
      %333 = vmatprep.subr.bf16.mxu0 0
      %334 = vmatpush1.bf16.xpose.msra.mxu0 0
      %335 = vmatprep.subr.bf16.mxu0 0
      %336 = vmatpush1.bf16.xpose.msra.mxu0 0
      %337 = vmatprep.subr.bf16.mxu0 0
      %338 = vmatpush1.bf16.xpose.msra.mxu0 0
      %339 = vmatprep.subr.bf16.mxu0 0
      %340 = vmatpush1.bf16.xpose.msra.mxu0 0
      %341 = vmatprep.subr.bf16.mxu0 0
      %342 = vmatpush1.bf16.xpose.msra.mxu0 0
      %343 = vmatprep.subr.bf16.mxu0 0
      %344 = vmatpush1.bf16.xpose.msra.mxu0 0
      %345 = vmatprep.subr.bf16.mxu0 0
      %346 = vmatpush1.bf16.xpose.msra.mxu0 0
      %347 = vmatprep.subr.bf16.mxu0 0
      %348 = vmatpush1.bf16.xpose.msra.mxu0 0
      %349 = vmatprep.subr.bf16.mxu0 0
      %350 = vmatpush1.bf16.xpose.msra.mxu0 0
      %351 = vmatprep.subr.bf16.mxu0 0
      %352 = vmatpush1.bf16.xpose.msra.mxu0 0
      %353 = vmatprep.subr.bf16.mxu0 0
      %354 = vmatpush1.bf16.xpose.msra.mxu0 0
      %355 = vmatprep.subr.bf16.mxu0 0
      %356 = vmatpush1.bf16.xpose.msra.mxu0 0
      %357 = vmatprep.mubr.bf16.mxu0 0
      %358 = vmatmul.mubr.bf16.gmra.mrb[0].mxu0 %v320
      %v359 = vpop.f32.mrb[0].mxu0
      %v360 = vadd.f32 0.0, %v359
      %v361 = vpop.f32.mrb[0].mxu0
      %v362 = vpop.f32.mrb[0].mxu0
      %v363 = vadd.f32 0.0, %v362
      %v364 = vpop.f32.mrb[0].mxu0
      %365 = vdwg.mxu0
      %v366 = vmul.f32 %v360, 0.25
      %v367 = vmul.f32 %v363, 0.25
      %v368 = vld [vmem:[#allocation2] sm:$0xff]
      %v369 = vld [vmem:[#allocation2 + $0x8] sm:$0xff]
      %v370 = vsel %vm318, %v366, -inf
      %371 = vmax.xlane.f32.xlu0 %v370
      %v372 = vpop.xlane.xlu0 %371
      %v373 = vsel %vm318, %v367, -inf
      %374 = vmax.xlane.f32.xlu0 %v373
      %v375 = vpop.xlane.xlu0 %374
      %v376 = vmax.f32 %v368, %v372
      %v377 = vmax.f32 %v369, %v375
      %v378 = vsub.f32 %v368, %v376
      %v379 = vsub.f32 %v369, %v377
      %v380 = vmul.f32 %v378, 1.442695
      %v381 = vpow.pop %v380
      %v382 = vmul.f32 %v379, 1.442695
      %v383 = vpow.pop %v382
      %385 = vset.pattern.permute.xlu0 0
      %386 = vperm.xlu0 %385, %v376
      %v387 = vpop.permute.xlu0 %386
      %390 = vset.pattern.permute.xlu0 0
      %391 = vperm.xlu0 %390, %v377
      %v392 = vpop.permute.xlu0 %391
      %v394 = vsub.f32 %v366, %v387
      %v395 = vsub.f32 %v367, %v392
      %v396 = vmul.f32 %v394, 1.442695
      %v397 = vpow.pop %v396
      %v398 = vmul.f32 %v395, 1.442695
      %v399 = vpow.pop %v398
      %v400 = vld [vmem:[#allocation3] sm:$0xff]
      %v401 = vld [vmem:[#allocation3 + $0x8] sm:$0xff]
      %v402 = vmul.f32 %v381, %v400
      %v403 = vmul.f32 %v383, %v401
      %v404 = vsel %vm318, %v397, 0.0
      %405 = vadd.xlane.f32.xlu0 %v404
      %v406 = vpop.xlane.xlu0 %405
      %v407 = vsel %vm318, %v399, 0.0
      %408 = vadd.xlane.f32.xlu0 %v407
      %v409 = vpop.xlane.xlu0 %408
      %v410 = vadd.f32 %v402, %v406
      %v411 = vadd.f32 %v403, %v409
      %vm412 = vcmask 7168
      %413 = vst.msk [vmem:[#allocation3] sm:$0xff] %vm412, %v410
      %414 = vst.msk [vmem:[#allocation3 + $0x8] sm:$0xff] %vm412, %v411
      %v415 = vld [vmem:[#allocation4] sm:$0xff]
      %v416 = vld [vmem:[#allocation4 + $0x8] sm:$0xff]
      %418 = vset.pattern.permute.xlu0 0
      %419 = vperm.xlu0 %418, %v381
      %v420 = vpop.permute.xlu0 %419
      %423 = vset.pattern.permute.xlu0 0
      %424 = vperm.xlu0 %423, %v383
      %v425 = vpop.permute.xlu0 %424
      %v427 = vmul.f32 %v420, %v415
      %v428 = vmul.f32 %v425, %v416
      %v429 = vpack.c.bf16 %v399, %v397
      %v432 = vunpack.c.l.b16 %v306
      %v433 = vunpack.c.l.b16 %v307
      %v434 = vpack.c.b16 %v433, %v432
      %v437 = vsel %vm318, %v429, 0
      %439 = vmatprep.subr.bf16.mxu0 0
      %440 = vmatpush1.bf16.msra.mxu0 %v434
      %441 = vmatprep.subr.bf16.mxu0 0
      %442 = vmatpush1.bf16.msra.mxu0 0
      %443 = vmatprep.subr.bf16.mxu0 0
      %444 = vmatpush1.bf16.msra.mxu0 0
      %445 = vmatprep.subr.bf16.mxu0 0
      %446 = vmatpush1.bf16.msra.mxu0 0
      %447 = vmatprep.subr.bf16.mxu0 0
      %448 = vmatpush1.bf16.msra.mxu0 0
      %449 = vmatprep.subr.bf16.mxu0 0
      %450 = vmatpush1.bf16.msra.mxu0 0
      %451 = vmatprep.subr.bf16.mxu0 0
      %452 = vmatpush1.bf16.msra.mxu0 0
      %453 = vmatprep.subr.bf16.mxu0 0
      %454 = vmatpush1.bf16.msra.mxu0 0
      %455 = vmatprep.subr.bf16.mxu0 0
      %456 = vmatpush1.bf16.msra.mxu0 0
      %457 = vmatprep.subr.bf16.mxu0 0
      %458 = vmatpush1.bf16.msra.mxu0 0
      %459 = vmatprep.subr.bf16.mxu0 0
      %460 = vmatpush1.bf16.msra.mxu0 0
      %461 = vmatprep.subr.bf16.mxu0 0
      %462 = vmatpush1.bf16.msra.mxu0 0
      %463 = vmatprep.subr.bf16.mxu0 0
      %464 = vmatpush1.bf16.msra.mxu0 0
      %465 = vmatprep.subr.bf16.mxu0 0
      %466 = vmatpush1.bf16.msra.mxu0 0
      %467 = vmatprep.subr.bf16.mxu0 0
      %468 = vmatpush1.bf16.msra.mxu0 0
      %469 = vmatprep.subr.bf16.mxu0 0
      %470 = vmatpush1.bf16.msra.mxu0 0
      %471 = vmatprep.mubr.bf16.mxu0 0
      %472 = vmatmul.mubr.bf16.gmra.mrb[0].mxu0 %v437
      %v473 = vpop.f32.mrb[0].mxu0
      %v474 = vadd.f32 0.0, %v473
      %v475 = vpop.f32.mrb[0].mxu0
      %v476 = vpop.f32.mrb[0].mxu0
      %v477 = vadd.f32 0.0, %v476
      %v478 = vpop.f32.mrb[0].mxu0
      %479 = vdwg.mxu0
      %v480 = vadd.f32 %v427, %v474
      %v481 = vadd.f32 %v428, %v477
      %482 = vst.msk [vmem:[#allocation4] sm:$0xff] %vm318, %v480
      %483 = vst.msk [vmem:[#allocation4 + $0x8] sm:$0xff] %vm318, %v481
      %484 = vst.msk [vmem:[#allocation2] sm:$0xff] %vm412, %v376
      %485 = vst.msk [vmem:[#allocation2 + $0x8] sm:$0xff] %vm412, %v377
      // Predicated region
      $region37: #{_lambda_.20} parent=31 // pred_check
        %p486 = pneg %p290
      $region38: #{_lambda_.20} parent=31 // pred_check_branch
        %488 = sbr.rel (%p486) target = $region40
      $region39: #{_lambda_.20} parent=31 // pred_region
        %v489 = vld [vmem:[#allocation4] sm:$0xff]
        %v490 = vld [vmem:[#allocation4 + $0x8] sm:$0xff]
        %v491 = vld [vmem:[#allocation3] sm:$0xff]
        %v492 = vld [vmem:[#allocation3 + $0x8] sm:$0xff]
        %v493 = vrcp.pop %v491
        %v494 = vrcp.pop %v492
        %496 = vset.pattern.permute.xlu0 0
        %497 = vperm.xlu0 %496, %v493
        %v498 = vpop.permute.xlu0 %497
        %501 = vset.pattern.permute.xlu0 0
        %502 = vperm.xlu0 %501, %v494
        %v503 = vpop.permute.xlu0 %502
        %v505 = vmul.f32 %v489, %v498
        %v506 = vmul.f32 %v490, %v503
        %507 = vst.msk [vmem:[%s287] sm:$0xff] %vm318, %v505
        %508 = vst.msk [vmem:[%s287 + $0x8] sm:$0xff] %vm318, %v506
      $region40: #{_lambda_.20} parent=31 // pred_fallthru
        _
      %s509 = smul.u32 2, %s20
      %p510 = scmp.lt.s32.totalorder %s19, 3
      %s511 = scalar_select %p510, %s19, 3
      %p512 = scmp.lt.s32.totalorder %s509, 1
      %s513 = scalar_select %p512, %s509, 1
      %s514 = smul.addr %s511, 2
      %s515 = sadd.s32 %s513, %s514
      %s516 = smul.addr %s515, 8
      %s517 = scalar_lea.vmem %s3, %s516
      // Predicated region
      $region41: #{_lambda_.20} parent=31 // pred_check
        %p518 = pneg %p137
      $region42: #{_lambda_.20} parent=31 // pred_check_branch
        %520 = sbr.rel (%p518) target = $region44
      $region43: #{_lambda_.20} parent=31 // pred_region
        %s521 = smul.u32 2, %s20
      $region44: #{_lambda_.20} parent=31 // pred_fallthru
        _
    $region32: #{_lambda_.20} parent=5 // pred_fallthru
      _
    %p522 = scmp.le.s32.totalorder 2, %s9
    // Predicated region
    $region45: #{_lambda_.20} parent=5 // pred_check
      %p523 = pneg %p522
    $region46: #{_lambda_.20} parent=5 // pred_check_branch
      %525 = sbr.rel (%p523) target = $region48
    $region47: #{_lambda_.20} parent=5 // pred_region
      %s526 = ssub.s32 %s9, 2
      // Predicated region
      $region49: #{_lambda_.20} parent=47 // pred_check
        %p527 = pneg %p143
      $region50: #{_lambda_.20} parent=47 // pred_check_branch
        %529 = sbr.rel (%p527) target = $region52
      $region51: #{_lambda_.20} parent=47 // pred_region
        %s530 = smul.u32 2, %s23
        %p531 = scmp.lt.s32.totalorder %s22, 3
        %s532 = scalar_select %p531, %s22, 3
        %p533 = scmp.lt.s32.totalorder %s530, 1
        %s534 = scalar_select %p533, %s530, 1
        %s535 = smul.addr %s532, 2
        %s536 = sadd.s32 %s534, %s535
        %s537 = smul.addr %s536, 8
        %s538 = scalar_lea.vmem %s3, %s537
      $region52: #{_lambda_.20} parent=47 // pred_fallthru
        _
    $region48: #{_lambda_.20} parent=5 // pred_fallthru
      _
  $region6: #{_lambda_.20} parent=0 // loop_footer
    %s13 = sadd.s32 1, %s9
  $region7: #{_lambda_.20} parent=0 // loop_footer_branch
    %8 = sbr.rel target = $region3
  $region8: #{_lambda_.20} parent=0 // loop_exit
    _

// kernel: _lambda_.23
$region0: #{_lambda_.23}
  #allocation0 [shape = 'u32[]', space=smem, size = 0x4, offset = 0x4, fixed_abs, tag = 'smem constant byte address 0x4 - core index']
  #allocation1 [shape = 'u32[144,128]{1,0:T(1,128)}', space=vmem, size = 0x12000, scoped, tag = 'internal scratch']
  #allocation2 [shape = 'f32[32,32]{1,0:T(8,128)}', space=vmem, size = 0x4000, scoped, tag = 'scratch operand']
  %s0 = inlined_call_operand.vmem [shape: bf16[32,64], index: 0, kind: input, shape index: {}]
  %s1 = inlined_call_operand.vmem [shape: bf16[64,32], index: 1, kind: input, shape index: {}]
  %s2 = inlined_call_operand.vmem [shape: f32[1,32], index: 2, kind: input, shape index: {}]
  %s3 = inlined_call_operand.vmem [shape: f32[32,32], index: 3, kind: input, shape index: {}]
  %s4 = inlined_call_operand.vmem [shape: f32[32,32], index: 4, kind: output, shape index: {}]
  %s5 = sld [smem:[#allocation0]]
  $region34: #{_lambda_.23} parent=0
    _
  %s7 = ssub.s32 1, %s5
  %s8 = scalar_select 0, %s7, %s5
  // Predicated region
  $region2: #{_lambda_.23} parent=0 // pred_check
    _
  $region3: #{_lambda_.23} parent=0 // pred_check_branch
    %10 = sbr.rel (0) target = $region5
  $region4: #{_lambda_.23} parent=0 // pred_region
    _
  $region5: #{_lambda_.23} parent=0 // pred_fallthru
    _
  // Predicated region
  $region6: #{_lambda_.23} parent=0 // pred_check
    _
  $region7: #{_lambda_.23} parent=0 // pred_check_branch
    %12 = sbr.rel (0) target = $region9
  $region8: #{_lambda_.23} parent=0 // pred_region
    _
  $region9: #{_lambda_.23} parent=0 // pred_fallthru
    _
  // Predicated region
  $region10: #{_lambda_.23} parent=0 // pred_check
    _
  $region11: #{_lambda_.23} parent=0 // pred_check_branch
    %14 = sbr.rel (0) target = $region13
  $region12: #{_lambda_.23} parent=0 // pred_region
    _
  $region13: #{_lambda_.23} parent=0 // pred_fallthru
    _
  // Predicated region
  $region14: #{_lambda_.23} parent=0 // pred_check
    _
  $region15: #{_lambda_.23} parent=0 // pred_check_branch
    %16 = sbr.rel (0) target = $region17
  $region16: #{_lambda_.23} parent=0 // pred_region
    _
  $region17: #{_lambda_.23} parent=0 // pred_fallthru
    _
  %p18 = scmp.eq.s32.totalorder 0, 0
  // Predicated region
  $region18: #{_lambda_.23} parent=0 // pred_check
    %p19 = pneg %p18
  $region19: #{_lambda_.23} parent=0 // pred_check_branch
    %21 = sbr.rel (%p19) target = $region21
  $region20: #{_lambda_.23} parent=0 // pred_region
    %vm22 = vcmask 261120
    %23 = vst.msk [vmem:[#allocation2] sm:$0xff] %vm22, 0.0
    %24 = vst.msk [vmem:[#allocation2 + $0x8] sm:$0xff] %vm22, 0.0
    %25 = vst.msk [vmem:[#allocation2 + $0x10] sm:$0xff] %vm22, 0.0
    %26 = vst.msk [vmem:[#allocation2 + $0x18] sm:$0xff] %vm22, 0.0
  $region21: #{_lambda_.23} parent=0 // pred_fallthru
    _
  %v27 = vld [vmem:[#allocation2] sm:$0xff]
  %v28 = vld [vmem:[#allocation2 + $0x8] sm:$0xff]
  %v29 = vld [vmem:[#allocation2 + $0x10] sm:$0xff]
  %v30 = vld [vmem:[#allocation2 + $0x18] sm:$0xff]
  %v31 = vld [vmem:[%s0] sm:$0xf]
  %v32 = vld [vmem:[%s0 + $0x4] sm:$0xf]
  %v33 = vld [vmem:[%s0 + $0x8] sm:$0xf]
  %v34 = vld [vmem:[%s0 + $0xc] sm:$0xf]
  %v35 = vld [vmem:[%s1] sm:$0xf]
  %v36 = vld [vmem:[%s1 + $0x4] sm:$0xf]
  %v37 = vld [vmem:[%s1 + $0x8] sm:$0xf]
  %v38 = vld [vmem:[%s1 + $0xc] sm:$0xf]
  %v39 = vld [vmem:[%s1 + $0x10] sm:$0xf]
  %v40 = vld [vmem:[%s1 + $0x14] sm:$0xf]
  %v41 = vld [vmem:[%s1 + $0x18] sm:$0xf]
  %v42 = vld [vmem:[%s1 + $0x1c] sm:$0xf]
  %v47 = vunpack.c.l.b16 %v31
  %v48 = vunpack.c.l.b16 %v32
  %v49 = vunpack.c.l.b16 %v33
  %v50 = vunpack.c.l.b16 %v34
  %v51 = vpack.c.b16 %v48, %v47
  %v52 = vpack.c.b16 %v50, %v49
  %v61 = vunpack.c.l.b16 %v35
  %v62 = vunpack.c.l.b16 %v36
  %v63 = vunpack.c.l.b16 %v37
  %v64 = vunpack.c.l.b16 %v38
  %v65 = vunpack.c.l.b16 %v39
  %v66 = vunpack.c.l.b16 %v40
  %v67 = vunpack.c.l.b16 %v41
  %v68 = vunpack.c.l.b16 %v42
  %v69 = vpack.c.b16 %v62, %v61
  %v70 = vpack.c.b16 %v64, %v63
  %v71 = vpack.c.b16 %v66, %v65
  %v72 = vpack.c.b16 %v68, %v67
  %vm77 = vcmask 523264
  %v79 = vsel %vm77, %v51, 0
  %v82 = vsel %vm77, %v52, 0
  %84 = vmatprep.subr.bf16.mxu0 0
  %85 = vmatpush1.bf16.msra.mxu0 %v69
  %86 = vmatprep.subr.bf16.mxu0 0
  %87 = vmatpush1.bf16.msra.mxu0 %v70
  %88 = vmatprep.subr.bf16.mxu0 0
  %89 = vmatpush1.bf16.msra.mxu0 %v71
  %90 = vmatprep.subr.bf16.mxu0 0
  %91 = vmatpush1.bf16.msra.mxu0 %v72
  %92 = vmatprep.subr.bf16.mxu0 0
  %93 = vmatpush1.bf16.msra.mxu0 0
  %94 = vmatprep.subr.bf16.mxu0 0
  %95 = vmatpush1.bf16.msra.mxu0 0
  %96 = vmatprep.subr.bf16.mxu0 0
  %97 = vmatpush1.bf16.msra.mxu0 0
  %98 = vmatprep.subr.bf16.mxu0 0
  %99 = vmatpush1.bf16.msra.mxu0 0
  %100 = vmatprep.subr.bf16.mxu0 0
  %101 = vmatpush1.bf16.msra.mxu0 0
  %102 = vmatprep.subr.bf16.mxu0 0
  %103 = vmatpush1.bf16.msra.mxu0 0
  %104 = vmatprep.subr.bf16.mxu0 0
  %105 = vmatpush1.bf16.msra.mxu0 0
  %106 = vmatprep.subr.bf16.mxu0 0
  %107 = vmatpush1.bf16.msra.mxu0 0
  %108 = vmatprep.subr.bf16.mxu0 0
  %109 = vmatpush1.bf16.msra.mxu0 0
  %110 = vmatprep.subr.bf16.mxu0 0
  %111 = vmatpush1.bf16.msra.mxu0 0
  %112 = vmatprep.subr.bf16.mxu0 0
  %113 = vmatpush1.bf16.msra.mxu0 0
  %114 = vmatprep.subr.bf16.mxu0 0
  %115 = vmatpush1.bf16.msra.mxu0 0
  %116 = vmatprep.mubr.bf16.mxu0 0
  %117 = vmatmul.mubr.bf16.gmra.mrb[0].mxu0 %v79
  %v118 = vpop.f32.mrb[0].mxu0
  %v119 = vadd.f32 0.0, %v118
  %v120 = vpop.f32.mrb[0].mxu0
  %v121 = vpop.f32.mrb[0].mxu0
  %v122 = vadd.f32 0.0, %v121
  %v123 = vpop.f32.mrb[0].mxu0
  %124 = vmatprep.mubr.bf16.mxu0 0
  %125 = vmatmul.mubr.bf16.gmra.mrb[0].mxu0 %v82
  %v126 = vpop.f32.mrb[0].mxu0
  %v127 = vadd.f32 0.0, %v126
  %v128 = vpop.f32.mrb[0].mxu0
  %v129 = vpop.f32.mrb[0].mxu0
  %v130 = vadd.f32 0.0, %v129
  %v131 = vpop.f32.mrb[0].mxu0
  %132 = vdwg.mxu0
  %v133 = vadd.f32 %v27, %v119
  %v134 = vadd.f32 %v28, %v122
  %v135 = vadd.f32 %v29, %v127
  %v136 = vadd.f32 %v30, %v130
  %vm137 = vcmask 261120
  %138 = vst.msk [vmem:[#allocation2] sm:$0xff] %vm137, %v133
  %139 = vst.msk [vmem:[#allocation2 + $0x8] sm:$0xff] %vm137, %v134
  %140 = vst.msk [vmem:[#allocation2 + $0x10] sm:$0xff] %vm137, %v135
  %141 = vst.msk [vmem:[#allocation2 + $0x18] sm:$0xff] %vm137, %v136
  // Predicated region
  $region22: #{_lambda_.23} parent=0 // pred_check
    %p142 = pneg %p18
  $region23: #{_lambda_.23} parent=0 // pred_check_branch
    %144 = sbr.rel (%p142) target = $region25
  $region24: #{_lambda_.23} parent=0 // pred_region
    %v145 = vld [vmem:[#allocation2] sm:$0xff]
    %v146 = vld [vmem:[#allocation2 + $0x8] sm:$0xff]
    %v147 = vld [vmem:[#allocation2 + $0x10] sm:$0xff]
    %v148 = vld [vmem:[#allocation2 + $0x18] sm:$0xff]
    %v149 = vld [vmem:[%s2] sm:$0x1]
    %v151 = vlaneseq
    %v152 = vshrl.u32 %v151, 7
    %v153 = vsub.s32 0, %v152
    %v154 = vrot.slane %v149, %v153
    %v156 = vadd.f32 %v145, %v154
    %v157 = vadd.f32 %v146, %v154
    %v158 = vadd.f32 %v147, %v154
    %v159 = vadd.f32 %v148, %v154
    %v160 = vld [vmem:[%s3] sm:$0xff]
    %v161 = vld [vmem:[%s3 + $0x8] sm:$0xff]
    %v162 = vld [vmem:[%s3 + $0x10] sm:$0xff]
    %v163 = vld [vmem:[%s3 + $0x18] sm:$0xff]
    %v164 = vadd.f32 %v156, %v160
    %v165 = vadd.f32 %v157, %v161
    %v166 = vadd.f32 %v158, %v162
    %v167 = vadd.f32 %v159, %v163
    %168 = vst.msk [vmem:[%s4] sm:$0xff] %vm137, %v164
    %169 = vst.msk [vmem:[%s4 + $0x8] sm:$0xff] %vm137, %v165
    %170 = vst.msk [vmem:[%s4 + $0x10] sm:$0xff] %vm137, %v166
    %171 = vst.msk [vmem:[%s4 + $0x18] sm:$0xff] %vm137, %v167
  $region25: #{_lambda_.23} parent=0 // pred_fallthru
    _
  // Predicated region
  $region26: #{_lambda_.23} parent=0 // pred_check
    _
  $region27: #{_lambda_.23} parent=0 // pred_check_branch
    %173 = sbr.rel (0) target = $region29
  $region28: #{_lambda_.23} parent=0 // pred_region
    _
  $region29: #{_lambda_.23} parent=0 // pred_fallthru
    _
  // Predicated region
  $region30: #{_lambda_.23} parent=0 // pred_check
    _
  $region31: #{_lambda_.23} parent=0 // pred_check_branch
    %175 = sbr.rel (0) target = $region33
  $region32: #{_lambda_.23} parent=0 // pred_region
    _
  $region33: #{_lambda_.23} parent=0 // pred_fallthru
    _

// kernel: _lambda_.29
$region0: #{_lambda_.29}
  #allocation0 [shape = 'u32[]', space=smem, size = 0x4, offset = 0x4, fixed_abs, tag = 'smem constant byte address 0x4 - core index']
  #allocation1 [shape = 'u32[144,128]{1,0:T(1,128)}', space=vmem, size = 0x12000, scoped, tag = 'internal scratch']
  #allocation2 [shape = 'f32[32,32]{1,0:T(8,128)}', space=vmem, size = 0x4000, scoped, tag = 'scratch operand']
  %s0 = inlined_call_operand.vmem [shape: bf16[32,32], index: 0, kind: input, shape index: {}]
  %s1 = inlined_call_operand.vmem [shape: bf16[32,32], index: 1, kind: input, shape index: {}]
  %s2 = inlined_call_operand.vmem [shape: f32[1,32], index: 2, kind: input, shape index: {}]
  %s3 = inlined_call_operand.vmem [shape: f32[1,32], index: 3, kind: input, shape index: {}]
  %s4 = inlined_call_operand.vmem [shape: f32[32,32], index: 4, kind: output, shape index: {}]
  %s5 = sld [smem:[#allocation0]]
  $region34: #{_lambda_.29} parent=0
    _
  %s7 = ssub.s32 1, %s5
  %s8 = scalar_select 0, %s7, %s5
  // Predicated region
  $region2: #{_lambda_.29} parent=0 // pred_check
    _
  $region3: #{_lambda_.29} parent=0 // pred_check_branch
    %10 = sbr.rel (0) target = $region5
  $region4: #{_lambda_.29} parent=0 // pred_region
    _
  $region5: #{_lambda_.29} parent=0 // pred_fallthru
    _
  // Predicated region
  $region6: #{_lambda_.29} parent=0 // pred_check
    _
  $region7: #{_lambda_.29} parent=0 // pred_check_branch
    %12 = sbr.rel (0) target = $region9
  $region8: #{_lambda_.29} parent=0 // pred_region
    _
  $region9: #{_lambda_.29} parent=0 // pred_fallthru
    _
  // Predicated region
  $region10: #{_lambda_.29} parent=0 // pred_check
    _
  $region11: #{_lambda_.29} parent=0 // pred_check_branch
    %14 = sbr.rel (0) target = $region13
  $region12: #{_lambda_.29} parent=0 // pred_region
    _
  $region13: #{_lambda_.29} parent=0 // pred_fallthru
    _
  // Predicated region
  $region14: #{_lambda_.29} parent=0 // pred_check
    _
  $region15: #{_lambda_.29} parent=0 // pred_check_branch
    %16 = sbr.rel (0) target = $region17
  $region16: #{_lambda_.29} parent=0 // pred_region
    _
  $region17: #{_lambda_.29} parent=0 // pred_fallthru
    _
  %p18 = scmp.eq.s32.totalorder 0, 0
  // Predicated region
  $region18: #{_lambda_.29} parent=0 // pred_check
    %p19 = pneg %p18
  $region19: #{_lambda_.29} parent=0 // pred_check_branch
    %21 = sbr.rel (%p19) target = $region21
  $region20: #{_lambda_.29} parent=0 // pred_region
    %vm22 = vcmask 261120
    %23 = vst.msk [vmem:[#allocation2] sm:$0xff] %vm22, 0.0
    %24 = vst.msk [vmem:[#allocation2 + $0x8] sm:$0xff] %vm22, 0.0
    %25 = vst.msk [vmem:[#allocation2 + $0x10] sm:$0xff] %vm22, 0.0
    %26 = vst.msk [vmem:[#allocation2 + $0x18] sm:$0xff] %vm22, 0.0
  $region21: #{_lambda_.29} parent=0 // pred_fallthru
    _
  %v27 = vld [vmem:[#allocation2] sm:$0xff]
  %v28 = vld [vmem:[#allocation2 + $0x8] sm:$0xff]
  %v29 = vld [vmem:[#allocation2 + $0x10] sm:$0xff]
  %v30 = vld [vmem:[#allocation2 + $0x18] sm:$0xff]
  %v31 = vld [vmem:[%s0] sm:$0xf]
  %v32 = vld [vmem:[%s0 + $0x4] sm:$0xf]
  %v33 = vld [vmem:[%s0 + $0x8] sm:$0xf]
  %v34 = vld [vmem:[%s0 + $0xc] sm:$0xf]
  %v35 = vld [vmem:[%s1] sm:$0xf]
  %v36 = vld [vmem:[%s1 + $0x4] sm:$0xf]
  %v37 = vld [vmem:[%s1 + $0x8] sm:$0xf]
  %v38 = vld [vmem:[%s1 + $0xc] sm:$0xf]
  %v43 = vunpack.c.l.b16 %v31
  %v44 = vunpack.c.l.b16 %v32
  %v45 = vunpack.c.l.b16 %v33
  %v46 = vunpack.c.l.b16 %v34
  %v47 = vpack.c.b16 %v44, %v43
  %v48 = vpack.c.b16 %v46, %v45
  %v53 = vunpack.c.l.b16 %v35
  %v54 = vunpack.c.l.b16 %v36
  %v55 = vunpack.c.l.b16 %v37
  %v56 = vunpack.c.l.b16 %v38
  %v57 = vpack.c.b16 %v54, %v53
  %v58 = vpack.c.b16 %v56, %v55
  %vm61 = vcmask 261120
  %v63 = vsel %vm61, %v47, 0
  %v66 = vsel %vm61, %v48, 0
  %68 = vmatprep.subr.bf16.mxu0 0
  %69 = vmatpush1.bf16.msra.mxu0 %v57
  %70 = vmatprep.subr.bf16.mxu0 0
  %71 = vmatpush1.bf16.msra.mxu0 %v58
  %72 = vmatprep.subr.bf16.mxu0 0
  %73 = vmatpush1.bf16.msra.mxu0 0
  %74 = vmatprep.subr.bf16.mxu0 0
  %75 = vmatpush1.bf16.msra.mxu0 0
  %76 = vmatprep.subr.bf16.mxu0 0
  %77 = vmatpush1.bf16.msra.mxu0 0
  %78 = vmatprep.subr.bf16.mxu0 0
  %79 = vmatpush1.bf16.msra.mxu0 0
  %80 = vmatprep.subr.bf16.mxu0 0
  %81 = vmatpush1.bf16.msra.mxu0 0
  %82 = vmatprep.subr.bf16.mxu0 0
  %83 = vmatpush1.bf16.msra.mxu0 0
  %84 = vmatprep.subr.bf16.mxu0 0
  %85 = vmatpush1.bf16.msra.mxu0 0
  %86 = vmatprep.subr.bf16.mxu0 0
  %87 = vmatpush1.bf16.msra.mxu0 0
  %88 = vmatprep.subr.bf16.mxu0 0
  %89 = vmatpush1.bf16.msra.mxu0 0
  %90 = vmatprep.subr.bf16.mxu0 0
  %91 = vmatpush1.bf16.msra.mxu0 0
  %92 = vmatprep.subr.bf16.mxu0 0
  %93 = vmatpush1.bf16.msra.mxu0 0
  %94 = vmatprep.subr.bf16.mxu0 0
  %95 = vmatpush1.bf16.msra.mxu0 0
  %96 = vmatprep.subr.bf16.mxu0 0
  %97 = vmatpush1.bf16.msra.mxu0 0
  %98 = vmatprep.subr.bf16.mxu0 0
  %99 = vmatpush1.bf16.msra.mxu0 0
  %100 = vmatprep.mubr.bf16.mxu0 0
  %101 = vmatmul.mubr.bf16.gmra.mrb[0].mxu0 %v63
  %v102 = vpop.f32.mrb[0].mxu0
  %v103 = vadd.f32 0.0, %v102
  %v104 = vpop.f32.mrb[0].mxu0
  %v105 = vpop.f32.mrb[0].mxu0
  %v106 = vadd.f32 0.0, %v105
  %v107 = vpop.f32.mrb[0].mxu0
  %108 = vmatprep.mubr.bf16.mxu0 0
  %109 = vmatmul.mubr.bf16.gmra.mrb[0].mxu0 %v66
  %v110 = vpop.f32.mrb[0].mxu0
  %v111 = vadd.f32 0.0, %v110
  %v112 = vpop.f32.mrb[0].mxu0
  %v113 = vpop.f32.mrb[0].mxu0
  %v114 = vadd.f32 0.0, %v113
  %v115 = vpop.f32.mrb[0].mxu0
  %116 = vdwg.mxu0
  %v117 = vadd.f32 %v27, %v103
  %v118 = vadd.f32 %v28, %v106
  %v119 = vadd.f32 %v29, %v111
  %v120 = vadd.f32 %v30, %v114
  %121 = vst.msk [vmem:[#allocation2] sm:$0xff] %vm61, %v117
  %122 = vst.msk [vmem:[#allocation2 + $0x8] sm:$0xff] %vm61, %v118
  %123 = vst.msk [vmem:[#allocation2 + $0x10] sm:$0xff] %vm61, %v119
  %124 = vst.msk [vmem:[#allocation2 + $0x18] sm:$0xff] %vm61, %v120
  // Predicated region
  $region22: #{_lambda_.29} parent=0 // pred_check
    %p125 = pneg %p18
  $region23: #{_lambda_.29} parent=0 // pred_check_branch
    %127 = sbr.rel (%p125) target = $region25
  $region24: #{_lambda_.29} parent=0 // pred_region
    %v128 = vld [vmem:[#allocation2] sm:$0xff]
    %v129 = vld [vmem:[#allocation2 + $0x8] sm:$0xff]
    %v130 = vld [vmem:[#allocation2 + $0x10] sm:$0xff]
    %v131 = vld [vmem:[#allocation2 + $0x18] sm:$0xff]
    %v132 = vsel %vm61, %v128, 0.0
    %133 = vadd.xlane.f32.xlu0 %v132
    %v134 = vpop.xlane.xlu0 %133
    %v135 = vsel %vm61, %v129, 0.0
    %136 = vadd.xlane.f32.xlu0 %v135
    %v137 = vpop.xlane.xlu0 %136
    %v138 = vsel %vm61, %v130, 0.0
    %139 = vadd.xlane.f32.xlu0 %v138
    %v140 = vpop.xlane.xlu0 %139
    %v141 = vsel %vm61, %v131, 0.0
    %142 = vadd.xlane.f32.xlu0 %v141
    %v143 = vpop.xlane.xlu0 %142
    %v144 = vrcp.pop 32.0
    %v145 = vmul.f32 %v134, %v144
    %v146 = vmul.f32 %v137, %v144
    %v147 = vmul.f32 %v140, %v144
    %v148 = vmul.f32 %v143, %v144
    %v149 = vsub.f32 %v128, %v145
    %v150 = vsub.f32 %v129, %v146
    %v151 = vsub.f32 %v130, %v147
    %v152 = vsub.f32 %v131, %v148
    %v153 = vmul.f32 %v149, %v149
    %v154 = vmul.f32 %v150, %v150
    %v155 = vmul.f32 %v151, %v151
    %v156 = vmul.f32 %v152, %v152
    %v157 = vsel %vm61, %v153, 0.0
    %158 = vadd.xlane.f32.xlu0 %v157
    %v159 = vpop.xlane.xlu0 %158
    %v160 = vsel %vm61, %v154, 0.0
    %161 = vadd.xlane.f32.xlu0 %v160
    %v162 = vpop.xlane.xlu0 %161
    %v163 = vsel %vm61, %v155, 0.0
    %164 = vadd.xlane.f32.xlu0 %v163
    %v165 = vpop.xlane.xlu0 %164
    %v166 = vsel %vm61, %v156, 0.0
    %167 = vadd.xlane.f32.xlu0 %v166
    %v168 = vpop.xlane.xlu0 %167
    %v169 = vmul.f32 %v159, %v144
    %v170 = vmul.f32 %v162, %v144
    %v171 = vmul.f32 %v165, %v144
    %v172 = vmul.f32 %v168, %v144
    %v173 = vadd.f32 %v169, 1e-06
    %v174 = vadd.f32 %v170, 1e-06
    %v175 = vadd.f32 %v171, 1e-06
    %v176 = vadd.f32 %v172, 1e-06
    %v177 = vrsqrt.pop %v173
    %v178 = vrsqrt.pop %v174
    %v179 = vrsqrt.pop %v175
    %v180 = vrsqrt.pop %v176
    %v181 = vmul.f32 %v149, %v177
    %v182 = vmul.f32 %v150, %v178
    %v183 = vmul.f32 %v151, %v179
    %v184 = vmul.f32 %v152, %v180
    %v185 = vld [vmem:[%s2] sm:$0x1]
    %v187 = vlaneseq
    %v188 = vshrl.u32 %v187, 7
    %v189 = vsub.s32 0, %v188
    %v190 = vrot.slane %v185, %v189
    %v192 = vmul.f32 %v181, %v190
    %v193 = vmul.f32 %v182, %v190
    %v194 = vmul.f32 %v183, %v190
    %v195 = vmul.f32 %v184, %v190
    %v196 = vld [vmem:[%s3] sm:$0x1]
    %v198 = vlaneseq
    %v199 = vshrl.u32 %v198, 7
    %v200 = vsub.s32 0, %v199
    %v201 = vrot.slane %v196, %v200
    %v203 = vadd.f32 %v192, %v201
    %v204 = vadd.f32 %v193, %v201
    %v205 = vadd.f32 %v194, %v201
    %v206 = vadd.f32 %v195, %v201
    %207 = vst.msk [vmem:[%s4] sm:$0xff] %vm61, %v203
    %208 = vst.msk [vmem:[%s4 + $0x8] sm:$0xff] %vm61, %v204
    %209 = vst.msk [vmem:[%s4 + $0x10] sm:$0xff] %vm61, %v205
    %210 = vst.msk [vmem:[%s4 + $0x18] sm:$0xff] %vm61, %v206
  $region25: #{_lambda_.29} parent=0 // pred_fallthru
    _
  // Predicated region
  $region26: #{_lambda_.29} parent=0 // pred_check
    _
  $region27: #{_lambda_.29} parent=0 // pred_check_branch
    %212 = sbr.rel (0) target = $region29
  $region28: #{_lambda_.29} parent=0 // pred_region
    _
  $region29: #{_lambda_.29} parent=0 // pred_fallthru
    _
  // Predicated region
  $region30: #{_lambda_.29} parent=0 // pred_check
    _
  $region31: #{_lambda_.29} parent=0 // pred_check_branch
    %214 = sbr.rel (0) target = $region33
  $region32: #{_lambda_.29} parent=0 // pred_region
    _
  $region33: #{_lambda_.29} parent=0 // pred_fallthru
    _

// kernel: _lambda_.30
$region0: #{_lambda_.30}
  #allocation0 [shape = 'u32[]', space=smem, size = 0x4, offset = 0x4, fixed_abs, tag = 'smem constant byte address 0x4 - core index']
  #allocation1 [shape = 'u32[144,128]{1,0:T(1,128)}', space=vmem, size = 0x12000, scoped, tag = 'internal scratch']
  %s0 = inlined_call_operand.vmem [shape: bf16[2,42,32], index: 0, kind: input, shape index: {}]
  %s1 = inlined_call_operand.vmem [shape: bf16[9,32,32], index: 1, kind: input, shape index: {}]
  %s2 = inlined_call_operand.vmem [shape: f32[1,32], index: 2, kind: input, shape index: {}]
  %s3 = inlined_call_operand.vmem [shape: f32[1,32], index: 3, kind: input, shape index: {}]
  %s4 = inlined_call_operand.vmem [shape: f32[2,24,32], index: 4, kind: output, shape index: {}]
  %s5 = sld [smem:[#allocation0]]
  $region49: #{_lambda_.30} parent=0
    _
  %s7 = ssub.s32 1, %s5
  %s8 = scalar_select 0, %s7, %s5
  loop: start=0, step=1, limit=4
  $region2: #{_lambda_.30} parent=0 // loop_pre_header
    _
  $region3: #{_lambda_.30} parent=0 // loop_header
    %s10 = sphi 0, %s14
    %p11 = scmp.ge.s32.totalorder %s10, 4
    %s20 = sphi 0, %s22
    %s23 = sphi 0, %s20
    %s24 = sphi 0, %s23
    %s40 = sphi 0, %s24
    %s44 = sphi 0, %s44
    %s46 = sphi 0, %s44
    %s47 = sphi 0, %s46
    %s61 = sphi 0, %s47
    %s65 = sphi 0, %s65
    %s67 = sphi 0, %s65
    %s68 = sphi 0, %s67
    %s82 = sphi 0, %s68
    %s86 = sphi 0, %s86
    %s88 = sphi 0, %s86
    %s89 = sphi 0, %s88
    %s103 = sphi 0, %s89
    %s109 = sphi 0, %s111
    %s112 = sphi 0, %s109
    %s113 = sphi 0, %s112
    %s129 = sphi 0, %s113
  $region4: #{_lambda_.30} parent=0 // loop_header_branch
    %13 = sbr.rel (%p11) target = $region8
  $region5: #{_lambda_.30} parent=0 // loop_body
    %s15 = ssub.s32 %s10, 1
    %s16 = ssub.s32 %s10, 2
    %s17 = sadd.s32 %s10, 1
    %s18 = ssub.s32 %s10, %s17
    %p19 = scmp.eq.s32.totalorder %s18, 0
    %s21 = sadd.s32 %s20, 1
    %s22 = scalar_select %p19, %s20, %s21
    %p25 = pneg %p19
    %p26 = scmp.eq.s32.totalorder %s10, 1
    %p27 = por %p25, %p26
    %p28 = scmp.ne.s32.totalorder %s20, %s23
    %p29 = scmp.eq.s32.totalorder %s10, 0
    %p30 = por %p28, %p29
    %p31 = scmp.ne.s32.totalorder %s20, %s23
    %p32 = scmp.eq.s32.totalorder %s15, 1
    %p33 = por %p31, %p32
    %p34 = scmp.ne.s32.totalorder %s23, %s24
    %p35 = scmp.eq.s32.totalorder %s15, 0
    %p36 = por %p34, %p35
    %p37 = scmp.ne.s32.totalorder %s23, %s24
    %p38 = scmp.eq.s32.totalorder %s16, 1
    %p39 = por %p37, %p38
    %p41 = scmp.ne.s32.totalorder %s24, %s40
    %p42 = scmp.eq.s32.totalorder %s16, 0
    %p43 = por %p41, %p42
    %s45 = sadd.s32 %s44, 1
    %p48 = scmp.eq.s32.totalorder %s10, 1
    %p49 = scmp.ne.s32.totalorder %s44, %s46
    %p50 = scmp.eq.s32.totalorder %s10, 0
    %p51 = por %p49, %p50
    %p52 = scmp.ne.s32.totalorder %s44, %s46
    %p53 = scmp.eq.s32.totalorder %s15, 1
    %p54 = por %p52, %p53
    %p55 = scmp.ne.s32.totalorder %s46, %s47
    %p56 = scmp.eq.s32.totalorder %s15, 0
    %p57 = por %p55, %p56
    %p58 = scmp.ne.s32.totalorder %s46, %s47
    %p59 = scmp.eq.s32.totalorder %s16, 1
    %p60 = por %p58, %p59
    %p62 = scmp.ne.s32.totalorder %s47, %s61
    %p63 = scmp.eq.s32.totalorder %s16, 0
    %p64 = por %p62, %p63
    %s66 = sadd.s32 %s65, 1
    %p69 = scmp.eq.s32.totalorder %s10, 1
    %p70 = scmp.ne.s32.totalorder %s65, %s67
    %p71 = scmp.eq.s32.totalorder %s10, 0
    %p72 = por %p70, %p71
    %p73 = scmp.ne.s32.totalorder %s65, %s67
    %p74 = scmp.eq.s32.totalorder %s15, 1
    %p75 = por %p73, %p74
    %p76 = scmp.ne.s32.totalorder %s67, %s68
    %p77 = scmp.eq.s32.totalorder %s15, 0
    %p78 = por %p76, %p77
    %p79 = scmp.ne.s32.totalorder %s67, %s68
    %p80 = scmp.eq.s32.totalorder %s16, 1
    %p81 = por %p79, %p80
    %p83 = scmp.ne.s32.totalorder %s68, %s82
    %p84 = scmp.eq.s32.totalorder %s16, 0
    %p85 = por %p83, %p84
    %s87 = sadd.s32 %s86, 1
    %p90 = scmp.eq.s32.totalorder %s10, 1
    %p91 = scmp.ne.s32.totalorder %s86, %s88
    %p92 = scmp.eq.s32.totalorder %s10, 0
    %p93 = por %p91, %p92
    %p94 = scmp.ne.s32.totalorder %s86, %s88
    %p95 = scmp.eq.s32.totalorder %s15, 1
    %p96 = por %p94, %p95
    %p97 = scmp.ne.s32.totalorder %s88, %s89
    %p98 = scmp.eq.s32.totalorder %s15, 0
    %p99 = por %p97, %p98
    %p100 = scmp.ne.s32.totalorder %s88, %s89
    %p101 = scmp.eq.s32.totalorder %s16, 1
    %p102 = por %p100, %p101
    %p104 = scmp.ne.s32.totalorder %s89, %s103
    %p105 = scmp.eq.s32.totalorder %s16, 0
    %p106 = por %p104, %p105
    %s107 = ssub.s32 %s10, %s17
    %p108 = scmp.eq.s32.totalorder %s107, 0
    %s110 = sadd.s32 %s109, 1
    %s111 = scalar_select %p108, %s109, %s110
    %p114 = pneg %p108
    %p115 = scmp.eq.s32.totalorder %s10, 1
    %p116 = por %p114, %p115
    %p117 = scmp.ne.s32.totalorder %s109, %s112
    %p118 = scmp.eq.s32.totalorder %s10, 0
    %p119 = por %p117, %p118
    %p120 = scmp.ne.s32.totalorder %s109, %s112
    %p121 = scmp.eq.s32.totalorder %s15, 1
    %p122 = por %p120, %p121
    %p123 = scmp.ne.s32.totalorder %s112, %s113
    %p124 = scmp.eq.s32.totalorder %s15, 0
    %p125 = por %p123, %p124
    %p126 = scmp.ne.s32.totalorder %s112, %s113
    %p127 = scmp.eq.s32.totalorder %s16, 1
    %p128 = por %p126, %p127
    %p130 = scmp.ne.s32.totalorder %s113, %s129
    %p131 = scmp.eq.s32.totalorder %s16, 0
    %p132 = por %p130, %p131
    %p133 = scmp.le.s32.totalorder 1, %s10
    %p134 = scmp.lt.s32.totalorder %s10, 3
    %p135 = pnand %p133, %p134
    %p136 = pneg %p135
    // Predicated region
    $region9: #{_lambda_.30} parent=5 // pred_check
      _
    $region10: #{_lambda_.30} parent=5 // pred_check_branch
      %138 = sbr.rel (%p135) target = $region12
    $region11: #{_lambda_.30} parent=5 // pred_region
      %s139 = ssub.s32 %s10, 1
      // Predicated region
      $region13: #{_lambda_.30} parent=11 // pred_check
        %p140 = pneg %p57
      $region14: #{_lambda_.30} parent=11 // pred_check_branch
        %142 = sbr.rel (%p140) target = $region16
      $region15: #{_lambda_.30} parent=11 // pred_region
        _
      $region16: #{_lambda_.30} parent=11 // pred_fallthru
        _
      // Predicated region
      $region17: #{_lambda_.30} parent=11 // pred_check
        %p143 = pneg %p78
      $region18: #{_lambda_.30} parent=11 // pred_check_branch
        %145 = sbr.rel (%p143) target = $region20
      $region19: #{_lambda_.30} parent=11 // pred_region
        _
      $region20: #{_lambda_.30} parent=11 // pred_fallthru
        _
      // Predicated region
      $region21: #{_lambda_.30} parent=11 // pred_check
        %p146 = pneg %p99
      $region22: #{_lambda_.30} parent=11 // pred_check_branch
        %148 = sbr.rel (%p146) target = $region24
      $region23: #{_lambda_.30} parent=11 // pred_region
        _
      $region24: #{_lambda_.30} parent=11 // pred_fallthru
        _
    $region12: #{_lambda_.30} parent=5 // pred_fallthru
      _
    %p149 = scmp.lt.s32.totalorder %s10, 2
    // Predicated region
    $region25: #{_lambda_.30} parent=5 // pred_check
      %p150 = pneg %p149
    $region26: #{_lambda_.30} parent=5 // pred_check_branch
      %152 = sbr.rel (%p150) target = $region28
    $region27: #{_lambda_.30} parent=5 // pred_region
      // Predicated region
      $region29: #{_lambda_.30} parent=27 // pred_check
        %p153 = pneg %p30
      $region30: #{_lambda_.30} parent=27 // pred_check_branch
        %155 = sbr.rel (%p153) target = $region32
      $region31: #{_lambda_.30} parent=27 // pred_region
        %p156 = scmp.lt.s32.totalorder %s10, 1
        %s157 = scalar_select %p156, %s10, 1
        %s158 = smul.addr %s157, 6
        %s159 = smul.addr %s158, 4
        %s160 = scalar_lea.vmem %s0, %s159
      $region32: #{_lambda_.30} parent=27 // pred_fallthru
        _
    $region28: #{_lambda_.30} parent=5 // pred_fallthru
      _
    %p161 = scmp.le.s32.totalorder 1, %s10
    %p162 = scmp.lt.s32.totalorder %s10, 3
    %p163 = pnand %p161, %p162
    %p164 = pneg %p163
    // Predicated region
    $region33: #{_lambda_.30} parent=5 // pred_check
      _
    $region34: #{_lambda_.30} parent=5 // pred_check_branch
      %166 = sbr.rel (%p163) target = $region36
    $region35: #{_lambda_.30} parent=5 // pred_region
      %s167 = ssub.s32 %s10, 1
      %p168 = scmp.lt.s32.totalorder %s15, 1
      %s169 = scalar_select %p168, %s15, 1
      %s170 = smul.addr %s169, 6
      %s171 = smul.addr %s170, 4
      %s172 = scalar_lea.vmem %s0, %s171
      %p173 = pneg %p36
      %p174 = pneg %p33
      %p175 = pneg %p57
      %p176 = pneg %p54
      %p177 = pneg %p78
      %p178 = pneg %p75
      %p179 = pneg %p99
      %p180 = pneg %p96
      %p181 = pneg %p125
      %p182 = pneg %p122
      %p183 = scmp.lt.s32.totalorder %s15, 1
      %s184 = scalar_select %p183, %s15, 1
      %s185 = smul.addr %s184, 3
      %s186 = smul.addr %s185, 8
      %s187 = scalar_lea.vmem %s4, %s186
      %p188 = scmp.lt.s32.totalorder %s15, 1
      %s189 = scalar_select %p188, %s15, 1
      %s190 = smul.addr %s189, 6
      %s191 = smul.addr %s190, 4
      %s192 = scalar_lea.vmem %s0, %s191
      %p193 = scmp.lt.s32.totalorder %s15, 1
      %s194 = scalar_select %p193, %s15, 1
      %s195 = smul.addr %s194, 3
      %s196 = smul.addr %s195, 8
      %s197 = scalar_lea.vmem %s4, %s196
      %v199 = vld [vmem:[%s192] sm:$0xf]
      %v200 = vld [vmem:[%s192 + $0x4] sm:$0xf]
      %v201 = vld [vmem:[%s192 + $0x8] sm:$0xf]
      %v202 = vld [vmem:[%s1] sm:$0xf]
      %v203 = vld [vmem:[%s1 + $0x4] sm:$0xf]
      %v204 = vld [vmem:[%s1 + $0x8] sm:$0xf]
      %v205 = vld [vmem:[%s1 + $0xc] sm:$0xf]
      %v206 = vld [vmem:[%s192 + $0xc] sm:$0x1]
      %s207 = scalar_lea.vmem %s1, 16
      %v208 = vld [vmem:[%s207] sm:$0xf]
      %v209 = vld [vmem:[%s207 + $0x4] sm:$0xf]
      %v210 = vld [vmem:[%s207 + $0x8] sm:$0xf]
      %v211 = vld [vmem:[%s207 + $0xc] sm:$0xf]
      %v216 = vunpack.c.l.b16 %v199
      %v217 = vunpack.c.l.b16 %v200
      %v218 = vunpack.c.l.b16 %v201
      %v219 = vunpack.c.l.b16 %v206
      %v220 = vpack.c.b16 %v217, %v216
      %v221 = vpack.c.b16 %v219, %v218
      %vm222 = vsmask.f32 7424
      %v224 = vshrl.u32 %v220, 16
      %v226 = vshll.u32 %v220, 16
      %v228 = vrot.slane %v226, 1
      %v229 = vor.u32 %v224, %v228
      %v231 = vshll.u32 %v221, 16
      %v233 = vrot.slane %v231, 1
      %v234 = vsel %vm222, %v229, %v233
      %v235 = vshrl.u32 %v221, 16
      %v237 = vor.u32 %v235, %v233
      %v242 = vunpack.c.l.b16 %v208
      %v243 = vunpack.c.l.b16 %v209
      %v244 = vunpack.c.l.b16 %v210
      %v245 = vunpack.c.l.b16 %v211
      %v246 = vpack.c.b16 %v243, %v242
      %v247 = vpack.c.b16 %v245, %v244
      %vm250 = vcmask 261120
      %v252 = vsel %vm250, %v234, 0
      %v255 = vsel %vm250, %v237, 0
      %257 = vmatprep.subr.bf16.mxu0 0
      %258 = vmatpush1.bf16.msra.mxu0 %v246
      %259 = vmatprep.subr.bf16.mxu0 0
      %260 = vmatpush1.bf16.msra.mxu0 %v247
      %261 = vmatprep.subr.bf16.mxu0 0
      %262 = vmatpush1.bf16.msra.mxu0 0
      %263 = vmatprep.subr.bf16.mxu0 0
      %264 = vmatpush1.bf16.msra.mxu0 0
      %265 = vmatprep.subr.bf16.mxu0 0
      %266 = vmatpush1.bf16.msra.mxu0 0
      %267 = vmatprep.subr.bf16.mxu0 0
      %268 = vmatpush1.bf16.msra.mxu0 0
      %269 = vmatprep.subr.bf16.mxu0 0
      %270 = vmatpush1.bf16.msra.mxu0 0
      %271 = vmatprep.subr.bf16.mxu0 0
      %272 = vmatpush1.bf16.msra.mxu0 0
      %273 = vmatprep.subr.bf16.mxu0 0
      %274 = vmatpush1.bf16.msra.mxu0 0
      %275 = vmatprep.subr.bf16.mxu0 0
      %276 = vmatpush1.bf16.msra.mxu0 0
      %277 = vmatprep.subr.bf16.mxu0 0
      %278 = vmatpush1.bf16.msra.mxu0 0
      %279 = vmatprep.subr.bf16.mxu0 0
      %280 = vmatpush1.bf16.msra.mxu0 0
      %281 = vmatprep.subr.bf16.mxu0 0
      %282 = vmatpush1.bf16.msra.mxu0 0
      %283 = vmatprep.subr.bf16.mxu0 0
      %284 = vmatpush1.bf16.msra.mxu0 0
      %285 = vmatprep.subr.bf16.mxu0 0
      %286 = vmatpush1.bf16.msra.mxu0 0
      %287 = vmatprep.subr.bf16.mxu0 0
      %288 = vmatpush1.bf16.msra.mxu0 0
      %289 = vmatprep.mubr.bf16.mxu0 0
      %290 = vmatmul.mubr.bf16.gmra.mrb[0].mxu0 %v252
      %v291 = vpop.f32.mrb[0].mxu0
      %v292 = vadd.f32 0.0, %v291
      %v293 = vpop.f32.mrb[0].mxu0
      %v294 = vpop.f32.mrb[0].mxu0
      %v295 = vadd.f32 0.0, %v294
      %v296 = vpop.f32.mrb[0].mxu0
      %297 = vmatprep.mubr.bf16.mxu0 0
      %298 = vmatmul.mubr.bf16.gmra.mrb[0].mxu0 %v255
      %v299 = vpop.f32.mrb[0].mxu0
      %v300 = vadd.f32 0.0, %v299
      %v301 = vpop.f32.mrb[0].mxu0
      %v302 = vpop.f32.mrb[0].mxu0
      %v303 = vpop.f32.mrb[0].mxu0
      %304 = vdwg.mxu0
      %v305 = vpack.c.b16 %v218, %v218
      %v310 = vunpack.c.l.b16 %v202
      %v311 = vunpack.c.l.b16 %v203
      %v312 = vunpack.c.l.b16 %v204
      %v313 = vunpack.c.l.b16 %v205
      %v314 = vpack.c.b16 %v311, %v310
      %v315 = vpack.c.b16 %v313, %v312
      %v318 = vsel %vm250, %v220, 0
      %v321 = vsel %vm250, %v305, 0
      %323 = vmatprep.subr.bf16.mxu0 0
      %324 = vmatpush1.bf16.msra.mxu0 %v314
      %325 = vmatprep.subr.bf16.mxu0 0
      %326 = vmatpush1.bf16.msra.mxu0 %v315
      %327 = vmatprep.subr.bf16.mxu0 0
      %328 = vmatpush1.bf16.msra.mxu0 0
      %329 = vmatprep.subr.bf16.mxu0 0
      %330 = vmatpush1.bf16.msra.mxu0 0
      %331 = vmatprep.subr.bf16.mxu0 0
      %332 = vmatpush1.bf16.msra.mxu0 0
      %333 = vmatprep.subr.bf16.mxu0 0
      %334 = vmatpush1.bf16.msra.mxu0 0
      %335 = vmatprep.subr.bf16.mxu0 0
      %336 = vmatpush1.bf16.msra.mxu0 0
      %337 = vmatprep.subr.bf16.mxu0 0
      %338 = vmatpush1.bf16.msra.mxu0 0
      %339 = vmatprep.subr.bf16.mxu0 0
      %340 = vmatpush1.bf16.msra.mxu0 0
      %341 = vmatprep.subr.bf16.mxu0 0
      %342 = vmatpush1.bf16.msra.mxu0 0
      %343 = vmatprep.subr.bf16.mxu0 0
      %344 = vmatpush1.bf16.msra.mxu0 0
      %345 = vmatprep.subr.bf16.mxu0 0
      %346 = vmatpush1.bf16.msra.mxu0 0
      %347 = vmatprep.subr.bf16.mxu0 0
      %348 = vmatpush1.bf16.msra.mxu0 0
      %349 = vmatprep.subr.bf16.mxu0 0
      %350 = vmatpush1.bf16.msra.mxu0 0
      %351 = vmatprep.subr.bf16.mxu0 0
      %352 = vmatpush1.bf16.msra.mxu0 0
      %353 = vmatprep.subr.bf16.mxu0 0
      %354 = vmatpush1.bf16.msra.mxu0 0
      %355 = vmatprep.mubr.bf16.mxu0 0
      %356 = vmatmul.mubr.bf16.gmra.mrb[0].mxu0 %v318
      %v357 = vpop.f32.mrb[0].mxu0
      %v358 = vadd.f32 %v292, %v357
      %v359 = vpop.f32.mrb[0].mxu0
      %v360 = vpop.f32.mrb[0].mxu0
      %v361 = vadd.f32 %v295, %v360
      %v362 = vpop.f32.mrb[0].mxu0
      %363 = vmatprep.mubr.bf16.mxu0 0
      %364 = vmatmul.mubr.bf16.gmra.mrb[0].mxu0 %v321
      %v365 = vpop.f32.mrb[0].mxu0
      %v366 = vadd.f32 %v300, %v365
      %v367 = vpop.f32.mrb[0].mxu0
      %v368 = vpop.f32.mrb[0].mxu0
      %v369 = vpop.f32.mrb[0].mxu0
      %370 = vdwg.mxu0
      %v371 = vld [vmem:[%s192] sm:$0xe]
      %s372 = scalar_lea.vmem %s1, 32
      %v373 = vld [vmem:[%s372] sm:$0xf]
      %v374 = vld [vmem:[%s372 + $0x4] sm:$0xf]
      %v375 = vld [vmem:[%s372 + $0x8] sm:$0xf]
      %v376 = vld [vmem:[%s372 + $0xc] sm:$0xf]
      %v378 = vunpack.c.l.b16 %v371
      %v379 = vpack.c.b16 %v217, %v378
      %vm380 = vcmask 1046528
      %v381 = vrot.slane %v379, 1
      %v382 = vrot.slane %v221, 1
      %v383 = vsel %vm380, %v381, %v382
      %v388 = vunpack.c.l.b16 %v373
      %v389 = vunpack.c.l.b16 %v374
      %v390 = vunpack.c.l.b16 %v375
      %v391 = vunpack.c.l.b16 %v376
      %v392 = vpack.c.b16 %v389, %v388
      %v393 = vpack.c.b16 %v391, %v390
      %v397 = vsel %vm250, %v383, 0
      %v400 = vsel %vm250, %v382, 0
      %402 = vmatprep.subr.bf16.mxu0 0
      %403 = vmatpush1.bf16.msra.mxu0 %v392
      %404 = vmatprep.subr.bf16.mxu0 0
      %405 = vmatpush1.bf16.msra.mxu0 %v393
      %406 = vmatprep.subr.bf16.mxu0 0
      %407 = vmatpush1.bf16.msra.mxu0 0
      %408 = vmatprep.subr.bf16.mxu0 0
      %409 = vmatpush1.bf16.msra.mxu0 0
      %410 = vmatprep.subr.bf16.mxu0 0
      %411 = vmatpush1.bf16.msra.mxu0 0
      %412 = vmatprep.subr.bf16.mxu0 0
      %413 = vmatpush1.bf16.msra.mxu0 0
      %414 = vmatprep.subr.bf16.mxu0 0
      %415 = vmatpush1.bf16.msra.mxu0 0
      %416 = vmatprep.subr.bf16.mxu0 0
      %417 = vmatpush1.bf16.msra.mxu0 0
      %418 = vmatprep.subr.bf16.mxu0 0
      %419 = vmatpush1.bf16.msra.mxu0 0
      %420 = vmatprep.subr.bf16.mxu0 0
      %421 = vmatpush1.bf16.msra.mxu0 0
      %422 = vmatprep.subr.bf16.mxu0 0
      %423 = vmatpush1.bf16.msra.mxu0 0
      %424 = vmatprep.subr.bf16.mxu0 0
      %425 = vmatpush1.bf16.msra.mxu0 0
      %426 = vmatprep.subr.bf16.mxu0 0
      %427 = vmatpush1.bf16.msra.mxu0 0
      %428 = vmatprep.subr.bf16.mxu0 0
      %429 = vmatpush1.bf16.msra.mxu0 0
      %430 = vmatprep.subr.bf16.mxu0 0
      %431 = vmatpush1.bf16.msra.mxu0 0
      %432 = vmatprep.subr.bf16.mxu0 0
      %433 = vmatpush1.bf16.msra.mxu0 0
      %434 = vmatprep.mubr.bf16.mxu0 0
      %435 = vmatmul.mubr.bf16.gmra.mrb[0].mxu0 %v397
      %v436 = vpop.f32.mrb[0].mxu0
      %v437 = vadd.f32 0.0, %v436
      %v438 = vpop.f32.mrb[0].mxu0
      %v439 = vpop.f32.mrb[0].mxu0
      %v440 = vadd.f32 0.0, %v439
      %v441 = vpop.f32.mrb[0].mxu0
      %442 = vmatprep.mubr.bf16.mxu0 0
      %443 = vmatmul.mubr.bf16.gmra.mrb[0].mxu0 %v400
      %v444 = vpop.f32.mrb[0].mxu0
      %v445 = vadd.f32 0.0, %v444
      %v446 = vpop.f32.mrb[0].mxu0
      %v447 = vpop.f32.mrb[0].mxu0
      %v448 = vpop.f32.mrb[0].mxu0
      %449 = vdwg.mxu0
      %v450 = vadd.f32 %v358, %v437
      %v451 = vadd.f32 %v361, %v440
      %v452 = vadd.f32 %v366, %v445
      %v453 = vld [vmem:[%s192] sm:$0x8]
      %v454 = vld [vmem:[%s192 + $0xc] sm:$0x7]
      %s455 = scalar_lea.vmem %s1, 48
      %v456 = vld [vmem:[%s455] sm:$0xf]
      %v457 = vld [vmem:[%s455 + $0x4] sm:$0xf]
      %v458 = vld [vmem:[%s455 + $0x8] sm:$0xf]
      %v459 = vld [vmem:[%s455 + $0xc] sm:$0xf]
      %v462 = vunpack.c.l.b16 %v453
      %v463 = vunpack.c.l.b16 %v454
      %v464 = vpack.c.b16 %v217, %v462
      %v465 = vpack.c.b16 %v463, %v218
      %vm466 = vcmask 1044480
      %v467 = vrot.slane %v464, 3
      %v468 = vrot.slane %v465, 3
      %v469 = vsel %vm466, %v467, %v468
      %v474 = vunpack.c.l.b16 %v456
      %v475 = vunpack.c.l.b16 %v457
      %v476 = vunpack.c.l.b16 %v458
      %v477 = vunpack.c.l.b16 %v459
      %v478 = vpack.c.b16 %v475, %v474
      %v479 = vpack.c.b16 %v477, %v476
      %v483 = vsel %vm250, %v469, 0
      %v486 = vsel %vm250, %v468, 0
      %488 = vmatprep.subr.bf16.mxu0 0
      %489 = vmatpush1.bf16.msra.mxu0 %v478
      %490 = vmatprep.subr.bf16.mxu0 0
      %491 = vmatpush1.bf16.msra.mxu0 %v479
      %492 = vmatprep.subr.bf16.mxu0 0
      %493 = vmatpush1.bf16.msra.mxu0 0
      %494 = vmatprep.subr.bf16.mxu0 0
      %495 = vmatpush1.bf16.msra.mxu0 0
      %496 = vmatprep.subr.bf16.mxu0 0
      %497 = vmatpush1.bf16.msra.mxu0 0
      %498 = vmatprep.subr.bf16.mxu0 0
      %499 = vmatpush1.bf16.msra.mxu0 0
      %500 = vmatprep.subr.bf16.mxu0 0
      %501 = vmatpush1.bf16.msra.mxu0 0
      %502 = vmatprep.subr.bf16.mxu0 0
      %503 = vmatpush1.bf16.msra.mxu0 0
      %504 = vmatprep.subr.bf16.mxu0 0
      %505 = vmatpush1.bf16.msra.mxu0 0
      %506 = vmatprep.subr.bf16.mxu0 0
      %507 = vmatpush1.bf16.msra.mxu0 0
      %508 = vmatprep.subr.bf16.mxu0 0
      %509 = vmatpush1.bf16.msra.mxu0 0
      %510 = vmatprep.subr.bf16.mxu0 0
      %511 = vmatpush1.bf16.msra.mxu0 0
      %512 = vmatprep.subr.bf16.mxu0 0
      %513 = vmatpush1.bf16.msra.mxu0 0
      %514 = vmatprep.subr.bf16.mxu0 0
      %515 = vmatpush1.bf16.msra.mxu0 0
      %516 = vmatprep.subr.bf16.mxu0 0
      %517 = vmatpush1.bf16.msra.mxu0 0
      %518 = vmatprep.subr.bf16.mxu0 0
      %519 = vmatpush1.bf16.msra.mxu0 0
      %520 = vmatprep.mubr.bf16.mxu0 0
      %521 = vmatmul.mubr.bf16.gmra.mrb[0].mxu0 %v483
      %v522 = vpop.f32.mrb[0].mxu0
      %v523 = vadd.f32 0.0, %v522
      %v524 = vpop.f32.mrb[0].mxu0
      %v525 = vpop.f32.mrb[0].mxu0
      %v526 = vadd.f32 0.0, %v525
      %v527 = vpop.f32.mrb[0].mxu0
      %528 = vmatprep.mubr.bf16.mxu0 0
      %529 = vmatmul.mubr.bf16.gmra.mrb[0].mxu0 %v486
      %v530 = vpop.f32.mrb[0].mxu0
      %v531 = vadd.f32 0.0, %v530
      %v532 = vpop.f32.mrb[0].mxu0
      %v533 = vpop.f32.mrb[0].mxu0
      %v534 = vpop.f32.mrb[0].mxu0
      %535 = vdwg.mxu0
      %v536 = vadd.f32 %v450, %v523
      %v537 = vadd.f32 %v451, %v526
      %v538 = vadd.f32 %v452, %v531
      %v539 = vld [vmem:[%s192 + $0xc] sm:$0xf]
      %s540 = scalar_lea.vmem %s1, 64
      %v541 = vld [vmem:[%s540] sm:$0xf]
      %v542 = vld [vmem:[%s540 + $0x4] sm:$0xf]
      %v543 = vld [vmem:[%s540 + $0x8] sm:$0xf]
      %v544 = vld [vmem:[%s540 + $0xc] sm:$0xf]
      %v546 = vunpack.c.l.b16 %v539
      %v547 = vpack.c.b16 %v546, %v218
      %vm548 = vsmask.f32 4352
      %v550 = vshrl.u32 %v464, 16
      %v552 = vrot.slane %v550, 3
      %v553 = vshll.u32 %v464, 16
      %v555 = vrot.slane %v553, 4
      %v556 = vor.u32 %v552, %v555
      %v558 = vshrl.u32 %v547, 16
      %v560 = vrot.slane %v558, 3
      %v561 = vshll.u32 %v547, 16
      %v563 = vrot.slane %v561, 4
      %v564 = vor.u32 %v560, %v563
      %v565 = vsel %vm548, %v556, %v564
      %v570 = vunpack.c.l.b16 %v541
      %v571 = vunpack.c.l.b16 %v542
      %v572 = vunpack.c.l.b16 %v543
      %v573 = vunpack.c.l.b16 %v544
      %v574 = vpack.c.b16 %v571, %v570
      %v575 = vpack.c.b16 %v573, %v572
      %v579 = vsel %vm250, %v565, 0
      %v582 = vsel %vm250, %v564, 0
      %584 = vmatprep.subr.bf16.mxu0 0
      %585 = vmatpush1.bf16.msra.mxu0 %v574
      %586 = vmatprep.subr.bf16.mxu0 0
      %587 = vmatpush1.bf16.msra.mxu0 %v575
      %588 = vmatprep.subr.bf16.mxu0 0
      %589 = vmatpush1.bf16.msra.mxu0 0
      %590 = vmatprep.subr.bf16.mxu0 0
      %591 = vmatpush1.bf16.msra.mxu0 0
      %592 = vmatprep.subr.bf16.mxu0 0
      %593 = vmatpush1.bf16.msra.mxu0 0
      %594 = vmatprep.subr.bf16.mxu0 0
      %595 = vmatpush1.bf16.msra.mxu0 0
      %596 = vmatprep.subr.bf16.mxu0 0
      %597 = vmatpush1.bf16.msra.mxu0 0
      %598 = vmatprep.subr.bf16.mxu0 0
      %599 = vmatpush1.bf16.msra.mxu0 0
      %600 = vmatprep.subr.bf16.mxu0 0
      %601 = vmatpush1.bf16.msra.mxu0 0
      %602 = vmatprep.subr.bf16.mxu0 0
      %603 = vmatpush1.bf16.msra.mxu0 0
      %604 = vmatprep.subr.bf16.mxu0 0
      %605 = vmatpush1.bf16.msra.mxu0 0
      %606 = vmatprep.subr.bf16.mxu0 0
      %607 = vmatpush1.bf16.msra.mxu0 0
      %608 = vmatprep.subr.bf16.mxu0 0
      %609 = vmatpush1.bf16.msra.mxu0 0
      %610 = vmatprep.subr.bf16.mxu0 0
      %611 = vmatpush1.bf16.msra.mxu0 0
      %612 = vmatprep.subr.bf16.mxu0 0
      %613 = vmatpush1.bf16.msra.mxu0 0
      %614 = vmatprep.subr.bf16.mxu0 0
      %615 = vmatpush1.bf16.msra.mxu0 0
      %616 = vmatprep.mubr.bf16.mxu0 0
      %617 = vmatmul.mubr.bf16.gmra.mrb[0].mxu0 %v579
      %v618 = vpop.f32.mrb[0].mxu0
      %v619 = vadd.f32 0.0, %v618
      %v620 = vpop.f32.mrb[0].mxu0
      %v621 = vpop.f32.mrb[0].mxu0
      %v622 = vadd.f32 0.0, %v621
      %v623 = vpop.f32.mrb[0].mxu0
      %624 = vmatprep.mubr.bf16.mxu0 0
      %625 = vmatmul.mubr.bf16.gmra.mrb[0].mxu0 %v582
      %v626 = vpop.f32.mrb[0].mxu0
      %v627 = vadd.f32 0.0, %v626
      %v628 = vpop.f32.mrb[0].mxu0
      %v629 = vpop.f32.mrb[0].mxu0
      %v630 = vpop.f32.mrb[0].mxu0
      %631 = vdwg.mxu0
      %v632 = vadd.f32 %v536, %v619
      %v633 = vadd.f32 %v537, %v622
      %v634 = vadd.f32 %v538, %v627
      %s635 = scalar_lea.vmem %s1, 80
      %v636 = vld [vmem:[%s635] sm:$0xf]
      %v637 = vld [vmem:[%s635 + $0x4] sm:$0xf]
      %v638 = vld [vmem:[%s635 + $0x8] sm:$0xf]
      %v639 = vld [vmem:[%s635 + $0xc] sm:$0xf]
      %v640 = vpack.c.b16 %v218, %v217
      %v641 = vpack.c.b16 %v546, %v546
      %v646 = vunpack.c.l.b16 %v636
      %v647 = vunpack.c.l.b16 %v637
      %v648 = vunpack.c.l.b16 %v638
      %v649 = vunpack.c.l.b16 %v639
      %v650 = vpack.c.b16 %v647, %v646
      %v651 = vpack.c.b16 %v649, %v648
      %v655 = vsel %vm250, %v640, 0
      %v658 = vsel %vm250, %v641, 0
      %660 = vmatprep.subr.bf16.mxu0 0
      %661 = vmatpush1.bf16.msra.mxu0 %v650
      %662 = vmatprep.subr.bf16.mxu0 0
      %663 = vmatpush1.bf16.msra.mxu0 %v651
      %664 = vmatprep.subr.bf16.mxu0 0
      %665 = vmatpush1.bf16.msra.mxu0 0
      %666 = vmatprep.subr.bf16.mxu0 0
      %667 = vmatpush1.bf16.msra.mxu0 0
      %668 = vmatprep.subr.bf16.mxu0 0
      %669 = vmatpush1.bf16.msra.mxu0 0
      %670 = vmatprep.subr.bf16.mxu0 0
      %671 = vmatpush1.bf16.msra.mxu0 0
      %672 = vmatprep.subr.bf16.mxu0 0
      %673 = vmatpush1.bf16.msra.mxu0 0
      %674 = vmatprep.subr.bf16.mxu0 0
      %675 = vmatpush1.bf16.msra.mxu0 0
      %676 = vmatprep.subr.bf16.mxu0 0
      %677 = vmatpush1.bf16.msra.mxu0 0
      %678 = vmatprep.subr.bf16.mxu0 0
      %679 = vmatpush1.bf16.msra.mxu0 0
      %680 = vmatprep.subr.bf16.mxu0 0
      %681 = vmatpush1.bf16.msra.mxu0 0
      %682 = vmatprep.subr.bf16.mxu0 0
      %683 = vmatpush1.bf16.msra.mxu0 0
      %684 = vmatprep.subr.bf16.mxu0 0
      %685 = vmatpush1.bf16.msra.mxu0 0
      %686 = vmatprep.subr.bf16.mxu0 0
      %687 = vmatpush1.bf16.msra.mxu0 0
      %688 = vmatprep.subr.bf16.mxu0 0
      %689 = vmatpush1.bf16.msra.mxu0 0
      %690 = vmatprep.subr.bf16.mxu0 0
      %691 = vmatpush1.bf16.msra.mxu0 0
      %692 = vmatprep.mubr.bf16.mxu0 0
      %693 = vmatmul.mubr.bf16.gmra.mrb[0].mxu0 %v655
      %v694 = vpop.f32.mrb[0].mxu0
      %v695 = vadd.f32 0.0, %v694
      %v696 = vpop.f32.mrb[0].mxu0
      %v697 = vpop.f32.mrb[0].mxu0
      %v698 = vadd.f32 0.0, %v697
      %v699 = vpop.f32.mrb[0].mxu0
      %700 = vmatprep.mubr.bf16.mxu0 0
      %701 = vmatmul.mubr.bf16.gmra.mrb[0].mxu0 %v658
      %v702 = vpop.f32.mrb[0].mxu0
      %v703 = vadd.f32 0.0, %v702
      %v704 = vpop.f32.mrb[0].mxu0
      %v705 = vpop.f32.mrb[0].mxu0
      %v706 = vpop.f32.mrb[0].mxu0
      %707 = vdwg.mxu0
      %v708 = vadd.f32 %v632, %v695
      %v709 = vadd.f32 %v633, %v698
      %v710 = vadd.f32 %v634, %v703
      %v711 = vld [vmem:[%s192 + $0x4] sm:$0xc]
      %v712 = vld [vmem:[%s192 + $0x8] sm:$0xf]
      %v713 = vld [vmem:[%s192 + $0xc] sm:$0xf]
      %v714 = vld [vmem:[%s192 + $0x10] sm:$0x3]
      %s715 = scalar_lea.vmem %s1, 96
      %v716 = vld [vmem:[%s715] sm:$0xf]
      %v717 = vld [vmem:[%s715 + $0x4] sm:$0xf]
      %v718 = vld [vmem:[%s715 + $0x8] sm:$0xf]
      %v719 = vld [vmem:[%s715 + $0xc] sm:$0xf]
      %v724 = vunpack.c.l.b16 %v711
      %v725 = vunpack.c.l.b16 %v712
      %v726 = vunpack.c.l.b16 %v713
      %v727 = vunpack.c.l.b16 %v714
      %v728 = vpack.c.b16 %v725, %v724
      %v729 = vpack.c.b16 %v727, %v726
      %vm730 = vcmask 1045504
      %v731 = vrot.slane %v728, 2
      %v732 = vrot.slane %v729, 2
      %v733 = vsel %vm730, %v731, %v732
      %v738 = vunpack.c.l.b16 %v716
      %v739 = vunpack.c.l.b16 %v717
      %v740 = vunpack.c.l.b16 %v718
      %v741 = vunpack.c.l.b16 %v719
      %v742 = vpack.c.b16 %v739, %v738
      %v743 = vpack.c.b16 %v741, %v740
      %v747 = vsel %vm250, %v733, 0
      %v750 = vsel %vm250, %v732, 0
      %752 = vmatprep.subr.bf16.mxu0 0
      %753 = vmatpush1.bf16.msra.mxu0 %v742
      %754 = vmatprep.subr.bf16.mxu0 0
      %755 = vmatpush1.bf16.msra.mxu0 %v743
      %756 = vmatprep.subr.bf16.mxu0 0
      %757 = vmatpush1.bf16.msra.mxu0 0
      %758 = vmatprep.subr.bf16.mxu0 0
      %759 = vmatpush1.bf16.msra.mxu0 0
      %760 = vmatprep.subr.bf16.mxu0 0
      %761 = vmatpush1.bf16.msra.mxu0 0
      %762 = vmatprep.subr.bf16.mxu0 0
      %763 = vmatpush1.bf16.msra.mxu0 0
      %764 = vmatprep.subr.bf16.mxu0 0
      %765 = vmatpush1.bf16.msra.mxu0 0
      %766 = vmatprep.subr.bf16.mxu0 0
      %767 = vmatpush1.bf16.msra.mxu0 0
      %768 = vmatprep.subr.bf16.mxu0 0
      %769 = vmatpush1.bf16.msra.mxu0 0
      %770 = vmatprep.subr.bf16.mxu0 0
      %771 = vmatpush1.bf16.msra.mxu0 0
      %772 = vmatprep.subr.bf16.mxu0 0
      %773 = vmatpush1.bf16.msra.mxu0 0
      %774 = vmatprep.subr.bf16.mxu0 0
      %775 = vmatpush1.bf16.msra.mxu0 0
      %776 = vmatprep.subr.bf16.mxu0 0
      %777 = vmatpush1.bf16.msra.mxu0 0
      %778 = vmatprep.subr.bf16.mxu0 0
      %779 = vmatpush1.bf16.msra.mxu0 0
      %780 = vmatprep.subr.bf16.mxu0 0
      %781 = vmatpush1.bf16.msra.mxu0 0
      %782 = vmatprep.subr.bf16.mxu0 0
      %783 = vmatpush1.bf16.msra.mxu0 0
      %784 = vmatprep.mubr.bf16.mxu0 0
      %785 = vmatmul.mubr.bf16.gmra.mrb[0].mxu0 %v747
      %v786 = vpop.f32.mrb[0].mxu0
      %v787 = vadd.f32 0.0, %v786
      %v788 = vpop.f32.mrb[0].mxu0
      %v789 = vpop.f32.mrb[0].mxu0
      %v790 = vadd.f32 0.0, %v789
      %v791 = vpop.f32.mrb[0].mxu0
      %792 = vmatprep.mubr.bf16.mxu0 0
      %793 = vmatmul.mubr.bf16.gmra.mrb[0].mxu0 %v750
      %v794 = vpop.f32.mrb[0].mxu0
      %v795 = vadd.f32 0.0, %v794
      %v796 = vpop.f32.mrb[0].mxu0
      %v797 = vpop.f32.mrb[0].mxu0
      %v798 = vpop.f32.mrb[0].mxu0
      %799 = vdwg.mxu0
      %v800 = vadd.f32 %v708, %v787
      %v801 = vadd.f32 %v709, %v790
      %v802 = vadd.f32 %v710, %v795
      %v803 = vld [vmem:[%s192 + $0x10] sm:$0x7]
      %s804 = scalar_lea.vmem %s1, 112
      %v805 = vld [vmem:[%s804] sm:$0xf]
      %v806 = vld [vmem:[%s804 + $0x4] sm:$0xf]
      %v807 = vld [vmem:[%s804 + $0x8] sm:$0xf]
      %v808 = vld [vmem:[%s804 + $0xc] sm:$0xf]
      %v810 = vunpack.c.l.b16 %v803
      %v811 = vpack.c.b16 %v810, %v726
      %vm812 = vsmask.f32 5376
      %v814 = vshrl.u32 %v728, 16
      %v816 = vrot.slane %v814, 2
      %v817 = vshll.u32 %v728, 16
      %v819 = vrot.slane %v817, 3
      %v820 = vor.u32 %v816, %v819
      %v822 = vshrl.u32 %v811, 16
      %v824 = vrot.slane %v822, 2
      %v825 = vshll.u32 %v811, 16
      %v827 = vrot.slane %v825, 3
      %v828 = vor.u32 %v824, %v827
      %v829 = vsel %vm812, %v820, %v828
      %v834 = vunpack.c.l.b16 %v805
      %v835 = vunpack.c.l.b16 %v806
      %v836 = vunpack.c.l.b16 %v807
      %v837 = vunpack.c.l.b16 %v808
      %v838 = vpack.c.b16 %v835, %v834
      %v839 = vpack.c.b16 %v837, %v836
      %v843 = vsel %vm250, %v829, 0
      %v846 = vsel %vm250, %v828, 0
      %848 = vmatprep.subr.bf16.mxu0 0
      %849 = vmatpush1.bf16.msra.mxu0 %v838
      %850 = vmatprep.subr.bf16.mxu0 0
      %851 = vmatpush1.bf16.msra.mxu0 %v839
      %852 = vmatprep.subr.bf16.mxu0 0
      %853 = vmatpush1.bf16.msra.mxu0 0
      %854 = vmatprep.subr.bf16.mxu0 0
      %855 = vmatpush1.bf16.msra.mxu0 0
      %856 = vmatprep.subr.bf16.mxu0 0
      %857 = vmatpush1.bf16.msra.mxu0 0
      %858 = vmatprep.subr.bf16.mxu0 0
      %859 = vmatpush1.bf16.msra.mxu0 0
      %860 = vmatprep.subr.bf16.mxu0 0
      %861 = vmatpush1.bf16.msra.mxu0 0
      %862 = vmatprep.subr.bf16.mxu0 0
      %863 = vmatpush1.bf16.msra.mxu0 0
      %864 = vmatprep.subr.bf16.mxu0 0
      %865 = vmatpush1.bf16.msra.mxu0 0
      %866 = vmatprep.subr.bf16.mxu0 0
      %867 = vmatpush1.bf16.msra.mxu0 0
      %868 = vmatprep.subr.bf16.mxu0 0
      %869 = vmatpush1.bf16.msra.mxu0 0
      %870 = vmatprep.subr.bf16.mxu0 0
      %871 = vmatpush1.bf16.msra.mxu0 0
      %872 = vmatprep.subr.bf16.mxu0 0
      %873 = vmatpush1.bf16.msra.mxu0 0
      %874 = vmatprep.subr.bf16.mxu0 0
      %875 = vmatpush1.bf16.msra.mxu0 0
      %876 = vmatprep.subr.bf16.mxu0 0
      %877 = vmatpush1.bf16.msra.mxu0 0
      %878 = vmatprep.subr.bf16.mxu0 0
      %879 = vmatpush1.bf16.msra.mxu0 0
      %880 = vmatprep.mubr.bf16.mxu0 0
      %881 = vmatmul.mubr.bf16.gmra.mrb[0].mxu0 %v843
      %v882 = vpop.f32.mrb[0].mxu0
      %v883 = vadd.f32 0.0, %v882
      %v884 = vpop.f32.mrb[0].mxu0
      %v885 = vpop.f32.mrb[0].mxu0
      %v886 = vadd.f32 0.0, %v885
      %v887 = vpop.f32.mrb[0].mxu0
      %888 = vmatprep.mubr.bf16.mxu0 0
      %889 = vmatmul.mubr.bf16.gmra.mrb[0].mxu0 %v846
      %v890 = vpop.f32.mrb[0].mxu0
      %v891 = vadd.f32 0.0, %v890
      %v892 = vpop.f32.mrb[0].mxu0
      %v893 = vpop.f32.mrb[0].mxu0
      %v894 = vpop.f32.mrb[0].mxu0
      %895 = vdwg.mxu0
      %v896 = vadd.f32 %v800, %v883
      %v897 = vadd.f32 %v801, %v886
      %v898 = vadd.f32 %v802, %v891
      %v899 = vld [vmem:[%s192 + $0x4] sm:$0x8]
      %s900 = scalar_lea.vmem %s1, 128
      %v901 = vld [vmem:[%s900] sm:$0xf]
      %v902 = vld [vmem:[%s900 + $0x4] sm:$0xf]
      %v903 = vld [vmem:[%s900 + $0x8] sm:$0xf]
      %v904 = vld [vmem:[%s900 + $0xc] sm:$0xf]
      %v906 = vunpack.c.l.b16 %v899
      %v907 = vpack.c.b16 %v725, %v906
      %v908 = vrot.slane %v907, 3
      %v909 = vrot.slane %v811, 3
      %v910 = vsel %vm466, %v908, %v909
      %v915 = vunpack.c.l.b16 %v901
      %v916 = vunpack.c.l.b16 %v902
      %v917 = vunpack.c.l.b16 %v903
      %v918 = vunpack.c.l.b16 %v904
      %v919 = vpack.c.b16 %v916, %v915
      %v920 = vpack.c.b16 %v918, %v917
      %v924 = vsel %vm250, %v910, 0
      %v927 = vsel %vm250, %v909, 0
      %929 = vmatprep.subr.bf16.mxu0 0
      %930 = vmatpush1.bf16.msra.mxu0 %v919
      %931 = vmatprep.subr.bf16.mxu0 0
      %932 = vmatpush1.bf16.msra.mxu0 %v920
      %933 = vmatprep.subr.bf16.mxu0 0
      %934 = vmatpush1.bf16.msra.mxu0 0
      %935 = vmatprep.subr.bf16.mxu0 0
      %936 = vmatpush1.bf16.msra.mxu0 0
      %937 = vmatprep.subr.bf16.mxu0 0
      %938 = vmatpush1.bf16.msra.mxu0 0
      %939 = vmatprep.subr.bf16.mxu0 0
      %940 = vmatpush1.bf16.msra.mxu0 0
      %941 = vmatprep.subr.bf16.mxu0 0
      %942 = vmatpush1.bf16.msra.mxu0 0
      %943 = vmatprep.subr.bf16.mxu0 0
      %944 = vmatpush1.bf16.msra.mxu0 0
      %945 = vmatprep.subr.bf16.mxu0 0
      %946 = vmatpush1.bf16.msra.mxu0 0
      %947 = vmatprep.subr.bf16.mxu0 0
      %948 = vmatpush1.bf16.msra.mxu0 0
      %949 = vmatprep.subr.bf16.mxu0 0
      %950 = vmatpush1.bf16.msra.mxu0 0
      %951 = vmatprep.subr.bf16.mxu0 0
      %952 = vmatpush1.bf16.msra.mxu0 0
      %953 = vmatprep.subr.bf16.mxu0 0
      %954 = vmatpush1.bf16.msra.mxu0 0
      %955 = vmatprep.subr.bf16.mxu0 0
      %956 = vmatpush1.bf16.msra.mxu0 0
      %957 = vmatprep.subr.bf16.mxu0 0
      %958 = vmatpush1.bf16.msra.mxu0 0
      %959 = vmatprep.subr.bf16.mxu0 0
      %960 = vmatpush1.bf16.msra.mxu0 0
      %961 = vmatprep.mubr.bf16.mxu0 0
      %962 = vmatmul.mubr.bf16.gmra.mrb[0].mxu0 %v924
      %v963 = vpop.f32.mrb[0].mxu0
      %v964 = vadd.f32 0.0, %v963
      %v965 = vpop.f32.mrb[0].mxu0
      %v966 = vpop.f32.mrb[0].mxu0
      %v967 = vadd.f32 0.0, %v966
      %v968 = vpop.f32.mrb[0].mxu0
      %969 = vmatprep.mubr.bf16.mxu0 0
      %970 = vmatmul.mubr.bf16.gmra.mrb[0].mxu0 %v927
      %v971 = vpop.f32.mrb[0].mxu0
      %v972 = vadd.f32 0.0, %v971
      %v973 = vpop.f32.mrb[0].mxu0
      %v974 = vpop.f32.mrb[0].mxu0
      %v975 = vpop.f32.mrb[0].mxu0
      %976 = vdwg.mxu0
      %v977 = vadd.f32 %v896, %v964
      %v978 = vadd.f32 %v897, %v967
      %v979 = vadd.f32 %v898, %v972
      %v980 = vsel %vm250, %v977, 0.0
      %981 = vadd.xlane.f32.xlu0 %v980
      %v982 = vpop.xlane.xlu0 %981
      %v983 = vsel %vm250, %v978, 0.0
      %984 = vadd.xlane.f32.xlu0 %v983
      %v985 = vpop.xlane.xlu0 %984
      %v986 = vsel %vm250, %v979, 0.0
      %987 = vadd.xlane.f32.xlu0 %v986
      %v988 = vpop.xlane.xlu0 %987
      %v989 = vrcp.pop 32.0
      %v990 = vmul.f32 %v982, %v989
      %v991 = vmul.f32 %v985, %v989
      %v992 = vmul.f32 %v988, %v989
      %v993 = vsub.f32 %v977, %v990
      %v994 = vsub.f32 %v978, %v991
      %v995 = vsub.f32 %v979, %v992
      %v996 = vmul.f32 %v993, %v993
      %v997 = vmul.f32 %v994, %v994
      %v998 = vmul.f32 %v995, %v995
      %v999 = vsel %vm250, %v996, 0.0
      %1000 = vadd.xlane.f32.xlu0 %v999
      %v1001 = vpop.xlane.xlu0 %1000
      %v1002 = vsel %vm250, %v997, 0.0
      %1003 = vadd.xlane.f32.xlu0 %v1002
      %v1004 = vpop.xlane.xlu0 %1003
      %v1005 = vsel %vm250, %v998, 0.0
      %1006 = vadd.xlane.f32.xlu0 %v1005
      %v1007 = vpop.xlane.xlu0 %1006
      %v1008 = vmul.f32 %v1001, %v989
      %v1009 = vmul.f32 %v1004, %v989
      %v1010 = vmul.f32 %v1007, %v989
      %v1011 = vadd.f32 %v1008, 1e-06
      %v1012 = vadd.f32 %v1009, 1e-06
      %v1013 = vadd.f32 %v1010, 1e-06
      %v1014 = vrsqrt.pop %v1011
      %v1015 = vrsqrt.pop %v1012
      %v1016 = vrsqrt.pop %v1013
      %v1017 = vmul.f32 %v993, %v1014
      %v1018 = vmul.f32 %v994, %v1015
      %v1019 = vmul.f32 %v995, %v1016
      %v1020 = vld [vmem:[%s2] sm:$0x1]
      %v1022 = vlaneseq
      %v1023 = vshrl.u32 %v1022, 7
      %v1024 = vsub.s32 0, %v1023
      %v1025 = vrot.slane %v1020, %v1024
      %v1027 = vmul.f32 %v1017, %v1025
      %v1028 = vmul.f32 %v1018, %v1025
      %v1029 = vmul.f32 %v1019, %v1025
      %v1030 = vld [vmem:[%s3] sm:$0x1]
      %v1032 = vlaneseq
      %v1033 = vshrl.u32 %v1032, 7
      %v1034 = vsub.s32 0, %v1033
      %v1035 = vrot.slane %v1030, %v1034
      %v1037 = vadd.f32 %v1027, %v1035
      %v1038 = vadd.f32 %v1028, %v1035
      %v1039 = vadd.f32 %v1029, %v1035
      %1040 = vst.msk [vmem:[%s197] sm:$0xff] %vm250, %v1037
      %1041 = vst.msk [vmem:[%s197 + $0x8] sm:$0xff] %vm250, %v1038
      %1042 = vst.msk [vmem:[%s197 + $0x10] sm:$0xff] %vm250, %v1039
      %p1043 = scmp.lt.s32.totalorder %s15, 1
      %s1044 = scalar_select %p1043, %s15, 1
      %s1045 = smul.addr %s1044, 3
      %s1046 = smul.addr %s1045, 8
      %s1047 = scalar_lea.vmem %s4, %s1046
      // Predicated region
      $region37: #{_lambda_.30} parent=35 // pred_check
        %p1048 = pneg %p122
      $region38: #{_lambda_.30} parent=35 // pred_check_branch
        %1050 = sbr.rel (%p1048) target = $region40
      $region39: #{_lambda_.30} parent=35 // pred_region
        _
      $region40: #{_lambda_.30} parent=35 // pred_fallthru
        _
    $region36: #{_lambda_.30} parent=5 // pred_fallthru
      _
    %p1051 = scmp.le.s32.totalorder 2, %s10
    // Predicated region
    $region41: #{_lambda_.30} parent=5 // pred_check
      %p1052 = pneg %p1051
    $region42: #{_lambda_.30} parent=5 // pred_check_branch
      %1054 = sbr.rel (%p1052) target = $region44
    $region43: #{_lambda_.30} parent=5 // pred_region
      %s1055 = ssub.s32 %s10, 2
      // Predicated region
      $region45: #{_lambda_.30} parent=43 // pred_check
        %p1056 = pneg %p128
      $region46: #{_lambda_.30} parent=43 // pred_check_branch
        %1058 = sbr.rel (%p1056) target = $region48
      $region47: #{_lambda_.30} parent=43 // pred_region
        %p1059 = scmp.lt.s32.totalorder %s16, 1
        %s1060 = scalar_select %p1059, %s16, 1
        %s1061 = smul.addr %s1060, 3
        %s1062 = smul.addr %s1061, 8
        %s1063 = scalar_lea.vmem %s4, %s1062
      $region48: #{_lambda_.30} parent=43 // pred_fallthru
        _
    $region44: #{_lambda_.30} parent=5 // pred_fallthru
      _
  $region6: #{_lambda_.30} parent=0 // loop_footer
    %s14 = sadd.s32 1, %s10
  $region7: #{_lambda_.30} parent=0 // loop_footer_branch
    %9 = sbr.rel target = $region3
  $region8: #{_lambda_.30} parent=0 // loop_exit
    _

// kernel: _lambda_.31
$region0: #{_lambda_.31}
  #allocation0 [shape = 'u32[]', space=smem, size = 0x4, offset = 0x4, fixed_abs, tag = 'smem constant byte address 0x4 - core index']
  #allocation1 [shape = 'u32[144,128]{1,0:T(1,128)}', space=vmem, size = 0x12000, scoped, tag = 'internal scratch']
  #allocation2 [shape = 'f32[32,32]{1,0:T(8,128)}', space=vmem, size = 0x4000, scoped, tag = 'scratch operand']
  %s0 = inlined_call_operand.vmem [shape: bf16[32,32], index: 0, kind: input, shape index: {}]
  %s1 = inlined_call_operand.vmem [shape: bf16[32,32], index: 1, kind: input, shape index: {}]
  %s2 = inlined_call_operand.vmem [shape: f32[1,32], index: 2, kind: input, shape index: {}]
  %s3 = inlined_call_operand.vmem [shape: f32[32,32], index: 3, kind: output, shape index: {}]
  %s4 = sld [smem:[#allocation0]]
  $region30: #{_lambda_.31} parent=0
    _
  %s6 = ssub.s32 1, %s4
  %s7 = scalar_select 0, %s6, %s4
  // Predicated region
  $region2: #{_lambda_.31} parent=0 // pred_check
    _
  $region3: #{_lambda_.31} parent=0 // pred_check_branch
    %9 = sbr.rel (0) target = $region5
  $region4: #{_lambda_.31} parent=0 // pred_region
    _
  $region5: #{_lambda_.31} parent=0 // pred_fallthru
    _
  // Predicated region
  $region6: #{_lambda_.31} parent=0 // pred_check
    _
  $region7: #{_lambda_.31} parent=0 // pred_check_branch
    %11 = sbr.rel (0) target = $region9
  $region8: #{_lambda_.31} parent=0 // pred_region
    _
  $region9: #{_lambda_.31} parent=0 // pred_fallthru
    _
  // Predicated region
  $region10: #{_lambda_.31} parent=0 // pred_check
    _
  $region11: #{_lambda_.31} parent=0 // pred_check_branch
    %13 = sbr.rel (0) target = $region13
  $region12: #{_lambda_.31} parent=0 // pred_region
    _
  $region13: #{_lambda_.31} parent=0 // pred_fallthru
    _
  %p15 = scmp.eq.s32.totalorder 0, 0
  // Predicated region
  $region14: #{_lambda_.31} parent=0 // pred_check
    %p16 = pneg %p15
  $region15: #{_lambda_.31} parent=0 // pred_check_branch
    %18 = sbr.rel (%p16) target = $region17
  $region16: #{_lambda_.31} parent=0 // pred_region
    %vm19 = vcmask 261120
    %20 = vst.msk [vmem:[#allocation2] sm:$0xff] %vm19, 0.0
    %21 = vst.msk [vmem:[#allocation2 + $0x8] sm:$0xff] %vm19, 0.0
    %22 = vst.msk [vmem:[#allocation2 + $0x10] sm:$0xff] %vm19, 0.0
    %23 = vst.msk [vmem:[#allocation2 + $0x18] sm:$0xff] %vm19, 0.0
  $region17: #{_lambda_.31} parent=0 // pred_fallthru
    _
  %v24 = vld [vmem:[#allocation2] sm:$0xff]
  %v25 = vld [vmem:[#allocation2 + $0x8] sm:$0xff]
  %v26 = vld [vmem:[#allocation2 + $0x10] sm:$0xff]
  %v27 = vld [vmem:[#allocation2 + $0x18] sm:$0xff]
  %v28 = vld [vmem:[%s0] sm:$0xf]
  %v29 = vld [vmem:[%s0 + $0x4] sm:$0xf]
  %v30 = vld [vmem:[%s0 + $0x8] sm:$0xf]
  %v31 = vld [vmem:[%s0 + $0xc] sm:$0xf]
  %v32 = vld [vmem:[%s1] sm:$0xf]
  %v33 = vld [vmem:[%s1 + $0x4] sm:$0xf]
  %v34 = vld [vmem:[%s1 + $0x8] sm:$0xf]
  %v35 = vld [vmem:[%s1 + $0xc] sm:$0xf]
  %v40 = vunpack.c.l.b16 %v28
  %v41 = vunpack.c.l.b16 %v29
  %v42 = vunpack.c.l.b16 %v30
  %v43 = vunpack.c.l.b16 %v31
  %v44 = vpack.c.b16 %v41, %v40
  %v45 = vpack.c.b16 %v43, %v42
  %v50 = vunpack.c.l.b16 %v32
  %v51 = vunpack.c.l.b16 %v33
  %v52 = vunpack.c.l.b16 %v34
  %v53 = vunpack.c.l.b16 %v35
  %v54 = vpack.c.b16 %v51, %v50
  %v55 = vpack.c.b16 %v53, %v52
  %vm58 = vcmask 261120
  %v60 = vsel %vm58, %v44, 0
  %v63 = vsel %vm58, %v45, 0
  %65 = vmatprep.subr.bf16.mxu0 0
  %66 = vmatpush1.bf16.msra.mxu0 %v54
  %67 = vmatprep.subr.bf16.mxu0 0
  %68 = vmatpush1.bf16.msra.mxu0 %v55
  %69 = vmatprep.subr.bf16.mxu0 0
  %70 = vmatpush1.bf16.msra.mxu0 0
  %71 = vmatprep.subr.bf16.mxu0 0
  %72 = vmatpush1.bf16.msra.mxu0 0
  %73 = vmatprep.subr.bf16.mxu0 0
  %74 = vmatpush1.bf16.msra.mxu0 0
  %75 = vmatprep.subr.bf16.mxu0 0
  %76 = vmatpush1.bf16.msra.mxu0 0
  %77 = vmatprep.subr.bf16.mxu0 0
  %78 = vmatpush1.bf16.msra.mxu0 0
  %79 = vmatprep.subr.bf16.mxu0 0
  %80 = vmatpush1.bf16.msra.mxu0 0
  %81 = vmatprep.subr.bf16.mxu0 0
  %82 = vmatpush1.bf16.msra.mxu0 0
  %83 = vmatprep.subr.bf16.mxu0 0
  %84 = vmatpush1.bf16.msra.mxu0 0
  %85 = vmatprep.subr.bf16.mxu0 0
  %86 = vmatpush1.bf16.msra.mxu0 0
  %87 = vmatprep.subr.bf16.mxu0 0
  %88 = vmatpush1.bf16.msra.mxu0 0
  %89 = vmatprep.subr.bf16.mxu0 0
  %90 = vmatpush1.bf16.msra.mxu0 0
  %91 = vmatprep.subr.bf16.mxu0 0
  %92 = vmatpush1.bf16.msra.mxu0 0
  %93 = vmatprep.subr.bf16.mxu0 0
  %94 = vmatpush1.bf16.msra.mxu0 0
  %95 = vmatprep.subr.bf16.mxu0 0
  %96 = vmatpush1.bf16.msra.mxu0 0
  %97 = vmatprep.mubr.bf16.mxu0 0
  %98 = vmatmul.mubr.bf16.gmra.mrb[0].mxu0 %v60
  %v99 = vpop.f32.mrb[0].mxu0
  %v100 = vadd.f32 0.0, %v99
  %v101 = vpop.f32.mrb[0].mxu0
  %v102 = vpop.f32.mrb[0].mxu0
  %v103 = vadd.f32 0.0, %v102
  %v104 = vpop.f32.mrb[0].mxu0
  %105 = vmatprep.mubr.bf16.mxu0 0
  %106 = vmatmul.mubr.bf16.gmra.mrb[0].mxu0 %v63
  %v107 = vpop.f32.mrb[0].mxu0
  %v108 = vadd.f32 0.0, %v107
  %v109 = vpop.f32.mrb[0].mxu0
  %v110 = vpop.f32.mrb[0].mxu0
  %v111 = vadd.f32 0.0, %v110
  %v112 = vpop.f32.mrb[0].mxu0
  %113 = vdwg.mxu0
  %v114 = vadd.f32 %v24, %v100
  %v115 = vadd.f32 %v25, %v103
  %v116 = vadd.f32 %v26, %v108
  %v117 = vadd.f32 %v27, %v111
  %118 = vst.msk [vmem:[#allocation2] sm:$0xff] %vm58, %v114
  %119 = vst.msk [vmem:[#allocation2 + $0x8] sm:$0xff] %vm58, %v115
  %120 = vst.msk [vmem:[#allocation2 + $0x10] sm:$0xff] %vm58, %v116
  %121 = vst.msk [vmem:[#allocation2 + $0x18] sm:$0xff] %vm58, %v117
  // Predicated region
  $region18: #{_lambda_.31} parent=0 // pred_check
    %p122 = pneg %p15
  $region19: #{_lambda_.31} parent=0 // pred_check_branch
    %124 = sbr.rel (%p122) target = $region21
  $region20: #{_lambda_.31} parent=0 // pred_region
    %v125 = vld [vmem:[#allocation2] sm:$0xff]
    %v126 = vld [vmem:[#allocation2 + $0x8] sm:$0xff]
    %v127 = vld [vmem:[#allocation2 + $0x10] sm:$0xff]
    %v128 = vld [vmem:[#allocation2 + $0x18] sm:$0xff]
    %v129 = vld [vmem:[%s2] sm:$0x1]
    %v131 = vlaneseq
    %v132 = vshrl.u32 %v131, 7
    %v133 = vsub.s32 0, %v132
    %v134 = vrot.slane %v129, %v133
    %v136 = vadd.f32 %v125, %v134
    %v137 = vadd.f32 %v126, %v134
    %v138 = vadd.f32 %v127, %v134
    %v139 = vadd.f32 %v128, %v134
    %140 = vst.msk [vmem:[%s3] sm:$0xff] %vm58, %v136
    %141 = vst.msk [vmem:[%s3 + $0x8] sm:$0xff] %vm58, %v137
    %142 = vst.msk [vmem:[%s3 + $0x10] sm:$0xff] %vm58, %v138
    %143 = vst.msk [vmem:[%s3 + $0x18] sm:$0xff] %vm58, %v139
  $region21: #{_lambda_.31} parent=0 // pred_fallthru
    _
  // Predicated region
  $region22: #{_lambda_.31} parent=0 // pred_check
    _
  $region23: #{_lambda_.31} parent=0 // pred_check_branch
    %145 = sbr.rel (0) target = $region25
  $region24: #{_lambda_.31} parent=0 // pred_region
    _
  $region25: #{_lambda_.31} parent=0 // pred_fallthru
    _
  // Predicated region
  $region26: #{_lambda_.31} parent=0 // pred_check
    _
  $region27: #{_lambda_.31} parent=0 // pred_check_branch
    %147 = sbr.rel (0) target = $region29
  $region28: #{_lambda_.31} parent=0 // pred_region
    _
  $region29: #{_lambda_.31} parent=0 // pred_fallthru
    _

// kernel: _lambda_.32
$region0: #{_lambda_.32}
  #allocation0 [shape = 'u32[]', space=smem, size = 0x4, offset = 0x4, fixed_abs, tag = 'smem constant byte address 0x4 - core index']
  #allocation1 [shape = 'u32[144,128]{1,0:T(1,128)}', space=vmem, size = 0x12000, scoped, tag = 'internal scratch']
  %s0 = inlined_call_operand.vmem [shape: f32[128,8], index: 0, kind: input, shape index: {}]
  %s1 = inlined_call_operand.vmem [shape: f32[1,8], index: 1, kind: input, shape index: {}]
  %s2 = inlined_call_operand.vmem [shape: f32[1,8], index: 2, kind: input, shape index: {}]
  %s3 = inlined_call_operand.vmem [shape: f32[128,8], index: 3, kind: output, shape index: {}]
  %s4 = sld [smem:[#allocation0]]
  $region22: #{_lambda_.32} parent=0
    _
  %s6 = ssub.s32 1, %s4
  %s7 = scalar_select 0, %s6, %s4
  // Predicated region
  $region2: #{_lambda_.32} parent=0 // pred_check
    _
  $region3: #{_lambda_.32} parent=0 // pred_check_branch
    %9 = sbr.rel (0) target = $region5
  $region4: #{_lambda_.32} parent=0 // pred_region
    _
  $region5: #{_lambda_.32} parent=0 // pred_fallthru
    _
  // Predicated region
  $region6: #{_lambda_.32} parent=0 // pred_check
    _
  $region7: #{_lambda_.32} parent=0 // pred_check_branch
    %11 = sbr.rel (0) target = $region9
  $region8: #{_lambda_.32} parent=0 // pred_region
    _
  $region9: #{_lambda_.32} parent=0 // pred_fallthru
    _
  // Predicated region
  $region10: #{_lambda_.32} parent=0 // pred_check
    _
  $region11: #{_lambda_.32} parent=0 // pred_check_branch
    %13 = sbr.rel (0) target = $region13
  $region12: #{_lambda_.32} parent=0 // pred_region
    _
  $region13: #{_lambda_.32} parent=0 // pred_fallthru
    _
  %v14 = vld [vmem:[%s0] sm:$0xff]
  %v15 = vld [vmem:[%s0 + $0x8] sm:$0xff]
  %v16 = vld [vmem:[%s0 + $0x10] sm:$0xff]
  %v17 = vld [vmem:[%s0 + $0x18] sm:$0xff]
  %v18 = vld [vmem:[%s0 + $0x20] sm:$0xff]
  %v19 = vld [vmem:[%s0 + $0x28] sm:$0xff]
  %v20 = vld [vmem:[%s0 + $0x30] sm:$0xff]
  %v21 = vld [vmem:[%s0 + $0x38] sm:$0xff]
  %v22 = vld [vmem:[%s0 + $0x40] sm:$0xff]
  %v23 = vld [vmem:[%s0 + $0x48] sm:$0xff]
  %v24 = vld [vmem:[%s0 + $0x50] sm:$0xff]
  %v25 = vld [vmem:[%s0 + $0x58] sm:$0xff]
  %v26 = vld [vmem:[%s0 + $0x60] sm:$0xff]
  %v27 = vld [vmem:[%s0 + $0x68] sm:$0xff]
  %v28 = vld [vmem:[%s0 + $0x70] sm:$0xff]
  %v29 = vld [vmem:[%s0 + $0x78] sm:$0xff]
  %vm30 = vcmask 64512
  %v31 = vsel %vm30, %v14, 0.0
  %32 = vadd.xlane.f32.xlu0 %v31
  %v33 = vpop.xlane.xlu0 %32
  %v34 = vsel %vm30, %v15, 0.0
  %35 = vadd.xlane.f32.xlu0 %v34
  %v36 = vpop.xlane.xlu0 %35
  %v37 = vsel %vm30, %v16, 0.0
  %38 = vadd.xlane.f32.xlu0 %v37
  %v39 = vpop.xlane.xlu0 %38
  %v40 = vsel %vm30, %v17, 0.0
  %41 = vadd.xlane.f32.xlu0 %v40
  %v42 = vpop.xlane.xlu0 %41
  %v43 = vsel %vm30, %v18, 0.0
  %44 = vadd.xlane.f32.xlu0 %v43
  %v45 = vpop.xlane.xlu0 %44
  %v46 = vsel %vm30, %v19, 0.0
  %47 = vadd.xlane.f32.xlu0 %v46
  %v48 = vpop.xlane.xlu0 %47
  %v49 = vsel %vm30, %v20, 0.0
  %50 = vadd.xlane.f32.xlu0 %v49
  %v51 = vpop.xlane.xlu0 %50
  %v52 = vsel %vm30, %v21, 0.0
  %53 = vadd.xlane.f32.xlu0 %v52
  %v54 = vpop.xlane.xlu0 %53
  %v55 = vsel %vm30, %v22, 0.0
  %56 = vadd.xlane.f32.xlu0 %v55
  %v57 = vpop.xlane.xlu0 %56
  %v58 = vsel %vm30, %v23, 0.0
  %59 = vadd.xlane.f32.xlu0 %v58
  %v60 = vpop.xlane.xlu0 %59
  %v61 = vsel %vm30, %v24, 0.0
  %62 = vadd.xlane.f32.xlu0 %v61
  %v63 = vpop.xlane.xlu0 %62
  %v64 = vsel %vm30, %v25, 0.0
  %65 = vadd.xlane.f32.xlu0 %v64
  %v66 = vpop.xlane.xlu0 %65
  %v67 = vsel %vm30, %v26, 0.0
  %68 = vadd.xlane.f32.xlu0 %v67
  %v69 = vpop.xlane.xlu0 %68
  %v70 = vsel %vm30, %v27, 0.0
  %71 = vadd.xlane.f32.xlu0 %v70
  %v72 = vpop.xlane.xlu0 %71
  %v73 = vsel %vm30, %v28, 0.0
  %74 = vadd.xlane.f32.xlu0 %v73
  %v75 = vpop.xlane.xlu0 %74
  %v76 = vsel %vm30, %v29, 0.0
  %77 = vadd.xlane.f32.xlu0 %v76
  %v78 = vpop.xlane.xlu0 %77
  %v79 = vrcp.pop 8.0
  %v80 = vmul.f32 %v33, %v79
  %v81 = vmul.f32 %v36, %v79
  %v82 = vmul.f32 %v39, %v79
  %v83 = vmul.f32 %v42, %v79
  %v84 = vmul.f32 %v45, %v79
  %v85 = vmul.f32 %v48, %v79
  %v86 = vmul.f32 %v51, %v79
  %v87 = vmul.f32 %v54, %v79
  %v88 = vmul.f32 %v57, %v79
  %v89 = vmul.f32 %v60, %v79
  %v90 = vmul.f32 %v63, %v79
  %v91 = vmul.f32 %v66, %v79
  %v92 = vmul.f32 %v69, %v79
  %v93 = vmul.f32 %v72, %v79
  %v94 = vmul.f32 %v75, %v79
  %v95 = vmul.f32 %v78, %v79
  %v96 = vsub.f32 %v14, %v80
  %v97 = vsub.f32 %v15, %v81
  %v98 = vsub.f32 %v16, %v82
  %v99 = vsub.f32 %v17, %v83
  %v100 = vsub.f32 %v18, %v84
  %v101 = vsub.f32 %v19, %v85
  %v102 = vsub.f32 %v20, %v86
  %v103 = vsub.f32 %v21, %v87
  %v104 = vsub.f32 %v22, %v88
  %v105 = vsub.f32 %v23, %v89
  %v106 = vsub.f32 %v24, %v90
  %v107 = vsub.f32 %v25, %v91
  %v108 = vsub.f32 %v26, %v92
  %v109 = vsub.f32 %v27, %v93
  %v110 = vsub.f32 %v28, %v94
  %v111 = vsub.f32 %v29, %v95
  %v112 = vmul.f32 %v96, %v96
  %v113 = vmul.f32 %v97, %v97
  %v114 = vmul.f32 %v98, %v98
  %v115 = vmul.f32 %v99, %v99
  %v116 = vmul.f32 %v100, %v100
  %v117 = vmul.f32 %v101, %v101
  %v118 = vmul.f32 %v102, %v102
  %v119 = vmul.f32 %v103, %v103
  %v120 = vmul.f32 %v104, %v104
  %v121 = vmul.f32 %v105, %v105
  %v122 = vmul.f32 %v106, %v106
  %v123 = vmul.f32 %v107, %v107
  %v124 = vmul.f32 %v108, %v108
  %v125 = vmul.f32 %v109, %v109
  %v126 = vmul.f32 %v110, %v110
  %v127 = vmul.f32 %v111, %v111
  %v128 = vsel %vm30, %v112, 0.0
  %129 = vadd.xlane.f32.xlu0 %v128
  %v130 = vpop.xlane.xlu0 %129
  %v131 = vsel %vm30, %v113, 0.0
  %132 = vadd.xlane.f32.xlu0 %v131
  %v133 = vpop.xlane.xlu0 %132
  %v134 = vsel %vm30, %v114, 0.0
  %135 = vadd.xlane.f32.xlu0 %v134
  %v136 = vpop.xlane.xlu0 %135
  %v137 = vsel %vm30, %v115, 0.0
  %138 = vadd.xlane.f32.xlu0 %v137
  %v139 = vpop.xlane.xlu0 %138
  %v140 = vsel %vm30, %v116, 0.0
  %141 = vadd.xlane.f32.xlu0 %v140
  %v142 = vpop.xlane.xlu0 %141
  %v143 = vsel %vm30, %v117, 0.0
  %144 = vadd.xlane.f32.xlu0 %v143
  %v145 = vpop.xlane.xlu0 %144
  %v146 = vsel %vm30, %v118, 0.0
  %147 = vadd.xlane.f32.xlu0 %v146
  %v148 = vpop.xlane.xlu0 %147
  %v149 = vsel %vm30, %v119, 0.0
  %150 = vadd.xlane.f32.xlu0 %v149
  %v151 = vpop.xlane.xlu0 %150
  %v152 = vsel %vm30, %v120, 0.0
  %153 = vadd.xlane.f32.xlu0 %v152
  %v154 = vpop.xlane.xlu0 %153
  %v155 = vsel %vm30, %v121, 0.0
  %156 = vadd.xlane.f32.xlu0 %v155
  %v157 = vpop.xlane.xlu0 %156
  %v158 = vsel %vm30, %v122, 0.0
  %159 = vadd.xlane.f32.xlu0 %v158
  %v160 = vpop.xlane.xlu0 %159
  %v161 = vsel %vm30, %v123, 0.0
  %162 = vadd.xlane.f32.xlu0 %v161
  %v163 = vpop.xlane.xlu0 %162
  %v164 = vsel %vm30, %v124, 0.0
  %165 = vadd.xlane.f32.xlu0 %v164
  %v166 = vpop.xlane.xlu0 %165
  %v167 = vsel %vm30, %v125, 0.0
  %168 = vadd.xlane.f32.xlu0 %v167
  %v169 = vpop.xlane.xlu0 %168
  %v170 = vsel %vm30, %v126, 0.0
  %171 = vadd.xlane.f32.xlu0 %v170
  %v172 = vpop.xlane.xlu0 %171
  %v173 = vsel %vm30, %v127, 0.0
  %174 = vadd.xlane.f32.xlu0 %v173
  %v175 = vpop.xlane.xlu0 %174
  %v176 = vmul.f32 %v130, %v79
  %v177 = vmul.f32 %v133, %v79
  %v178 = vmul.f32 %v136, %v79
  %v179 = vmul.f32 %v139, %v79
  %v180 = vmul.f32 %v142, %v79
  %v181 = vmul.f32 %v145, %v79
  %v182 = vmul.f32 %v148, %v79
  %v183 = vmul.f32 %v151, %v79
  %v184 = vmul.f32 %v154, %v79
  %v185 = vmul.f32 %v157, %v79
  %v186 = vmul.f32 %v160, %v79
  %v187 = vmul.f32 %v163, %v79
  %v188 = vmul.f32 %v166, %v79
  %v189 = vmul.f32 %v169, %v79
  %v190 = vmul.f32 %v172, %v79
  %v191 = vmul.f32 %v175, %v79
  %v192 = vadd.f32 %v176, 1e-06
  %v193 = vadd.f32 %v177, 1e-06
  %v194 = vadd.f32 %v178, 1e-06
  %v195 = vadd.f32 %v179, 1e-06
  %v196 = vadd.f32 %v180, 1e-06
  %v197 = vadd.f32 %v181, 1e-06
  %v198 = vadd.f32 %v182, 1e-06
  %v199 = vadd.f32 %v183, 1e-06
  %v200 = vadd.f32 %v184, 1e-06
  %v201 = vadd.f32 %v185, 1e-06
  %v202 = vadd.f32 %v186, 1e-06
  %v203 = vadd.f32 %v187, 1e-06
  %v204 = vadd.f32 %v188, 1e-06
  %v205 = vadd.f32 %v189, 1e-06
  %v206 = vadd.f32 %v190, 1e-06
  %v207 = vadd.f32 %v191, 1e-06
  %v208 = vrsqrt.pop %v192
  %v209 = vrsqrt.pop %v193
  %v210 = vrsqrt.pop %v194
  %v211 = vrsqrt.pop %v195
  %v212 = vrsqrt.pop %v196
  %v213 = vrsqrt.pop %v197
  %v214 = vrsqrt.pop %v198
  %v215 = vrsqrt.pop %v199
  %v216 = vrsqrt.pop %v200
  %v217 = vrsqrt.pop %v201
  %v218 = vrsqrt.pop %v202
  %v219 = vrsqrt.pop %v203
  %v220 = vrsqrt.pop %v204
  %v221 = vrsqrt.pop %v205
  %v222 = vrsqrt.pop %v206
  %v223 = vrsqrt.pop %v207
  %v224 = vmul.f32 %v96, %v208
  %v225 = vmul.f32 %v97, %v209
  %v226 = vmul.f32 %v98, %v210
  %v227 = vmul.f32 %v99, %v211
  %v228 = vmul.f32 %v100, %v212
  %v229 = vmul.f32 %v101, %v213
  %v230 = vmul.f32 %v102, %v214
  %v231 = vmul.f32 %v103, %v215
  %v232 = vmul.f32 %v104, %v216
  %v233 = vmul.f32 %v105, %v217
  %v234 = vmul.f32 %v106, %v218
  %v235 = vmul.f32 %v107, %v219
  %v236 = vmul.f32 %v108, %v220
  %v237 = vmul.f32 %v109, %v221
  %v238 = vmul.f32 %v110, %v222
  %v239 = vmul.f32 %v111, %v223
  %v240 = vld [vmem:[%s1] sm:$0x1]
  %v242 = vlaneseq
  %v243 = vshrl.u32 %v242, 7
  %v244 = vsub.s32 0, %v243
  %v245 = vrot.slane %v240, %v244
  %v247 = vmul.f32 %v224, %v245
  %v248 = vmul.f32 %v225, %v245
  %v249 = vmul.f32 %v226, %v245
  %v250 = vmul.f32 %v227, %v245
  %v251 = vmul.f32 %v228, %v245
  %v252 = vmul.f32 %v229, %v245
  %v253 = vmul.f32 %v230, %v245
  %v254 = vmul.f32 %v231, %v245
  %v255 = vmul.f32 %v232, %v245
  %v256 = vmul.f32 %v233, %v245
  %v257 = vmul.f32 %v234, %v245
  %v258 = vmul.f32 %v235, %v245
  %v259 = vmul.f32 %v236, %v245
  %v260 = vmul.f32 %v237, %v245
  %v261 = vmul.f32 %v238, %v245
  %v262 = vmul.f32 %v239, %v245
  %v263 = vld [vmem:[%s2] sm:$0x1]
  %v265 = vlaneseq
  %v266 = vshrl.u32 %v265, 7
  %v267 = vsub.s32 0, %v266
  %v268 = vrot.slane %v263, %v267
  %v270 = vadd.f32 %v247, %v268
  %v271 = vadd.f32 %v248, %v268
  %v272 = vadd.f32 %v249, %v268
  %v273 = vadd.f32 %v250, %v268
  %v274 = vadd.f32 %v251, %v268
  %v275 = vadd.f32 %v252, %v268
  %v276 = vadd.f32 %v253, %v268
  %v277 = vadd.f32 %v254, %v268
  %v278 = vadd.f32 %v255, %v268
  %v279 = vadd.f32 %v256, %v268
  %v280 = vadd.f32 %v257, %v268
  %v281 = vadd.f32 %v258, %v268
  %v282 = vadd.f32 %v259, %v268
  %v283 = vadd.f32 %v260, %v268
  %v284 = vadd.f32 %v261, %v268
  %v285 = vadd.f32 %v262, %v268
  %286 = vst.msk [vmem:[%s3] sm:$0xff] %vm30, %v270
  %287 = vst.msk [vmem:[%s3 + $0x8] sm:$0xff] %vm30, %v271
  %288 = vst.msk [vmem:[%s3 + $0x10] sm:$0xff] %vm30, %v272
  %289 = vst.msk [vmem:[%s3 + $0x18] sm:$0xff] %vm30, %v273
  %290 = vst.msk [vmem:[%s3 + $0x20] sm:$0xff] %vm30, %v274
  %291 = vst.msk [vmem:[%s3 + $0x28] sm:$0xff] %vm30, %v275
  %292 = vst.msk [vmem:[%s3 + $0x30] sm:$0xff] %vm30, %v276
  %293 = vst.msk [vmem:[%s3 + $0x38] sm:$0xff] %vm30, %v277
  %294 = vst.msk [vmem:[%s3 + $0x40] sm:$0xff] %vm30, %v278
  %295 = vst.msk [vmem:[%s3 + $0x48] sm:$0xff] %vm30, %v279
  %296 = vst.msk [vmem:[%s3 + $0x50] sm:$0xff] %vm30, %v280
  %297 = vst.msk [vmem:[%s3 + $0x58] sm:$0xff] %vm30, %v281
  %298 = vst.msk [vmem:[%s3 + $0x60] sm:$0xff] %vm30, %v282
  %299 = vst.msk [vmem:[%s3 + $0x68] sm:$0xff] %vm30, %v283
  %300 = vst.msk [vmem:[%s3 + $0x70] sm:$0xff] %vm30, %v284
  %301 = vst.msk [vmem:[%s3 + $0x78] sm:$0xff] %vm30, %v285
  // Predicated region
  $region14: #{_lambda_.32} parent=0 // pred_check
    _
  $region15: #{_lambda_.32} parent=0 // pred_check_branch
    %303 = sbr.rel (0) target = $region17
  $region16: #{_lambda_.32} parent=0 // pred_region
    _
  $region17: #{_lambda_.32} parent=0 // pred_fallthru
    _
  // Predicated region
  $region18: #{_lambda_.32} parent=0 // pred_check
    _
  $region19: #{_lambda_.32} parent=0 // pred_check_branch
    %305 = sbr.rel (0) target = $region21
  $region20: #{_lambda_.32} parent=0 // pred_region
    _
  $region21: #{_lambda_.32} parent=0 // pred_fallthru
    _

// kernel: _lambda_.33
$region0: #{_lambda_.33}
  #allocation0 [shape = 'u32[]', space=smem, size = 0x4, offset = 0x4, fixed_abs, tag = 'smem constant byte address 0x4 - core index']
  #allocation1 [shape = 'u32[144,128]{1,0:T(1,128)}', space=vmem, size = 0x12000, scoped, tag = 'internal scratch']
  #allocation2 [shape = 'f32[128,16]{1,0:T(8,128)}', space=vmem, size = 0x10000, scoped, tag = 'scratch operand']
  %s0 = inlined_call_operand.vmem [shape: bf16[128,8], index: 0, kind: input, shape index: {}]
  %s1 = inlined_call_operand.vmem [shape: bf16[8,16], index: 1, kind: input, shape index: {}]
  %s2 = inlined_call_operand.vmem [shape: f32[1,16], index: 2, kind: input, shape index: {}]
  %s3 = inlined_call_operand.vmem [shape: f32[128,16], index: 3, kind: output, shape index: {}]
  %s4 = sld [smem:[#allocation0]]
  $region30: #{_lambda_.33} parent=0
    _
  %s6 = ssub.s32 1, %s4
  %s7 = scalar_select 0, %s6, %s4
  // Predicated region
  $region2: #{_lambda_.33} parent=0 // pred_check
    _
  $region3: #{_lambda_.33} parent=0 // pred_check_branch
    %9 = sbr.rel (0) target = $region5
  $region4: #{_lambda_.33} parent=0 // pred_region
    _
  $region5: #{_lambda_.33} parent=0 // pred_fallthru
    _
  // Predicated region
  $region6: #{_lambda_.33} parent=0 // pred_check
    _
  $region7: #{_lambda_.33} parent=0 // pred_check_branch
    %11 = sbr.rel (0) target = $region9
  $region8: #{_lambda_.33} parent=0 // pred_region
    _
  $region9: #{_lambda_.33} parent=0 // pred_fallthru
    _
  // Predicated region
  $region10: #{_lambda_.33} parent=0 // pred_check
    _
  $region11: #{_lambda_.33} parent=0 // pred_check_branch
    %13 = sbr.rel (0) target = $region13
  $region12: #{_lambda_.33} parent=0 // pred_region
    _
  $region13: #{_lambda_.33} parent=0 // pred_fallthru
    _
  %p15 = scmp.eq.s32.totalorder 0, 0
  // Predicated region
  $region14: #{_lambda_.33} parent=0 // pred_check
    %p16 = pneg %p15
  $region15: #{_lambda_.33} parent=0 // pred_check_branch
    %18 = sbr.rel (%p16) target = $region17
  $region16: #{_lambda_.33} parent=0 // pred_region
    %vm19 = vcmask 130048
    %20 = vst.msk [vmem:[#allocation2] sm:$0xff] %vm19, 0.0
    %21 = vst.msk [vmem:[#allocation2 + $0x8] sm:$0xff] %vm19, 0.0
    %22 = vst.msk [vmem:[#allocation2 + $0x10] sm:$0xff] %vm19, 0.0
    %23 = vst.msk [vmem:[#allocation2 + $0x18] sm:$0xff] %vm19, 0.0
    %24 = vst.msk [vmem:[#allocation2 + $0x20] sm:$0xff] %vm19, 0.0
    %25 = vst.msk [vmem:[#allocation2 + $0x28] sm:$0xff] %vm19, 0.0
    %26 = vst.msk [vmem:[#allocation2 + $0x30] sm:$0xff] %vm19, 0.0
    %27 = vst.msk [vmem:[#allocation2 + $0x38] sm:$0xff] %vm19, 0.0
    %28 = vst.msk [vmem:[#allocation2 + $0x40] sm:$0xff] %vm19, 0.0
    %29 = vst.msk [vmem:[#allocation2 + $0x48] sm:$0xff] %vm19, 0.0
    %30 = vst.msk [vmem:[#allocation2 + $0x50] sm:$0xff] %vm19, 0.0
    %31 = vst.msk [vmem:[#allocation2 + $0x58] sm:$0xff] %vm19, 0.0
    %32 = vst.msk [vmem:[#allocation2 + $0x60] sm:$0xff] %vm19, 0.0
    %33 = vst.msk [vmem:[#allocation2 + $0x68] sm:$0xff] %vm19, 0.0
    %34 = vst.msk [vmem:[#allocation2 + $0x70] sm:$0xff] %vm19, 0.0
    %35 = vst.msk [vmem:[#allocation2 + $0x78] sm:$0xff] %vm19, 0.0
  $region17: #{_lambda_.33} parent=0 // pred_fallthru
    _
  %v36 = vld [vmem:[#allocation2] sm:$0xff]
  %v37 = vld [vmem:[#allocation2 + $0x8] sm:$0xff]
  %v38 = vld [vmem:[#allocation2 + $0x10] sm:$0xff]
  %v39 = vld [vmem:[#allocation2 + $0x18] sm:$0xff]
  %v40 = vld [vmem:[#allocation2 + $0x20] sm:$0xff]
  %v41 = vld [vmem:[#allocation2 + $0x28] sm:$0xff]
  %v42 = vld [vmem:[#allocation2 + $0x30] sm:$0xff]
  %v43 = vld [vmem:[#allocation2 + $0x38] sm:$0xff]
  %v44 = vld [vmem:[#allocation2 + $0x40] sm:$0xff]
  %v45 = vld [vmem:[#allocation2 + $0x48] sm:$0xff]
  %v46 = vld [vmem:[#allocation2 + $0x50] sm:$0xff]
  %v47 = vld [vmem:[#allocation2 + $0x58] sm:$0xff]
  %v48 = vld [vmem:[#allocation2 + $0x60] sm:$0xff]
  %v49 = vld [vmem:[#allocation2 + $0x68] sm:$0xff]
  %v50 = vld [vmem:[#allocation2 + $0x70] sm:$0xff]
  %v51 = vld [vmem:[#allocation2 + $0x78] sm:$0xff]
  %v52 = vld [vmem:[%s0] sm:$0xf]
  %v53 = vld [vmem:[%s0 + $0x4] sm:$0xf]
  %v54 = vld [vmem:[%s0 + $0x8] sm:$0xf]
  %v55 = vld [vmem:[%s0 + $0xc] sm:$0xf]
  %v56 = vld [vmem:[%s0 + $0x10] sm:$0xf]
  %v57 = vld [vmem:[%s0 + $0x14] sm:$0xf]
  %v58 = vld [vmem:[%s0 + $0x18] sm:$0xf]
  %v59 = vld [vmem:[%s0 + $0x1c] sm:$0xf]
  %v60 = vld [vmem:[%s0 + $0x20] sm:$0xf]
  %v61 = vld [vmem:[%s0 + $0x24] sm:$0xf]
  %v62 = vld [vmem:[%s0 + $0x28] sm:$0xf]
  %v63 = vld [vmem:[%s0 + $0x2c] sm:$0xf]
  %v64 = vld [vmem:[%s0 + $0x30] sm:$0xf]
  %v65 = vld [vmem:[%s0 + $0x34] sm:$0xf]
  %v66 = vld [vmem:[%s0 + $0x38] sm:$0xf]
  %v67 = vld [vmem:[%s0 + $0x3c] sm:$0xf]
  %v68 = vld [vmem:[%s1] sm:$0xf]
  %v85 = vunpack.c.l.b16 %v52
  %v86 = vunpack.c.l.b16 %v53
  %v87 = vunpack.c.l.b16 %v54
  %v88 = vunpack.c.l.b16 %v55
  %v89 = vunpack.c.l.b16 %v56
  %v90 = vunpack.c.l.b16 %v57
  %v91 = vunpack.c.l.b16 %v58
  %v92 = vunpack.c.l.b16 %v59
  %v93 = vunpack.c.l.b16 %v60
  %v94 = vunpack.c.l.b16 %v61
  %v95 = vunpack.c.l.b16 %v62
  %v96 = vunpack.c.l.b16 %v63
  %v97 = vunpack.c.l.b16 %v64
  %v98 = vunpack.c.l.b16 %v65
  %v99 = vunpack.c.l.b16 %v66
  %v100 = vunpack.c.l.b16 %v67
  %v101 = vpack.c.b16 %v86, %v85
  %v102 = vpack.c.b16 %v88, %v87
  %v103 = vpack.c.b16 %v90, %v89
  %v104 = vpack.c.b16 %v92, %v91
  %v105 = vpack.c.b16 %v94, %v93
  %v106 = vpack.c.b16 %v96, %v95
  %v107 = vpack.c.b16 %v98, %v97
  %v108 = vpack.c.b16 %v100, %v99
  %vm109 = vcmask 64512
  %v111 = vsel %vm109, %v101, 0
  %v114 = vsel %vm109, %v102, 0
  %v117 = vsel %vm109, %v103, 0
  %v120 = vsel %vm109, %v104, 0
  %v123 = vsel %vm109, %v105, 0
  %v126 = vsel %vm109, %v106, 0
  %v129 = vsel %vm109, %v107, 0
  %v132 = vsel %vm109, %v108, 0
  %vm134 = vcmask 1043456
  %v136 = vsel %vm134, %v68, 0
  %138 = vmatprep.subr.bf16.mxu0 0
  %139 = vmatpush1.bf16.msra.mxu0 %v136
  %140 = vmatprep.subr.bf16.mxu0 0
  %141 = vmatpush1.bf16.msra.mxu0 0
  %142 = vmatprep.subr.bf16.mxu0 0
  %143 = vmatpush1.bf16.msra.mxu0 0
  %144 = vmatprep.subr.bf16.mxu0 0
  %145 = vmatpush1.bf16.msra.mxu0 0
  %146 = vmatprep.subr.bf16.mxu0 0
  %147 = vmatpush1.bf16.msra.mxu0 0
  %148 = vmatprep.subr.bf16.mxu0 0
  %149 = vmatpush1.bf16.msra.mxu0 0
  %150 = vmatprep.subr.bf16.mxu0 0
  %151 = vmatpush1.bf16.msra.mxu0 0
  %152 = vmatprep.subr.bf16.mxu0 0
  %153 = vmatpush1.bf16.msra.mxu0 0
  %154 = vmatprep.subr.bf16.mxu0 0
  %155 = vmatpush1.bf16.msra.mxu0 0
  %156 = vmatprep.subr.bf16.mxu0 0
  %157 = vmatpush1.bf16.msra.mxu0 0
  %158 = vmatprep.subr.bf16.mxu0 0
  %159 = vmatpush1.bf16.msra.mxu0 0
  %160 = vmatprep.subr.bf16.mxu0 0
  %161 = vmatpush1.bf16.msra.mxu0 0
  %162 = vmatprep.subr.bf16.mxu0 0
  %163 = vmatpush1.bf16.msra.mxu0 0
  %164 = vmatprep.subr.bf16.mxu0 0
  %165 = vmatpush1.bf16.msra.mxu0 0
  %166 = vmatprep.subr.bf16.mxu0 0
  %167 = vmatpush1.bf16.msra.mxu0 0
  %168 = vmatprep.subr.bf16.mxu0 0
  %169 = vmatpush1.bf16.msra.mxu0 0
  %170 = vmatprep.mubr.bf16.mxu0 0
  %171 = vmatmul.mubr.bf16.gmra.mrb[0].mxu0 %v111
  %v172 = vpop.f32.mrb[0].mxu0
  %v173 = vadd.f32 0.0, %v172
  %v174 = vpop.f32.mrb[0].mxu0
  %v175 = vpop.f32.mrb[0].mxu0
  %v176 = vadd.f32 0.0, %v175
  %v177 = vpop.f32.mrb[0].mxu0
  %178 = vmatprep.mubr.bf16.mxu0 0
  %179 = vmatmul.mubr.bf16.gmra.mrb[0].mxu0 %v114
  %v180 = vpop.f32.mrb[0].mxu0
  %v181 = vadd.f32 0.0, %v180
  %v182 = vpop.f32.mrb[0].mxu0
  %v183 = vpop.f32.mrb[0].mxu0
  %v184 = vadd.f32 0.0, %v183
  %v185 = vpop.f32.mrb[0].mxu0
  %186 = vmatprep.mubr.bf16.mxu0 0
  %187 = vmatmul.mubr.bf16.gmra.mrb[0].mxu0 %v117
  %v188 = vpop.f32.mrb[0].mxu0
  %v189 = vadd.f32 0.0, %v188
  %v190 = vpop.f32.mrb[0].mxu0
  %v191 = vpop.f32.mrb[0].mxu0
  %v192 = vadd.f32 0.0, %v191
  %v193 = vpop.f32.mrb[0].mxu0
  %194 = vmatprep.mubr.bf16.mxu0 0
  %195 = vmatmul.mubr.bf16.gmra.mrb[0].mxu0 %v120
  %v196 = vpop.f32.mrb[0].mxu0
  %v197 = vadd.f32 0.0, %v196
  %v198 = vpop.f32.mrb[0].mxu0
  %v199 = vpop.f32.mrb[0].mxu0
  %v200 = vadd.f32 0.0, %v199
  %v201 = vpop.f32.mrb[0].mxu0
  %202 = vmatprep.mubr.bf16.mxu0 0
  %203 = vmatmul.mubr.bf16.gmra.mrb[0].mxu0 %v123
  %v204 = vpop.f32.mrb[0].mxu0
  %v205 = vadd.f32 0.0, %v204
  %v206 = vpop.f32.mrb[0].mxu0
  %v207 = vpop.f32.mrb[0].mxu0
  %v208 = vadd.f32 0.0, %v207
  %v209 = vpop.f32.mrb[0].mxu0
  %210 = vmatprep.mubr.bf16.mxu0 0
  %211 = vmatmul.mubr.bf16.gmra.mrb[0].mxu0 %v126
  %v212 = vpop.f32.mrb[0].mxu0
  %v213 = vadd.f32 0.0, %v212
  %v214 = vpop.f32.mrb[0].mxu0
  %v215 = vpop.f32.mrb[0].mxu0
  %v216 = vadd.f32 0.0, %v215
  %v217 = vpop.f32.mrb[0].mxu0
  %218 = vmatprep.mubr.bf16.mxu0 0
  %219 = vmatmul.mubr.bf16.gmra.mrb[0].mxu0 %v129
  %v220 = vpop.f32.mrb[0].mxu0
  %v221 = vadd.f32 0.0, %v220
  %v222 = vpop.f32.mrb[0].mxu0
  %v223 = vpop.f32.mrb[0].mxu0
  %v224 = vadd.f32 0.0, %v223
  %v225 = vpop.f32.mrb[0].mxu0
  %226 = vmatprep.mubr.bf16.mxu0 0
  %227 = vmatmul.mubr.bf16.gmra.mrb[0].mxu0 %v132
  %v228 = vpop.f32.mrb[0].mxu0
  %v229 = vadd.f32 0.0, %v228
  %v230 = vpop.f32.mrb[0].mxu0
  %v231 = vpop.f32.mrb[0].mxu0
  %v232 = vadd.f32 0.0, %v231
  %v233 = vpop.f32.mrb[0].mxu0
  %234 = vdwg.mxu0
  %v235 = vadd.f32 %v36, %v173
  %v236 = vadd.f32 %v37, %v176
  %v237 = vadd.f32 %v38, %v181
  %v238 = vadd.f32 %v39, %v184
  %v239 = vadd.f32 %v40, %v189
  %v240 = vadd.f32 %v41, %v192
  %v241 = vadd.f32 %v42, %v197
  %v242 = vadd.f32 %v43, %v200
  %v243 = vadd.f32 %v44, %v205
  %v244 = vadd.f32 %v45, %v208
  %v245 = vadd.f32 %v46, %v213
  %v246 = vadd.f32 %v47, %v216
  %v247 = vadd.f32 %v48, %v221
  %v248 = vadd.f32 %v49, %v224
  %v249 = vadd.f32 %v50, %v229
  %v250 = vadd.f32 %v51, %v232
  %vm251 = vcmask 130048
  %252 = vst.msk [vmem:[#allocation2] sm:$0xff] %vm251, %v235
  %253 = vst.msk [vmem:[#allocation2 + $0x8] sm:$0xff] %vm251, %v236
  %254 = vst.msk [vmem:[#allocation2 + $0x10] sm:$0xff] %vm251, %v237
  %255 = vst.msk [vmem:[#allocation2 + $0x18] sm:$0xff] %vm251, %v238
  %256 = vst.msk [vmem:[#allocation2 + $0x20] sm:$0xff] %vm251, %v239
  %257 = vst.msk [vmem:[#allocation2 + $0x28] sm:$0xff] %vm251, %v240
  %258 = vst.msk [vmem:[#allocation2 + $0x30] sm:$0xff] %vm251, %v241
  %259 = vst.msk [vmem:[#allocation2 + $0x38] sm:$0xff] %vm251, %v242
  %260 = vst.msk [vmem:[#allocation2 + $0x40] sm:$0xff] %vm251, %v243
  %261 = vst.msk [vmem:[#allocation2 + $0x48] sm:$0xff] %vm251, %v244
  %262 = vst.msk [vmem:[#allocation2 + $0x50] sm:$0xff] %vm251, %v245
  %263 = vst.msk [vmem:[#allocation2 + $0x58] sm:$0xff] %vm251, %v246
  %264 = vst.msk [vmem:[#allocation2 + $0x60] sm:$0xff] %vm251, %v247
  %265 = vst.msk [vmem:[#allocation2 + $0x68] sm:$0xff] %vm251, %v248
  %266 = vst.msk [vmem:[#allocation2 + $0x70] sm:$0xff] %vm251, %v249
  %267 = vst.msk [vmem:[#allocation2 + $0x78] sm:$0xff] %vm251, %v250
  // Predicated region
  $region18: #{_lambda_.33} parent=0 // pred_check
    %p268 = pneg %p15
  $region19: #{_lambda_.33} parent=0 // pred_check_branch
    %270 = sbr.rel (%p268) target = $region21
  $region20: #{_lambda_.33} parent=0 // pred_region
    %v271 = vld [vmem:[#allocation2] sm:$0xff]
    %v272 = vld [vmem:[#allocation2 + $0x8] sm:$0xff]
    %v273 = vld [vmem:[#allocation2 + $0x10] sm:$0xff]
    %v274 = vld [vmem:[#allocation2 + $0x18] sm:$0xff]
    %v275 = vld [vmem:[#allocation2 + $0x20] sm:$0xff]
    %v276 = vld [vmem:[#allocation2 + $0x28] sm:$0xff]
    %v277 = vld [vmem:[#allocation2 + $0x30] sm:$0xff]
    %v278 = vld [vmem:[#allocation2 + $0x38] sm:$0xff]
    %v279 = vld [vmem:[#allocation2 + $0x40] sm:$0xff]
    %v280 = vld [vmem:[#allocation2 + $0x48] sm:$0xff]
    %v281 = vld [vmem:[#allocation2 + $0x50] sm:$0xff]
    %v282 = vld [vmem:[#allocation2 + $0x58] sm:$0xff]
    %v283 = vld [vmem:[#allocation2 + $0x60] sm:$0xff]
    %v284 = vld [vmem:[#allocation2 + $0x68] sm:$0xff]
    %v285 = vld [vmem:[#allocation2 + $0x70] sm:$0xff]
    %v286 = vld [vmem:[#allocation2 + $0x78] sm:$0xff]
    %v287 = vld [vmem:[%s2] sm:$0x1]
    %v289 = vlaneseq
    %v290 = vshrl.u32 %v289, 7
    %v291 = vsub.s32 0, %v290
    %v292 = vrot.slane %v287, %v291
    %v294 = vadd.f32 %v271, %v292
    %v295 = vadd.f32 %v272, %v292
    %v296 = vadd.f32 %v273, %v292
    %v297 = vadd.f32 %v274, %v292
    %v298 = vadd.f32 %v275, %v292
    %v299 = vadd.f32 %v276, %v292
    %v300 = vadd.f32 %v277, %v292
    %v301 = vadd.f32 %v278, %v292
    %v302 = vadd.f32 %v279, %v292
    %v303 = vadd.f32 %v280, %v292
    %v304 = vadd.f32 %v281, %v292
    %v305 = vadd.f32 %v282, %v292
    %v306 = vadd.f32 %v283, %v292
    %v307 = vadd.f32 %v284, %v292
    %v308 = vadd.f32 %v285, %v292
    %v309 = vadd.f32 %v286, %v292
    %310 = vst.msk [vmem:[%s3] sm:$0xff] %vm251, %v294
    %311 = vst.msk [vmem:[%s3 + $0x8] sm:$0xff] %vm251, %v295
    %312 = vst.msk [vmem:[%s3 + $0x10] sm:$0xff] %vm251, %v296
    %313 = vst.msk [vmem:[%s3 + $0x18] sm:$0xff] %vm251, %v297
    %314 = vst.msk [vmem:[%s3 + $0x20] sm:$0xff] %vm251, %v298
    %315 = vst.msk [vmem:[%s3 + $0x28] sm:$0xff] %vm251, %v299
    %316 = vst.msk [vmem:[%s3 + $0x30] sm:$0xff] %vm251, %v300
    %317 = vst.msk [vmem:[%s3 + $0x38] sm:$0xff] %vm251, %v301
    %318 = vst.msk [vmem:[%s3 + $0x40] sm:$0xff] %vm251, %v302
    %319 = vst.msk [vmem:[%s3 + $0x48] sm:$0xff] %vm251, %v303
    %320 = vst.msk [vmem:[%s3 + $0x50] sm:$0xff] %vm251, %v304
    %321 = vst.msk [vmem:[%s3 + $0x58] sm:$0xff] %vm251, %v305
    %322 = vst.msk [vmem:[%s3 + $0x60] sm:$0xff] %vm251, %v306
    %323 = vst.msk [vmem:[%s3 + $0x68] sm:$0xff] %vm251, %v307
    %324 = vst.msk [vmem:[%s3 + $0x70] sm:$0xff] %vm251, %v308
    %325 = vst.msk [vmem:[%s3 + $0x78] sm:$0xff] %vm251, %v309
  $region21: #{_lambda_.33} parent=0 // pred_fallthru
    _
  // Predicated region
  $region22: #{_lambda_.33} parent=0 // pred_check
    _
  $region23: #{_lambda_.33} parent=0 // pred_check_branch
    %327 = sbr.rel (0) target = $region25
  $region24: #{_lambda_.33} parent=0 // pred_region
    _
  $region25: #{_lambda_.33} parent=0 // pred_fallthru
    _
  // Predicated region
  $region26: #{_lambda_.33} parent=0 // pred_check
    _
  $region27: #{_lambda_.33} parent=0 // pred_check_branch
    %329 = sbr.rel (0) target = $region29
  $region28: #{_lambda_.33} parent=0 // pred_region
    _
  $region29: #{_lambda_.33} parent=0 // pred_fallthru
    _

// kernel: _lambda_.35
$region0: #{_lambda_.35}
  #allocation0 [shape = 'u32[]', space=smem, size = 0x4, offset = 0x4, fixed_abs, tag = 'smem constant byte address 0x4 - core index']
  #allocation1 [shape = 'u32[144,128]{1,0:T(1,128)}', space=vmem, size = 0x12000, scoped, tag = 'internal scratch']
  %s0 = inlined_call_operand.vmem [shape: f32[6,16,16], index: 0, kind: input, shape index: {}]
  %s1 = inlined_call_operand.vmem [shape: f32[32,16], index: 1, kind: input, shape index: {}]
  %s2 = inlined_call_operand.vmem [shape: f32[16,32], index: 2, kind: input, shape index: {}]
  %s3 = inlined_call_operand.hbm [shape: f32[6,32,32], index: 3, kind: output, shape index: {}]
  %s4 = sld [smem:[#allocation0]]
  $region45: #{_lambda_.35} parent=0
    _
  %s6 = ssub.s32 1, %s4
  %s7 = scalar_select 0, %s6, %s4
  $region1: #{_lambda_.35} parent=0
    #allocation2 [shape = 'u8[32768]{0}', space=vmem, size = 0x8000, scoped, tag = 'output window, operand 0']
    #allocation3 [shape = 's32[2]{0}', space=sflag, size = 0x8, scoped, tag = 'scoped memory for _lambda_.35']
    %8 = vsyncpa [#allocation3], 0
    %s9 = scalar_lea.sflag [#allocation3], 1
    %10 = vsyncpa %s9, 0
    loop: start=0, step=1, limit=8
    $region2: #{_lambda_.35} parent=1 // loop_pre_header
      _
    $region3: #{_lambda_.35} parent=1 // loop_header
      %s12 = sphi 0, %s16
      %p13 = scmp.ge.s32.totalorder %s12, 8
      %s22 = sphi 0, %s24
      %s25 = sphi 0, %s22
      %s26 = sphi 0, %s25
      %s42 = sphi 0, %s26
      %s46 = sphi 0, %s46
      %s48 = sphi 0, %s46
      %s49 = sphi 0, %s48
      %s63 = sphi 0, %s49
      %s67 = sphi 0, %s67
      %s69 = sphi 0, %s67
      %s70 = sphi 0, %s69
      %s84 = sphi 0, %s70
      %s90 = sphi 0, %s92
      %s93 = sphi 0, %s90
      %s94 = sphi 0, %s93
      %s110 = sphi 0, %s94
    $region4: #{_lambda_.35} parent=1 // loop_header_branch
      %15 = sbr.rel (%p13) target = $region8
    $region5: #{_lambda_.35} parent=1 // loop_body
      %s17 = ssub.s32 %s12, 1
      %s18 = ssub.s32 %s12, 2
      %s19 = sadd.s32 %s12, 1
      %s20 = ssub.s32 %s12, %s19
      %p21 = scmp.eq.s32.totalorder %s20, 0
      %s23 = sadd.s32 %s22, 1
      %s24 = scalar_select %p21, %s22, %s23
      %p27 = pneg %p21
      %p28 = scmp.eq.s32.totalorder %s12, 5
      %p29 = por %p27, %p28
      %p30 = scmp.ne.s32.totalorder %s22, %s25
      %p31 = scmp.eq.s32.totalorder %s12, 0
      %p32 = por %p30, %p31
      %p33 = scmp.ne.s32.totalorder %s22, %s25
      %p34 = scmp.eq.s32.totalorder %s17, 5
      %p35 = por %p33, %p34
      %p36 = scmp.ne.s32.totalorder %s25, %s26
      %p37 = scmp.eq.s32.totalorder %s17, 0
      %p38 = por %p36, %p37
      %p39 = scmp.ne.s32.totalorder %s25, %s26
      %p40 = scmp.eq.s32.totalorder %s18, 5
      %p41 = por %p39, %p40
      %p43 = scmp.ne.s32.totalorder %s26, %s42
      %p44 = scmp.eq.s32.totalorder %s18, 0
      %p45 = por %p43, %p44
      %s47 = sadd.s32 %s46, 1
      %p50 = scmp.eq.s32.totalorder %s12, 5
      %p51 = scmp.ne.s32.totalorder %s46, %s48
      %p52 = scmp.eq.s32.totalorder %s12, 0
      %p53 = por %p51, %p52
      %p54 = scmp.ne.s32.totalorder %s46, %s48
      %p55 = scmp.eq.s32.totalorder %s17, 5
      %p56 = por %p54, %p55
      %p57 = scmp.ne.s32.totalorder %s48, %s49
      %p58 = scmp.eq.s32.totalorder %s17, 0
      %p59 = por %p57, %p58
      %p60 = scmp.ne.s32.totalorder %s48, %s49
      %p61 = scmp.eq.s32.totalorder %s18, 5
      %p62 = por %p60, %p61
      %p64 = scmp.ne.s32.totalorder %s49, %s63
      %p65 = scmp.eq.s32.totalorder %s18, 0
      %p66 = por %p64, %p65
      %s68 = sadd.s32 %s67, 1
      %p71 = scmp.eq.s32.totalorder %s12, 5
      %p72 = scmp.ne.s32.totalorder %s67, %s69
      %p73 = scmp.eq.s32.totalorder %s12, 0
      %p74 = por %p72, %p73
      %p75 = scmp.ne.s32.totalorder %s67, %s69
      %p76 = scmp.eq.s32.totalorder %s17, 5
      %p77 = por %p75, %p76
      %p78 = scmp.ne.s32.totalorder %s69, %s70
      %p79 = scmp.eq.s32.totalorder %s17, 0
      %p80 = por %p78, %p79
      %p81 = scmp.ne.s32.totalorder %s69, %s70
      %p82 = scmp.eq.s32.totalorder %s18, 5
      %p83 = por %p81, %p82
      %p85 = scmp.ne.s32.totalorder %s70, %s84
      %p86 = scmp.eq.s32.totalorder %s18, 0
      %p87 = por %p85, %p86
      %s88 = ssub.s32 %s12, %s19
      %p89 = scmp.eq.s32.totalorder %s88, 0
      %s91 = sadd.s32 %s90, 1
      %s92 = scalar_select %p89, %s90, %s91
      %p95 = pneg %p89
      %p96 = scmp.eq.s32.totalorder %s12, 5
      %p97 = por %p95, %p96
      %p98 = scmp.ne.s32.totalorder %s90, %s93
      %p99 = scmp.eq.s32.totalorder %s12, 0
      %p100 = por %p98, %p99
      %p101 = scmp.ne.s32.totalorder %s90, %s93
      %p102 = scmp.eq.s32.totalorder %s17, 5
      %p103 = por %p101, %p102
      %p104 = scmp.ne.s32.totalorder %s93, %s94
      %p105 = scmp.eq.s32.totalorder %s17, 0
      %p106 = por %p104, %p105
      %p107 = scmp.ne.s32.totalorder %s93, %s94
      %p108 = scmp.eq.s32.totalorder %s18, 5
      %p109 = por %p107, %p108
      %p111 = scmp.ne.s32.totalorder %s94, %s110
      %p112 = scmp.eq.s32.totalorder %s18, 0
      %p113 = por %p111, %p112
      %p114 = scmp.le.s32.totalorder 1, %s12
      %p115 = scmp.lt.s32.totalorder %s12, 7
      %p116 = pnand %p114, %p115
      %p117 = pneg %p116
      // Predicated region
      $region9: #{_lambda_.35} parent=5 // pred_check
        _
      $region10: #{_lambda_.35} parent=5 // pred_check_branch
        %119 = sbr.rel (%p116) target = $region12
      $region11: #{_lambda_.35} parent=5 // pred_region
        %s120 = ssub.s32 %s12, 1
        // Predicated region
        $region13: #{_lambda_.35} parent=11 // pred_check
          %p121 = pneg %p59
        $region14: #{_lambda_.35} parent=11 // pred_check_branch
          %123 = sbr.rel (%p121) target = $region16
        $region15: #{_lambda_.35} parent=11 // pred_region
          _
        $region16: #{_lambda_.35} parent=11 // pred_fallthru
          _
        // Predicated region
        $region17: #{_lambda_.35} parent=11 // pred_check
          %p124 = pneg %p80
        $region18: #{_lambda_.35} parent=11 // pred_check_branch
          %126 = sbr.rel (%p124) target = $region20
        $region19: #{_lambda_.35} parent=11 // pred_region
          _
        $region20: #{_lambda_.35} parent=11 // pred_fallthru
          _
      $region12: #{_lambda_.35} parent=5 // pred_fallthru
        _
      %p127 = scmp.lt.s32.totalorder %s12, 6
      // Predicated region
      $region21: #{_lambda_.35} parent=5 // pred_check
        %p128 = pneg %p127
      $region22: #{_lambda_.35} parent=5 // pred_check_branch
        %130 = sbr.rel (%p128) target = $region24
      $region23: #{_lambda_.35} parent=5 // pred_region
        // Predicated region
        $region25: #{_lambda_.35} parent=23 // pred_check
          %p131 = pneg %p32
        $region26: #{_lambda_.35} parent=23 // pred_check_branch
          %133 = sbr.rel (%p131) target = $region28
        $region27: #{_lambda_.35} parent=23 // pred_region
          %p134 = scmp.lt.s32.totalorder %s12, 5
          %s135 = scalar_select %p134, %s12, 5
          %s136 = smul.addr %s135, 2
          %s137 = smul.addr %s136, 8
          %s138 = scalar_lea.vmem %s0, %s137
        $region28: #{_lambda_.35} parent=23 // pred_fallthru
          _
      $region24: #{_lambda_.35} parent=5 // pred_fallthru
        _
      %p139 = scmp.le.s32.totalorder 1, %s12
      %p140 = scmp.lt.s32.totalorder %s12, 7
      %p141 = pnand %p139, %p140
      %p142 = pneg %p141
      // Predicated region
      $region29: #{_lambda_.35} parent=5 // pred_check
        _
      $region30: #{_lambda_.35} parent=5 // pred_check_branch
        %144 = sbr.rel (%p141) target = $region32
      $region31: #{_lambda_.35} parent=5 // pred_region
        %s145 = ssub.s32 %s12, 1
        %p146 = scmp.lt.s32.totalorder %s17, 5
        %s147 = scalar_select %p146, %s17, 5
        %s148 = smul.addr %s147, 2
        %s149 = smul.addr %s148, 8
        %s150 = scalar_lea.vmem %s0, %s149
        %p151 = pneg %p38
        %p152 = pneg %p35
        %p153 = pneg %p59
        %p154 = pneg %p56
        %p155 = pneg %p80
        %p156 = pneg %p77
        %p157 = pneg %p106
        %p158 = pneg %p103
        %s159 = sand.u32 %s93, 1
        %s160 = scalar_lea.sflag [#allocation3], %s159
        %s161 = sand.u32 %s93, 1
        %s162 = smul.addr %s161, 32
        %s163 = scalar_lea.vmem [#allocation2], %s162
        %p164 = scmp.lt.s32.totalorder %s17, 5
        %s165 = scalar_select %p164, %s17, 5
        %s166 = smul.addr %s165, 2
        %s167 = smul.addr %s166, 8
        %s168 = scalar_lea.vmem %s0, %s167
        %v169 = vld [vmem:[%s168] sm:$0xff]
        %v170 = vld [vmem:[%s168 + $0x8] sm:$0xff]
        %v171 = vld [vmem:[%s1] sm:$0xff]
        %v172 = vld [vmem:[%s1 + $0x8] sm:$0xff]
        %v173 = vld [vmem:[%s1 + $0x10] sm:$0xff]
        %v174 = vld [vmem:[%s1 + $0x18] sm:$0xff]
        %vm175 = vcmask 130048
        %v177 = vsel %vm175, %v171, 0
        %v180 = vsel %vm175, %v172, 0
        %v183 = vsel %vm175, %v173, 0
        %v186 = vsel %vm175, %v174, 0
        %188 = vmatprep.subr.mxu0 0.0
        %189 = vmatpush1.msra.mxu0 %v169
        %190 = vmatprep.subr.mxu0 0.0
        %191 = vmatpush1.msra.mxu0 %v170
        %192 = vmatprep.subr.mxu0 0.0
        %193 = vmatpush1.msra.mxu0 0.0
        %194 = vmatprep.subr.mxu0 0.0
        %195 = vmatpush1.msra.mxu0 0.0
        %196 = vmatprep.subr.mxu0 0.0
        %197 = vmatpush1.msra.mxu0 0.0
        %198 = vmatprep.subr.mxu0 0.0
        %199 = vmatpush1.msra.mxu0 0.0
        %200 = vmatprep.subr.mxu0 0.0
        %201 = vmatpush1.msra.mxu0 0.0
        %202 = vmatprep.subr.mxu0 0.0
        %203 = vmatpush1.msra.mxu0 0.0
        %204 = vmatprep.subr.mxu0 0.0
        %205 = vmatpush1.msra.mxu0 0.0
        %206 = vmatprep.subr.mxu0 0.0
        %207 = vmatpush1.msra.mxu0 0.0
        %208 = vmatprep.subr.mxu0 0.0
        %209 = vmatpush1.msra.mxu0 0.0
        %210 = vmatprep.subr.mxu0 0.0
        %211 = vmatpush1.msra.mxu0 0.0
        %212 = vmatprep.subr.mxu0 0.0
        %213 = vmatpush1.msra.mxu0 0.0
        %214 = vmatprep.subr.mxu0 0.0
        %215 = vmatpush1.msra.mxu0 0.0
        %216 = vmatprep.subr.mxu0 0.0
        %217 = vmatpush1.msra.mxu0 0.0
        %218 = vmatprep.subr.mxu0 0.0
        %219 = vmatpush1.msra.mxu0 0.0
        %220 = vmatprep.subr.mxu0 0.0
        %221 = vmatpush1.msra.mxu0 0.0
        %222 = vmatprep.subr.mxu0 0.0
        %223 = vmatpush1.msra.mxu0 0.0
        %224 = vmatprep.subr.mxu0 0.0
        %225 = vmatpush1.msra.mxu0 0.0
        %226 = vmatprep.subr.mxu0 0.0
        %227 = vmatpush1.msra.mxu0 0.0
        %228 = vmatprep.subr.mxu0 0.0
        %229 = vmatpush1.msra.mxu0 0.0
        %230 = vmatprep.subr.mxu0 0.0
        %231 = vmatpush1.msra.mxu0 0.0
        %232 = vmatprep.subr.mxu0 0.0
        %233 = vmatpush1.msra.mxu0 0.0
        %234 = vmatprep.subr.mxu0 0.0
        %235 = vmatpush1.msra.mxu0 0.0
        %236 = vmatprep.subr.mxu0 0.0
        %237 = vmatpush1.msra.mxu0 0.0
        %238 = vmatprep.subr.mxu0 0.0
        %239 = vmatpush1.msra.mxu0 0.0
        %240 = vmatprep.subr.mxu0 0.0
        %241 = vmatpush1.msra.mxu0 0.0
        %242 = vmatprep.subr.mxu0 0.0
        %243 = vmatpush1.msra.mxu0 0.0
        %244 = vmatprep.subr.mxu0 0.0
        %245 = vmatpush1.msra.mxu0 0.0
        %246 = vmatprep.subr.mxu0 0.0
        %247 = vmatpush1.msra.mxu0 0.0
        %248 = vmatprep.subr.mxu0 0.0
        %249 = vmatpush1.msra.mxu0 0.0
        %250 = vmatprep.subr.mxu0 0.0
        %251 = vmatpush1.msra.mxu0 0.0
        %252 = vmatprep.mubr.f32.mxu0 0.0
        %253 = vmatmul.mubr.f32.gmra.mrb[0].mxu0 %v177
        %v254 = vpop.f32.mrb[0].mxu0
        %v255 = vadd.f32 0.0, %v254
        %v256 = vpop.f32.mrb[0].mxu0
        %257 = vmatprep.mubr.f32.mxu0 0.0
        %258 = vmatmul.mubr.f32.gmra.mrb[0].mxu0 %v180
        %v259 = vpop.f32.mrb[0].mxu0
        %v260 = vadd.f32 0.0, %v259
        %v261 = vpop.f32.mrb[0].mxu0
        %262 = vmatprep.mubr.f32.mxu0 0.0
        %263 = vmatmul.mubr.f32.gmra.mrb[0].mxu0 %v183
        %v264 = vpop.f32.mrb[0].mxu0
        %v265 = vadd.f32 0.0, %v264
        %v266 = vpop.f32.mrb[0].mxu0
        %267 = vmatprep.mubr.f32.mxu0 0.0
        %268 = vmatmul.mubr.f32.gmra.mrb[0].mxu0 %v186
        %v269 = vpop.f32.mrb[0].mxu0
        %v270 = vadd.f32 0.0, %v269
        %v271 = vpop.f32.mrb[0].mxu0
        %272 = vdwg.mxu0
        %v273 = vld [vmem:[%s2] sm:$0xff]
        %v274 = vld [vmem:[%s2 + $0x8] sm:$0xff]
        %v276 = vsel %vm175, %v255, 0
        %v279 = vsel %vm175, %v260, 0
        %v282 = vsel %vm175, %v265, 0
        %v285 = vsel %vm175, %v270, 0
        %287 = vmatprep.subr.mxu0 0.0
        %288 = vmatpush1.msra.mxu0 %v273
        %289 = vmatprep.subr.mxu0 0.0
        %290 = vmatpush1.msra.mxu0 %v274
        %291 = vmatprep.subr.mxu0 0.0
        %292 = vmatpush1.msra.mxu0 0.0
        %293 = vmatprep.subr.mxu0 0.0
        %294 = vmatpush1.msra.mxu0 0.0
        %295 = vmatprep.subr.mxu0 0.0
        %296 = vmatpush1.msra.mxu0 0.0
        %297 = vmatprep.subr.mxu0 0.0
        %298 = vmatpush1.msra.mxu0 0.0
        %299 = vmatprep.subr.mxu0 0.0
        %300 = vmatpush1.msra.mxu0 0.0
        %301 = vmatprep.subr.mxu0 0.0
        %302 = vmatpush1.msra.mxu0 0.0
        %303 = vmatprep.subr.mxu0 0.0
        %304 = vmatpush1.msra.mxu0 0.0
        %305 = vmatprep.subr.mxu0 0.0
        %306 = vmatpush1.msra.mxu0 0.0
        %307 = vmatprep.subr.mxu0 0.0
        %308 = vmatpush1.msra.mxu0 0.0
        %309 = vmatprep.subr.mxu0 0.0
        %310 = vmatpush1.msra.mxu0 0.0
        %311 = vmatprep.subr.mxu0 0.0
        %312 = vmatpush1.msra.mxu0 0.0
        %313 = vmatprep.subr.mxu0 0.0
        %314 = vmatpush1.msra.mxu0 0.0
        %315 = vmatprep.subr.mxu0 0.0
        %316 = vmatpush1.msra.mxu0 0.0
        %317 = vmatprep.subr.mxu0 0.0
        %318 = vmatpush1.msra.mxu0 0.0
        %319 = vmatprep.subr.mxu0 0.0
        %320 = vmatpush1.msra.mxu0 0.0
        %321 = vmatprep.subr.mxu0 0.0
        %322 = vmatpush1.msra.mxu0 0.0
        %323 = vmatprep.subr.mxu0 0.0
        %324 = vmatpush1.msra.mxu0 0.0
        %325 = vmatprep.subr.mxu0 0.0
        %326 = vmatpush1.msra.mxu0 0.0
        %327 = vmatprep.subr.mxu0 0.0
        %328 = vmatpush1.msra.mxu0 0.0
        %329 = vmatprep.subr.mxu0 0.0
        %330 = vmatpush1.msra.mxu0 0.0
        %331 = vmatprep.subr.mxu0 0.0
        %332 = vmatpush1.msra.mxu0 0.0
        %333 = vmatprep.subr.mxu0 0.0
        %334 = vmatpush1.msra.mxu0 0.0
        %335 = vmatprep.subr.mxu0 0.0
        %336 = vmatpush1.msra.mxu0 0.0
        %337 = vmatprep.subr.mxu0 0.0
        %338 = vmatpush1.msra.mxu0 0.0
        %339 = vmatprep.subr.mxu0 0.0
        %340 = vmatpush1.msra.mxu0 0.0
        %341 = vmatprep.subr.mxu0 0.0
        %342 = vmatpush1.msra.mxu0 0.0
        %343 = vmatprep.subr.mxu0 0.0
        %344 = vmatpush1.msra.mxu0 0.0
        %345 = vmatprep.subr.mxu0 0.0
        %346 = vmatpush1.msra.mxu0 0.0
        %347 = vmatprep.subr.mxu0 0.0
        %348 = vmatpush1.msra.mxu0 0.0
        %349 = vmatprep.subr.mxu0 0.0
        %350 = vmatpush1.msra.mxu0 0.0
        %351 = vmatprep.mubr.f32.mxu0 0.0
        %352 = vmatmul.mubr.f32.gmra.mrb[0].mxu0 %v276
        %v353 = vpop.f32.mrb[0].mxu0
        %v354 = vadd.f32 0.0, %v353
        %v355 = vpop.f32.mrb[0].mxu0
        %356 = vmatprep.mubr.f32.mxu0 0.0
        %357 = vmatmul.mubr.f32.gmra.mrb[0].mxu0 %v279
        %v358 = vpop.f32.mrb[0].mxu0
        %v359 = vadd.f32 0.0, %v358
        %v360 = vpop.f32.mrb[0].mxu0
        %361 = vmatprep.mubr.f32.mxu0 0.0
        %362 = vmatmul.mubr.f32.gmra.mrb[0].mxu0 %v282
        %v363 = vpop.f32.mrb[0].mxu0
        %v364 = vadd.f32 0.0, %v363
        %v365 = vpop.f32.mrb[0].mxu0
        %366 = vmatprep.mubr.f32.mxu0 0.0
        %367 = vmatmul.mubr.f32.gmra.mrb[0].mxu0 %v285
        %v368 = vpop.f32.mrb[0].mxu0
        %v369 = vadd.f32 0.0, %v368
        %v370 = vpop.f32.mrb[0].mxu0
        %371 = vdwg.mxu0
        %vm372 = vcmask 261120
        %373 = vst.msk [vmem:[%s163] sm:$0xff] %vm372, %v354
        %374 = vst.msk [vmem:[%s163 + $0x8] sm:$0xff] %vm372, %v359
        %375 = vst.msk [vmem:[%s163 + $0x10] sm:$0xff] %vm372, %v364
        %376 = vst.msk [vmem:[%s163 + $0x18] sm:$0xff] %vm372, %v369
        %s377 = sand.u32 %s93, 1
        %s378 = scalar_lea.sflag [#allocation3], %s377
        %s379 = sand.u32 %s93, 1
        %s380 = smul.addr %s379, 32
        %s381 = scalar_lea.vmem [#allocation2], %s380
        // Predicated region
        $region33: #{_lambda_.35} parent=31 // pred_check
          %p382 = pneg %p103
        $region34: #{_lambda_.35} parent=31 // pred_check_branch
          %384 = sbr.rel (%p382) target = $region36
        $region35: #{_lambda_.35} parent=31 // pred_region
          %s386 = ssub.s32 512, 512
          %387 = vsyncadd %s378, %s386
          %s388 = smul.addr %s17, 4
          %s389 = smul.addr %s388, 128
          %s390 = scalar_lea.hbm %s3, %s389
          %s391 = sshll.u32 %s381, 4
          %s392 = int_to_ptr.vmem [resolvable:$true] %s391
          %397 = dma.vmem_to_hbm [thread:$0]  %s392, 512, %s390, %s378, 128, 128, 8
        $region36: #{_lambda_.35} parent=31 // pred_fallthru
          _
      $region32: #{_lambda_.35} parent=5 // pred_fallthru
        _
      %p398 = scmp.le.s32.totalorder 2, %s12
      // Predicated region
      $region37: #{_lambda_.35} parent=5 // pred_check
        %p399 = pneg %p398
      $region38: #{_lambda_.35} parent=5 // pred_check_branch
        %401 = sbr.rel (%p399) target = $region40
      $region39: #{_lambda_.35} parent=5 // pred_region
        %s402 = ssub.s32 %s12, 2
        // Predicated region
        $region41: #{_lambda_.35} parent=39 // pred_check
          %p403 = pneg %p109
        $region42: #{_lambda_.35} parent=39 // pred_check_branch
          %405 = sbr.rel (%p403) target = $region44
        $region43: #{_lambda_.35} parent=39 // pred_region
          %s406 = sand.u32 %s94, 1
          %s407 = scalar_lea.sflag [#allocation3], %s406
          %s408 = sand.u32 %s94, 1
          %s409 = smul.addr %s408, 32
          %s410 = scalar_lea.vmem [#allocation2], %s409
          %411 = dma.done %s407, 512
        $region44: #{_lambda_.35} parent=39 // pred_fallthru
          _
      $region40: #{_lambda_.35} parent=5 // pred_fallthru
        _
    $region6: #{_lambda_.35} parent=1 // loop_footer
      %s16 = sadd.s32 1, %s12
    $region7: #{_lambda_.35} parent=1 // loop_footer_branch
      %11 = sbr.rel target = $region3
    $region8: #{_lambda_.35} parent=1 // loop_exit
      _
    %412 = vsyncpa [#allocation3], 1
    %s413 = scalar_lea.sflag [#allocation3], 1
    %414 = vsyncpa %s413, 1

// kernel: _lambda_.34
$region0: #{_lambda_.34}
  #allocation0 [shape = 'u32[]', space=smem, size = 0x4, offset = 0x4, fixed_abs, tag = 'smem constant byte address 0x4 - core index']
  #allocation1 [shape = 'u32[144,128]{1,0:T(1,128)}', space=vmem, size = 0x12000, scoped, tag = 'internal scratch']
  %s0 = inlined_call_operand.vmem [shape: bf16[2,4,4], index: 0, kind: input, shape index: {}]
  %s1 = inlined_call_operand.vmem [shape: bf16[2,256,4], index: 1, kind: input, shape index: {}]
  %s2 = inlined_call_operand.vmem [shape: f32[2,4,256], index: 2, kind: output, shape index: {}]
  %s3 = sld [smem:[#allocation0]]
  $region41: #{_lambda_.34} parent=0
    _
  %s5 = ssub.s32 1, %s3
  %s6 = scalar_select 0, %s5, %s3
  loop: start=0, step=1, limit=4
  $region2: #{_lambda_.34} parent=0 // loop_pre_header
    _
  $region3: #{_lambda_.34} parent=0 // loop_header
    %s8 = sphi 0, %s12
    %p9 = scmp.ge.s32.totalorder %s8, 4
    %s15 = sphi 0, %s27
    %s16 = sphi 0, %s23
    %s17 = sphi 0, %s15
    %s18 = sphi 0, %s16
    %s19 = sphi 0, %s17
    %s20 = sphi 0, %s18
    %s30 = sphi 0, %s32
    %s33 = sphi 0, %s30
    %s34 = sphi 0, %s33
    %s50 = sphi 0, %s34
    %s58 = sphi 0, %s60
    %s61 = sphi 0, %s58
    %s62 = sphi 0, %s61
    %s78 = sphi 0, %s62
    %s86 = sphi 0, %s88
    %s89 = sphi 0, %s86
    %s90 = sphi 0, %s89
    %s106 = sphi 0, %s90
  $region4: #{_lambda_.34} parent=0 // loop_header_branch
    %11 = sbr.rel (%p9) target = $region8
  $region5: #{_lambda_.34} parent=0 // loop_body
    %s13 = ssub.s32 %s8, 1
    %s14 = ssub.s32 %s8, 2
    %s21 = sadd.s32 1, %s16
    %p22 = scmp.ge.s32.totalorder %s21, 1
    %s23 = scalar_select %p22, 0, %s21
    %s24 = sadd.s32 1, %s15
    %s25 = scalar_select %p22, %s24, %s15
    %p26 = scmp.ge.s32.totalorder %s25, 2
    %s27 = scalar_select %p26, 0, %s25
    %s28 = ssub.s32 %s15, %s27
    %p29 = scmp.eq.s32.totalorder %s28, 0
    %s31 = sadd.s32 %s30, 1
    %s32 = scalar_select %p29, %s30, %s31
    %p35 = pneg %p29
    %p36 = scmp.eq.s32.totalorder %s8, 1
    %p37 = por %p35, %p36
    %p38 = scmp.ne.s32.totalorder %s30, %s33
    %p39 = scmp.eq.s32.totalorder %s8, 0
    %p40 = por %p38, %p39
    %p41 = scmp.ne.s32.totalorder %s30, %s33
    %p42 = scmp.eq.s32.totalorder %s13, 1
    %p43 = por %p41, %p42
    %p44 = scmp.ne.s32.totalorder %s33, %s34
    %p45 = scmp.eq.s32.totalorder %s13, 0
    %p46 = por %p44, %p45
    %p47 = scmp.ne.s32.totalorder %s33, %s34
    %p48 = scmp.eq.s32.totalorder %s14, 1
    %p49 = por %p47, %p48
    %p51 = scmp.ne.s32.totalorder %s34, %s50
    %p52 = scmp.eq.s32.totalorder %s14, 0
    %p53 = por %p51, %p52
    %s54 = ssub.s32 %s15, %s27
    %s55 = ssub.s32 %s16, %s23
    %s56 = sor.u32 %s54, %s55
    %p57 = scmp.eq.s32.totalorder %s56, 0
    %s59 = sadd.s32 %s58, 1
    %s60 = scalar_select %p57, %s58, %s59
    %p63 = pneg %p57
    %p64 = scmp.eq.s32.totalorder %s8, 1
    %p65 = por %p63, %p64
    %p66 = scmp.ne.s32.totalorder %s58, %s61
    %p67 = scmp.eq.s32.totalorder %s8, 0
    %p68 = por %p66, %p67
    %p69 = scmp.ne.s32.totalorder %s58, %s61
    %p70 = scmp.eq.s32.totalorder %s13, 1
    %p71 = por %p69, %p70
    %p72 = scmp.ne.s32.totalorder %s61, %s62
    %p73 = scmp.eq.s32.totalorder %s13, 0
    %p74 = por %p72, %p73
    %p75 = scmp.ne.s32.totalorder %s61, %s62
    %p76 = scmp.eq.s32.totalorder %s14, 1
    %p77 = por %p75, %p76
    %p79 = scmp.ne.s32.totalorder %s62, %s78
    %p80 = scmp.eq.s32.totalorder %s14, 0
    %p81 = por %p79, %p80
    %s82 = ssub.s32 %s15, %s27
    %s83 = ssub.s32 %s16, %s23
    %s84 = sor.u32 %s82, %s83
    %p85 = scmp.eq.s32.totalorder %s84, 0
    %s87 = sadd.s32 %s86, 1
    %s88 = scalar_select %p85, %s86, %s87
    %p91 = pneg %p85
    %p92 = scmp.eq.s32.totalorder %s8, 1
    %p93 = por %p91, %p92
    %p94 = scmp.ne.s32.totalorder %s86, %s89
    %p95 = scmp.eq.s32.totalorder %s8, 0
    %p96 = por %p94, %p95
    %p97 = scmp.ne.s32.totalorder %s86, %s89
    %p98 = scmp.eq.s32.totalorder %s13, 1
    %p99 = por %p97, %p98
    %p100 = scmp.ne.s32.totalorder %s89, %s90
    %p101 = scmp.eq.s32.totalorder %s13, 0
    %p102 = por %p100, %p101
    %p103 = scmp.ne.s32.totalorder %s89, %s90
    %p104 = scmp.eq.s32.totalorder %s14, 1
    %p105 = por %p103, %p104
    %p107 = scmp.ne.s32.totalorder %s90, %s106
    %p108 = scmp.eq.s32.totalorder %s14, 0
    %p109 = por %p107, %p108
    %p110 = scmp.le.s32.totalorder 1, %s8
    %p111 = scmp.lt.s32.totalorder %s8, 3
    %p112 = pnand %p110, %p111
    %p113 = pneg %p112
    // Predicated region
    $region9: #{_lambda_.34} parent=5 // pred_check
      _
    $region10: #{_lambda_.34} parent=5 // pred_check_branch
      %115 = sbr.rel (%p112) target = $region12
    $region11: #{_lambda_.34} parent=5 // pred_region
      %s116 = ssub.s32 %s8, 1
    $region12: #{_lambda_.34} parent=5 // pred_fallthru
      _
    %p117 = scmp.lt.s32.totalorder %s8, 2
    // Predicated region
    $region13: #{_lambda_.34} parent=5 // pred_check
      %p118 = pneg %p117
    $region14: #{_lambda_.34} parent=5 // pred_check_branch
      %120 = sbr.rel (%p118) target = $region16
    $region15: #{_lambda_.34} parent=5 // pred_region
      // Predicated region
      $region17: #{_lambda_.34} parent=15 // pred_check
        %p121 = pneg %p40
      $region18: #{_lambda_.34} parent=15 // pred_check_branch
        %123 = sbr.rel (%p121) target = $region20
      $region19: #{_lambda_.34} parent=15 // pred_region
        %p124 = scmp.lt.s32.totalorder %s15, 1
        %s125 = scalar_select %p124, %s15, 1
        %s126 = smul.addr %s125, 2
        %s127 = scalar_lea.vmem %s0, %s126
      $region20: #{_lambda_.34} parent=15 // pred_fallthru
        _
      // Predicated region
      $region21: #{_lambda_.34} parent=15 // pred_check
        %p128 = pneg %p68
      $region22: #{_lambda_.34} parent=15 // pred_check_branch
        %130 = sbr.rel (%p128) target = $region24
      $region23: #{_lambda_.34} parent=15 // pred_region
        %s131 = smul.u32 32, %s16
        %p132 = scmp.lt.s32.totalorder %s15, 1
        %s133 = scalar_select %p132, %s15, 1
        %p134 = scmp.lt.s32.totalorder %s131, 31
        %s135 = scalar_select %p134, %s131, 31
        %s136 = smul.addr %s133, 32
        %s137 = sadd.s32 %s135, %s136
        %s138 = smul.addr %s137, 4
        %s139 = scalar_lea.vmem %s1, %s138
        %s140 = smul.u32 32, %s16
      $region24: #{_lambda_.34} parent=15 // pred_fallthru
        _
    $region16: #{_lambda_.34} parent=5 // pred_fallthru
      _
    %p141 = scmp.le.s32.totalorder 1, %s8
    %p142 = scmp.lt.s32.totalorder %s8, 3
    %p143 = pnand %p141, %p142
    %p144 = pneg %p143
    // Predicated region
    $region25: #{_lambda_.34} parent=5 // pred_check
      _
    $region26: #{_lambda_.34} parent=5 // pred_check_branch
      %146 = sbr.rel (%p143) target = $region28
    $region27: #{_lambda_.34} parent=5 // pred_region
      %s147 = ssub.s32 %s8, 1
      %p148 = scmp.lt.s32.totalorder %s17, 1
      %s149 = scalar_select %p148, %s17, 1
      %s150 = smul.addr %s149, 2
      %s151 = scalar_lea.vmem %s0, %s150
      %p152 = pneg %p46
      %p153 = pneg %p43
      %s154 = smul.u32 32, %s18
      %p155 = scmp.lt.s32.totalorder %s17, 1
      %s156 = scalar_select %p155, %s17, 1
      %p157 = scmp.lt.s32.totalorder %s154, 31
      %s158 = scalar_select %p157, %s154, 31
      %s159 = smul.addr %s156, 32
      %s160 = sadd.s32 %s158, %s159
      %s161 = smul.addr %s160, 4
      %s162 = scalar_lea.vmem %s1, %s161
      %p163 = pneg %p74
      %p164 = pneg %p71
      %p165 = pneg %p102
      %p166 = pneg %p99
      %s167 = smul.u32 2, %s18
      %p168 = scmp.lt.s32.totalorder %s17, 1
      %s169 = scalar_select %p168, %s17, 1
      %p170 = scmp.lt.s32.totalorder %s167, 1
      %s171 = scalar_select %p170, %s167, 1
      %s172 = smul.addr %s169, 2
      %s173 = sadd.s32 %s171, %s172
      %s174 = smul.addr %s173, 4
      %s175 = scalar_lea.vmem %s2, %s174
      %p176 = scmp.lt.s32.totalorder %s17, 1
      %s177 = scalar_select %p176, %s17, 1
      %s178 = smul.addr %s177, 2
      %s179 = scalar_lea.vmem %s0, %s178
      %s180 = smul.u32 32, %s18
      %p181 = scmp.lt.s32.totalorder %s17, 1
      %s182 = scalar_select %p181, %s17, 1
      %p183 = scmp.lt.s32.totalorder %s180, 31
      %s184 = scalar_select %p183, %s180, 31
      %s185 = smul.addr %s182, 32
      %s186 = sadd.s32 %s184, %s185
      %s187 = smul.addr %s186, 4
      %s188 = scalar_lea.vmem %s1, %s187
      %s189 = smul.u32 32, %s18
      %s190 = smul.u32 2, %s18
      %p191 = scmp.lt.s32.totalorder %s17, 1
      %s192 = scalar_select %p191, %s17, 1
      %p193 = scmp.lt.s32.totalorder %s190, 1
      %s194 = scalar_select %p193, %s190, 1
      %s195 = smul.addr %s192, 2
      %s196 = sadd.s32 %s194, %s195
      %s197 = smul.addr %s196, 4
      %s198 = scalar_lea.vmem %s2, %s197
      %s199 = smul.u32 2, %s18
      %v201 = vld [vmem:[%s179] sm:$0x3]
      %v202 = vld [vmem:[%s188] sm:$0xf]
      %v203 = vld [vmem:[%s188 + $0x4] sm:$0xf]
      %v204 = vld [vmem:[%s188 + $0x8] sm:$0xf]
      %v205 = vld [vmem:[%s188 + $0xc] sm:$0xf]
      %v206 = vld [vmem:[%s188 + $0x10] sm:$0xf]
      %v207 = vld [vmem:[%s188 + $0x14] sm:$0xf]
      %v208 = vld [vmem:[%s188 + $0x18] sm:$0xf]
      %v209 = vld [vmem:[%s188 + $0x1c] sm:$0xf]
      %v210 = vld [vmem:[%s188 + $0x20] sm:$0xf]
      %v211 = vld [vmem:[%s188 + $0x24] sm:$0xf]
      %v212 = vld [vmem:[%s188 + $0x28] sm:$0xf]
      %v213 = vld [vmem:[%s188 + $0x2c] sm:$0xf]
      %v214 = vld [vmem:[%s188 + $0x30] sm:$0xf]
      %v215 = vld [vmem:[%s188 + $0x34] sm:$0xf]
      %v216 = vld [vmem:[%s188 + $0x38] sm:$0xf]
      %v217 = vld [vmem:[%s188 + $0x3c] sm:$0xf]
      %v218 = vld [vmem:[%s188 + $0x40] sm:$0xf]
      %v219 = vld [vmem:[%s188 + $0x44] sm:$0xf]
      %v220 = vld [vmem:[%s188 + $0x48] sm:$0xf]
      %v221 = vld [vmem:[%s188 + $0x4c] sm:$0xf]
      %v222 = vld [vmem:[%s188 + $0x50] sm:$0xf]
      %v223 = vld [vmem:[%s188 + $0x54] sm:$0xf]
      %v224 = vld [vmem:[%s188 + $0x58] sm:$0xf]
      %v225 = vld [vmem:[%s188 + $0x5c] sm:$0xf]
      %v226 = vld [vmem:[%s188 + $0x60] sm:$0xf]
      %v227 = vld [vmem:[%s188 + $0x64] sm:$0xf]
      %v228 = vld [vmem:[%s188 + $0x68] sm:$0xf]
      %v229 = vld [vmem:[%s188 + $0x6c] sm:$0xf]
      %v230 = vld [vmem:[%s188 + $0x70] sm:$0xf]
      %v231 = vld [vmem:[%s188 + $0x74] sm:$0xf]
      %v232 = vld [vmem:[%s188 + $0x78] sm:$0xf]
      %v233 = vld [vmem:[%s188 + $0x7c] sm:$0xf]
      %v266 = vunpack.c.l.b16 %v202
      %v267 = vunpack.c.l.b16 %v203
      %v268 = vunpack.c.l.b16 %v204
      %v269 = vunpack.c.l.b16 %v205
      %v270 = vunpack.c.l.b16 %v206
      %v271 = vunpack.c.l.b16 %v207
      %v272 = vunpack.c.l.b16 %v208
      %v273 = vunpack.c.l.b16 %v209
      %v274 = vunpack.c.l.b16 %v210
      %v275 = vunpack.c.l.b16 %v211
      %v276 = vunpack.c.l.b16 %v212
      %v277 = vunpack.c.l.b16 %v213
      %v278 = vunpack.c.l.b16 %v214
      %v279 = vunpack.c.l.b16 %v215
      %v280 = vunpack.c.l.b16 %v216
      %v281 = vunpack.c.l.b16 %v217
      %v282 = vunpack.c.l.b16 %v218
      %v283 = vunpack.c.l.b16 %v219
      %v284 = vunpack.c.l.b16 %v220
      %v285 = vunpack.c.l.b16 %v221
      %v286 = vunpack.c.l.b16 %v222
      %v287 = vunpack.c.l.b16 %v223
      %v288 = vunpack.c.l.b16 %v224
      %v289 = vunpack.c.l.b16 %v225
      %v290 = vunpack.c.l.b16 %v226
      %v291 = vunpack.c.l.b16 %v227
      %v292 = vunpack.c.l.b16 %v228
      %v293 = vunpack.c.l.b16 %v229
      %v294 = vunpack.c.l.b16 %v230
      %v295 = vunpack.c.l.b16 %v231
      %v296 = vunpack.c.l.b16 %v232
      %v297 = vunpack.c.l.b16 %v233
      %v298 = vpack.c.b16 %v267, %v266
      %v299 = vpack.c.b16 %v269, %v268
      %v300 = vpack.c.b16 %v271, %v270
      %v301 = vpack.c.b16 %v273, %v272
      %v302 = vpack.c.b16 %v275, %v274
      %v303 = vpack.c.b16 %v277, %v276
      %v304 = vpack.c.b16 %v279, %v278
      %v305 = vpack.c.b16 %v281, %v280
      %v306 = vpack.c.b16 %v283, %v282
      %v307 = vpack.c.b16 %v285, %v284
      %v308 = vpack.c.b16 %v287, %v286
      %v309 = vpack.c.b16 %v289, %v288
      %v310 = vpack.c.b16 %v291, %v290
      %v311 = vpack.c.b16 %v293, %v292
      %v312 = vpack.c.b16 %v295, %v294
      %v313 = vpack.c.b16 %v297, %v296
      %vm314 = vcmask 31744
      %v316 = vsel %vm314, %v201, 0
      %v319 = vsel %vm314, %v298, 0
      %v322 = vsel %vm314, %v299, 0
      %v325 = vsel %vm314, %v300, 0
      %v328 = vsel %vm314, %v301, 0
      %v331 = vsel %vm314, %v302, 0
      %v334 = vsel %vm314, %v303, 0
      %v337 = vsel %vm314, %v304, 0
      %v340 = vsel %vm314, %v305, 0
      %v343 = vsel %vm314, %v306, 0
      %v346 = vsel %vm314, %v307, 0
      %v349 = vsel %vm314, %v308, 0
      %v352 = vsel %vm314, %v309, 0
      %v355 = vsel %vm314, %v310, 0
      %v358 = vsel %vm314, %v311, 0
      %v361 = vsel %vm314, %v312, 0
      %v364 = vsel %vm314, %v313, 0
      %366 = vmatprep.subr.bf16.mxu0 0
      %367 = vmatpush1.bf16.xpose.msra.mxu0 %v319
      %368 = vmatprep.subr.bf16.mxu0 0
      %369 = vmatpush1.bf16.xpose.msra.mxu0 %v322
      %370 = vmatprep.subr.bf16.mxu0 0
      %371 = vmatpush1.bf16.xpose.msra.mxu0 %v325
      %372 = vmatprep.subr.bf16.mxu0 0
      %373 = vmatpush1.bf16.xpose.msra.mxu0 %v328
      %374 = vmatprep.subr.bf16.mxu0 0
      %375 = vmatpush1.bf16.xpose.msra.mxu0 %v331
      %376 = vmatprep.subr.bf16.mxu0 0
      %377 = vmatpush1.bf16.xpose.msra.mxu0 %v334
      %378 = vmatprep.subr.bf16.mxu0 0
      %379 = vmatpush1.bf16.xpose.msra.mxu0 %v337
      %380 = vmatprep.subr.bf16.mxu0 0
      %381 = vmatpush1.bf16.xpose.msra.mxu0 %v340
      %382 = vmatprep.subr.bf16.mxu0 0
      %383 = vmatpush1.bf16.xpose.msra.mxu0 %v343
      %384 = vmatprep.subr.bf16.mxu0 0
      %385 = vmatpush1.bf16.xpose.msra.mxu0 %v346
      %386 = vmatprep.subr.bf16.mxu0 0
      %387 = vmatpush1.bf16.xpose.msra.mxu0 %v349
      %388 = vmatprep.subr.bf16.mxu0 0
      %389 = vmatpush1.bf16.xpose.msra.mxu0 %v352
      %390 = vmatprep.subr.bf16.mxu0 0
      %391 = vmatpush1.bf16.xpose.msra.mxu0 %v355
      %392 = vmatprep.subr.bf16.mxu0 0
      %393 = vmatpush1.bf16.xpose.msra.mxu0 %v358
      %394 = vmatprep.subr.bf16.mxu0 0
      %395 = vmatpush1.bf16.xpose.msra.mxu0 %v361
      %396 = vmatprep.subr.bf16.mxu0 0
      %397 = vmatpush1.bf16.xpose.msra.mxu0 %v364
      %398 = vmatprep.mubr.bf16.mxu0 0
      %399 = vmatmul.mubr.bf16.gmra.mrb[0].mxu0 %v316
      %v400 = vpop.f32.mrb[0].mxu0
      %v401 = vadd.f32 0.0, %v400
      %v402 = vpop.f32.mrb[0].mxu0
      %v403 = vadd.f32 0.0, %v402
      %v404 = vpop.f32.mrb[0].mxu0
      %v405 = vpop.f32.mrb[0].mxu0
      %406 = vdwg.mxu0
      %v409 = vcombine.low %v401, %v403
      %411 = vst [vmem:[%s198] sm:$0xff] %v409
      %s412 = smul.u32 2, %s18
      %p413 = scmp.lt.s32.totalorder %s17, 1
      %s414 = scalar_select %p413, %s17, 1
      %p415 = scmp.lt.s32.totalorder %s412, 1
      %s416 = scalar_select %p415, %s412, 1
      %s417 = smul.addr %s414, 2
      %s418 = sadd.s32 %s416, %s417
      %s419 = smul.addr %s418, 4
      %s420 = scalar_lea.vmem %s2, %s419
      // Predicated region
      $region29: #{_lambda_.34} parent=27 // pred_check
        %p421 = pneg %p99
      $region30: #{_lambda_.34} parent=27 // pred_check_branch
        %423 = sbr.rel (%p421) target = $region32
      $region31: #{_lambda_.34} parent=27 // pred_region
        %s424 = smul.u32 2, %s18
      $region32: #{_lambda_.34} parent=27 // pred_fallthru
        _
    $region28: #{_lambda_.34} parent=5 // pred_fallthru
      _
    %p425 = scmp.le.s32.totalorder 2, %s8
    // Predicated region
    $region33: #{_lambda_.34} parent=5 // pred_check
      %p426 = pneg %p425
    $region34: #{_lambda_.34} parent=5 // pred_check_branch
      %428 = sbr.rel (%p426) target = $region36
    $region35: #{_lambda_.34} parent=5 // pred_region
      %s429 = ssub.s32 %s8, 2
      // Predicated region
      $region37: #{_lambda_.34} parent=35 // pred_check
        %p430 = pneg %p105
      $region38: #{_lambda_.34} parent=35 // pred_check_branch
        %432 = sbr.rel (%p430) target = $region40
      $region39: #{_lambda_.34} parent=35 // pred_region
        %s433 = smul.u32 2, %s20
        %p434 = scmp.lt.s32.totalorder %s19, 1
        %s435 = scalar_select %p434, %s19, 1
        %p436 = scmp.lt.s32.totalorder %s433, 1
        %s437 = scalar_select %p436, %s433, 1
        %s438 = smul.addr %s435, 2
        %s439 = sadd.s32 %s437, %s438
        %s440 = smul.addr %s439, 4
        %s441 = scalar_lea.vmem %s2, %s440
      $region40: #{_lambda_.34} parent=35 // pred_fallthru
        _
    $region36: #{_lambda_.34} parent=5 // pred_fallthru
      _
  $region6: #{_lambda_.34} parent=0 // loop_footer
    %s12 = sadd.s32 1, %s8
  $region7: #{_lambda_.34} parent=0 // loop_footer_branch
    %7 = sbr.rel target = $region3
  $region8: #{_lambda_.34} parent=0 // loop_exit
    _

</llo_original>
